<compile_context>
chip_gen: v7x
topology: tpu7x:2x2x1
jax: 0.10.0
libtpu: 0.0.40
codegen_flags: <defaults>
</compile_context>

<pallas_src>
import functools

import jax
import jax.numpy as jnp
from jax.experimental import pallas as pl
from jax.experimental.pallas import tpu as pltpu


def _w2v_ns_kernel(
    c_ids, p_ids, g_ids,            # scalar-prefetch SMEM id streams (padded, flat)
    w_in_hbm, w_out_hbm,            # (V, E) tables left in HBM (memory_space=ANY)
    pos_ref, neg_ref,               # (1, 1, 1) resident per-chunk partial sums
    buf_in, buf_pos, buf_neg,       # (TILE, E) VMEM gather buffers
    sems,                           # (3, TILE) DMA semaphores
    *, tile, n_valid,
):
    ci = pl.program_id(0)
    j = pl.program_id(1)
    tiles_per_chunk = pl.num_programs(1)
    base = (ci * tiles_per_chunk + j) * tile

    @pl.when(j == 0)
    def _init():
        pos_ref[...] = jnp.zeros_like(pos_ref)
        neg_ref[...] = jnp.zeros_like(neg_ref)

    # Issue all 3*tile single-row gathers first (all scalar id reads happen
    # before any DMA wait), then wait; the copies overlap in the DMA engine.
    copies = []
    for r in range(tile):
        idx = base + r
        c = c_ids[idx]
        p = p_ids[idx]
        g = g_ids[idx]
        cps = (
            pltpu.make_async_copy(
                w_in_hbm.at[pl.ds(c, 1)], buf_in.at[pl.ds(r, 1)], sems.at[0, r]),
            pltpu.make_async_copy(
                w_out_hbm.at[pl.ds(p, 1)], buf_pos.at[pl.ds(r, 1)], sems.at[1, r]),
            pltpu.make_async_copy(
                w_out_hbm.at[pl.ds(g, 1)], buf_neg.at[pl.ds(r, 1)], sems.at[2, r]),
        )
        for cp in cps:
            cp.start()
        copies.extend(cps)
    for cp in copies:
        cp.wait()

    emb_in = buf_in[...]                                               # (tile, E)
    pred_pos = jnp.sum(emb_in * buf_pos[...], axis=1, keepdims=True)   # (tile, 1)
    pred_neg = jnp.sum(emb_in * buf_neg[...], axis=1, keepdims=True)   # (tile, 1)

    # sigmoid(x) = 1 / (1 + exp(-x)); exp goes to the EUP slot.
    sig_pos = 1.0 / (1.0 + jnp.exp(-pred_pos))
    sig_neg = 1.0 / (1.0 + jnp.exp(-pred_neg))

    # Mask rows past the true sample count (padding up to a whole tile).
    row = base + jax.lax.broadcasted_iota(jnp.int32, (tile, 1), 0)
    valid = row < n_valid
    sig_pos = jnp.where(valid, sig_pos, 0.0)
    sig_neg = jnp.where(valid, sig_neg, 0.0)

    pos_ref[...] += jnp.sum(sig_pos, axis=0, keepdims=True).reshape(pos_ref.shape)
    neg_ref[...] += jnp.sum(sig_neg, axis=0, keepdims=True).reshape(neg_ref.shape)


def w2v_ns_loss(center, context, context_negative, w_in, w_out, *,
                tile=8, num_chunks=2):
    """center/context/context_negative: (2*window, batch) int ids; w_*: (V, E) f32."""
    n = int(center.size)
    e = w_in.shape[1]

    c_ids = center.reshape(n).astype(jnp.int32)
    p_ids = context.reshape(n).astype(jnp.int32)
    g_ids = context_negative.reshape(n).astype(jnp.int32)
    w_in = w_in.astype(jnp.float32)
    w_out = w_out.astype(jnp.float32)

    # Pad the flat id streams so every (chunk, tile) is full; padded rows are
    # masked out inside the kernel.
    tiles_total = -(-n // tile)
    tiles_per_chunk = -(-tiles_total // num_chunks)
    n_pad = tiles_per_chunk * tile * num_chunks
    if n_pad > n:
        pad = (0, n_pad - n)
        c_ids = jnp.pad(c_ids, pad)
        p_ids = jnp.pad(p_ids, pad)
        g_ids = jnp.pad(g_ids, pad)

    kernel = functools.partial(_w2v_ns_kernel, tile=tile, n_valid=n)

    grid_spec = pltpu.PrefetchScalarGridSpec(
        num_scalar_prefetch=3,
        grid=(num_chunks, tiles_per_chunk),
        in_specs=[
            pl.BlockSpec(memory_space=pl.ANY),   # w_in stays in HBM; rows DMA'd on demand
            pl.BlockSpec(memory_space=pl.ANY),   # w_out stays in HBM
        ],
        out_specs=[
            pl.BlockSpec((1, 1, 1), lambda ci, j, c, p, g: (ci, 0, 0)),
            pl.BlockSpec((1, 1, 1), lambda ci, j, c, p, g: (ci, 0, 0)),
        ],
        scratch_shapes=[
            pltpu.VMEM((tile, e), jnp.float32),
            pltpu.VMEM((tile, e), jnp.float32),
            pltpu.VMEM((tile, e), jnp.float32),
            pltpu.SemaphoreType.DMA((3, tile)),
        ],
    )

    pos_part, neg_part = pl.pallas_call(
        kernel,
        grid_spec=grid_spec,
        out_shape=[
            jax.ShapeDtypeStruct((num_chunks, 1, 1), jnp.float32),
            jax.ShapeDtypeStruct((num_chunks, 1, 1), jnp.float32),
        ],
        compiler_params=pltpu.CompilerParams(
            dimension_semantics=("parallel", "arbitrary")),
    )(c_ids, p_ids, g_ids, w_in, w_out)

    inv_n = 1.0 / n
    loss_positive = 1.0 - jnp.sum(pos_part) * inv_n
    loss_negative = jnp.sum(neg_part) * inv_n
    return loss_positive + loss_negative


def _reference_loss(center, context, context_negative, w_in, w_out):
    emb_in = jnp.take(w_in, center, axis=0)        # (W, B, E)
    emb_out = jnp.take(w_out, context, axis=0)     # (W, B, E)
    pred = jnp.sum(emb_out * emb_in, axis=2)
    loss_positive = 1.0 - jnp.mean(jax.nn.sigmoid(pred))
    emb_out_n = jnp.take(w_out, context_negative, axis=0)
    pred_n = jnp.sum(emb_out_n * emb_in, axis=2)
    loss_negative = jnp.mean(jax.nn.sigmoid(pred_n))
    return loss_positive + loss_negative


if __name__ == "__main__":
    size_vocab = 64
    size_embedding = 32
    window_size = 2
    batch_size = 8
    W = 2 * window_size  # context rows, matching LousyRingBuffer shape (2*window, batch)

    key = jax.random.PRNGKey(0)
    k_in, k_out, k_c, k_p, k_n = jax.random.split(key, 5)

    initrange = 0.1  # matches emb.weight.data.uniform_(-0.1, 0.1)
    w_in = jax.random.uniform(
        k_in, (size_vocab, size_embedding), jnp.float32, -initrange, initrange)
    w_out = jax.random.uniform(
        k_out, (size_vocab, size_embedding), jnp.float32, -initrange, initrange)

    center = jax.random.randint(k_c, (W, batch_size), 0, size_vocab, jnp.int32)
    context = jax.random.randint(k_p, (W, batch_size), 0, size_vocab, jnp.int32)
    context_negative = jax.random.randint(k_n, (W, batch_size), 0, size_vocab, jnp.int32)

    loss = w2v_ns_loss(center, context, context_negative, w_in, w_out)
    loss = jax.block_until_ready(loss)

    ref = _reference_loss(center, context, context_negative, w_in, w_out)
    assert jnp.allclose(loss, ref, atol=1e-5), (loss, ref)

    print("KERNEL_OK")
</pallas_src>

<mosaic_0001>
module attributes {stable_mosaic.version = 11 : i64} {
  func.func @_w2v_ns_kernel(%arg0: i32, %arg1: i32, %arg2: memref<32xi32, #tpu.memory_space<smem>>, %arg3: memref<32xi32, #tpu.memory_space<smem>>, %arg4: memref<32xi32, #tpu.memory_space<smem>>, %arg5: memref<64x32xf32, #tpu.memory_space<any>>, %arg6: memref<64x32xf32, #tpu.memory_space<any>>, %arg7: memref<1x1x1xf32, #tpu.memory_space<vmem>>, %arg8: memref<1x1x1xf32, #tpu.memory_space<vmem>>, %arg9: memref<8x32xf32, #tpu.memory_space<vmem>>, %arg10: memref<8x32xf32, #tpu.memory_space<vmem>>, %arg11: memref<8x32xf32, #tpu.memory_space<vmem>>, %arg12: memref<3x8x!tpu.dma_semaphore, #tpu.memory_space<semaphore_mem>>) attributes {dimension_semantics = [#tpu.dimension_semantics<parallel>, #tpu.dimension_semantics<arbitrary>], iteration_bounds = array<i64: 2, 2>, scalar_prefetch = 3 : i64, scratch_operands = 4 : i64, tpu.core_type = #tpu.core_type<tc>, window_params = [{}, {}, {transform_indices = @transform_2, window_bounds = array<i64: 1, 1, 1>}, {transform_indices = @transform_3, window_bounds = array<i64: 1, 1, 1>}]} {
    %c2_i32 = arith.constant 2 : i32
    %0 = arith.muli %arg0, %c2_i32 : i32
    %1 = arith.addi %0, %arg1 : i32
    %c8_i32 = arith.constant 8 : i32
    %2 = arith.muli %1, %c8_i32 : i32
    %c0_i32 = arith.constant 0 : i32
    %3 = arith.cmpi eq, %arg1, %c0_i32 : i32
    %4 = arith.extui %3 : i1 to i32
    %c0_i32_0 = arith.constant 0 : i32
    %5 = arith.cmpi ne, %4, %c0_i32_0 : i32
    scf.if %5 {
      %cst_271 = arith.constant 0.000000e+00 : f32
      %298 = vector.broadcast %cst_271 : f32 to vector<1x1x1xf32>
      %c0_272 = arith.constant 0 : index
      %c0_273 = arith.constant 0 : index
      %c0_274 = arith.constant 0 : index
      %299 = vector.load %arg7[%c0_272, %c0_273, %c0_274] : memref<1x1x1xf32, #tpu.memory_space<vmem>>, vector<1x1x1xf32>
      tpu.vector_store %arg7[%c0_272, %c0_273, %c0_274], %298 {strides = array<i32>} : memref<1x1x1xf32, #tpu.memory_space<vmem>>, vector<1x1x1xf32>,
      %cst_275 = arith.constant 0.000000e+00 : f32
      %300 = vector.broadcast %cst_275 : f32 to vector<1x1x1xf32>
      %c0_276 = arith.constant 0 : index
      %c0_277 = arith.constant 0 : index
      %c0_278 = arith.constant 0 : index
      %301 = vector.load %arg8[%c0_276, %c0_277, %c0_278] : memref<1x1x1xf32, #tpu.memory_space<vmem>>, vector<1x1x1xf32>
      tpu.vector_store %arg8[%c0_276, %c0_277, %c0_278], %300 {strides = array<i32>} : memref<1x1x1xf32, #tpu.memory_space<vmem>>, vector<1x1x1xf32>,
    } else {
    }
    %c0_i32_1 = arith.constant 0 : i32
    %6 = arith.addi %2, %c0_i32_1 : i32
    %7 = arith.index_cast %6 : i32 to index
    %8 = memref.load %arg2[%7] : memref<32xi32, #tpu.memory_space<smem>>
    %9 = arith.index_cast %6 : i32 to index
    %10 = memref.load %arg3[%9] : memref<32xi32, #tpu.memory_space<smem>>
    %11 = arith.index_cast %6 : i32 to index
    %12 = memref.load %arg4[%11] : memref<32xi32, #tpu.memory_space<smem>>
    %c0_i32_2 = arith.constant 0 : i32
    %c0_i32_3 = arith.constant 0 : i32
    %c0_i32_4 = arith.constant 0 : i32
    %13 = tpu.memref_slice %arg5[%8, %c0_i32_4] : memref<64x32xf32, #tpu.memory_space<any>> -> memref<1x32xf32, #tpu.memory_space<any>>
    %c0_i32_5 = arith.constant 0 : i32
    %c0_i32_6 = arith.constant 0 : i32
    %14 = tpu.memref_slice %arg9[%c0_i32_5, %c0_i32_6] : memref<8x32xf32, #tpu.memory_space<vmem>> -> memref<1x32xf32, #tpu.memory_space<vmem>>
    %15 = tpu.memref_slice %arg12[%c0_i32_2, %c0_i32_3] : memref<3x8x!tpu.dma_semaphore, #tpu.memory_space<semaphore_mem>> -> memref<1x1x!tpu.dma_semaphore, #tpu.memory_space<semaphore_mem>>
    %16 = tpu.memref_squeeze %15 : memref<1x1x!tpu.dma_semaphore, #tpu.memory_space<semaphore_mem>> -> memref<!tpu.dma_semaphore, #tpu.memory_space<semaphore_mem>>
    tpu.enqueue_dma source(%13 : memref<1x32xf32, #tpu.memory_space<any>>) target(%14 : memref<1x32xf32, #tpu.memory_space<vmem>>) target_semaphore(%16 : memref<!tpu.dma_semaphore, #tpu.memory_space<semaphore_mem>>)
    %c1_i32 = arith.constant 1 : i32
    %c0_i32_7 = arith.constant 0 : i32
    %c0_i32_8 = arith.constant 0 : i32
    %17 = tpu.memref_slice %arg6[%10, %c0_i32_8] : memref<64x32xf32, #tpu.memory_space<any>> -> memref<1x32xf32, #tpu.memory_space<any>>
    %c0_i32_9 = arith.constant 0 : i32
    %c0_i32_10 = arith.constant 0 : i32
    %18 = tpu.memref_slice %arg10[%c0_i32_9, %c0_i32_10] : memref<8x32xf32, #tpu.memory_space<vmem>> -> memref<1x32xf32, #tpu.memory_space<vmem>>
    %19 = tpu.memref_slice %arg12[%c1_i32, %c0_i32_7] : memref<3x8x!tpu.dma_semaphore, #tpu.memory_space<semaphore_mem>> -> memref<1x1x!tpu.dma_semaphore, #tpu.memory_space<semaphore_mem>>
    %20 = tpu.memref_squeeze %19 : memref<1x1x!tpu.dma_semaphore, #tpu.memory_space<semaphore_mem>> -> memref<!tpu.dma_semaphore, #tpu.memory_space<semaphore_mem>>
    tpu.enqueue_dma source(%17 : memref<1x32xf32, #tpu.memory_space<any>>) target(%18 : memref<1x32xf32, #tpu.memory_space<vmem>>) target_semaphore(%20 : memref<!tpu.dma_semaphore, #tpu.memory_space<semaphore_mem>>)
    %c2_i32_11 = arith.constant 2 : i32
    %c0_i32_12 = arith.constant 0 : i32
    %c0_i32_13 = arith.constant 0 : i32
    %21 = tpu.memref_slice %arg6[%12, %c0_i32_13] : memref<64x32xf32, #tpu.memory_space<any>> -> memref<1x32xf32, #tpu.memory_space<any>>
    %c0_i32_14 = arith.constant 0 : i32
    %c0_i32_15 = arith.constant 0 : i32
    %22 = tpu.memref_slice %arg11[%c0_i32_14, %c0_i32_15] : memref<8x32xf32, #tpu.memory_space<vmem>> -> memref<1x32xf32, #tpu.memory_space<vmem>>
    %23 = tpu.memref_slice %arg12[%c2_i32_11, %c0_i32_12] : memref<3x8x!tpu.dma_semaphore, #tpu.memory_space<semaphore_mem>> -> memref<1x1x!tpu.dma_semaphore, #tpu.memory_space<semaphore_mem>>
    %24 = tpu.memref_squeeze %23 : memref<1x1x!tpu.dma_semaphore, #tpu.memory_space<semaphore_mem>> -> memref<!tpu.dma_semaphore, #tpu.memory_space<semaphore_mem>>
    tpu.enqueue_dma source(%21 : memref<1x32xf32, #tpu.memory_space<any>>) target(%22 : memref<1x32xf32, #tpu.memory_space<vmem>>) target_semaphore(%24 : memref<!tpu.dma_semaphore, #tpu.memory_space<semaphore_mem>>)
    %c1_i32_16 = arith.constant 1 : i32
    %25 = arith.addi %2, %c1_i32_16 : i32
    %26 = arith.index_cast %25 : i32 to index
    %27 = memref.load %arg2[%26] : memref<32xi32, #tpu.memory_space<smem>>
    %28 = arith.index_cast %25 : i32 to index
    %29 = memref.load %arg3[%28] : memref<32xi32, #tpu.memory_space<smem>>
    %30 = arith.index_cast %25 : i32 to index
    %31 = memref.load %arg4[%30] : memref<32xi32, #tpu.memory_space<smem>>
    %c0_i32_17 = arith.constant 0 : i32
    %c1_i32_18 = arith.constant 1 : i32
    %c0_i32_19 = arith.constant 0 : i32
    %32 = tpu.memref_slice %arg5[%27, %c0_i32_19] : memref<64x32xf32, #tpu.memory_space<any>> -> memref<1x32xf32, #tpu.memory_space<any>>
    %c1_i32_20 = arith.constant 1 : i32
    %c0_i32_21 = arith.constant 0 : i32
    %33 = tpu.memref_slice %arg9[%c1_i32_20, %c0_i32_21] : memref<8x32xf32, #tpu.memory_space<vmem>> -> memref<1x32xf32, #tpu.memory_space<vmem>>
    %34 = tpu.memref_slice %arg12[%c0_i32_17, %c1_i32_18] : memref<3x8x!tpu.dma_semaphore, #tpu.memory_space<semaphore_mem>> -> memref<1x1x!tpu.dma_semaphore, #tpu.memory_space<semaphore_mem>>
    %35 = tpu.memref_squeeze %34 : memref<1x1x!tpu.dma_semaphore, #tpu.memory_space<semaphore_mem>> -> memref<!tpu.dma_semaphore, #tpu.memory_space<semaphore_mem>>
    tpu.enqueue_dma source(%32 : memref<1x32xf32, #tpu.memory_space<any>>) target(%33 : memref<1x32xf32, #tpu.memory_space<vmem>>) target_semaphore(%35 : memref<!tpu.dma_semaphore, #tpu.memory_space<semaphore_mem>>)
    %c1_i32_22 = arith.constant 1 : i32
    %c1_i32_23 = arith.constant 1 : i32
    %c0_i32_24 = arith.constant 0 : i32
    %36 = tpu.memref_slice %arg6[%29, %c0_i32_24] : memref<64x32xf32, #tpu.memory_space<any>> -> memref<1x32xf32, #tpu.memory_space<any>>
    %c1_i32_25 = arith.constant 1 : i32
    %c0_i32_26 = arith.constant 0 : i32
    %37 = tpu.memref_slice %arg10[%c1_i32_25, %c0_i32_26] : memref<8x32xf32, #tpu.memory_space<vmem>> -> memref<1x32xf32, #tpu.memory_space<vmem>>
    %38 = tpu.memref_slice %arg12[%c1_i32_22, %c1_i32_23] : memref<3x8x!tpu.dma_semaphore, #tpu.memory_space<semaphore_mem>> -> memref<1x1x!tpu.dma_semaphore, #tpu.memory_space<semaphore_mem>>
    %39 = tpu.memref_squeeze %38 : memref<1x1x!tpu.dma_semaphore, #tpu.memory_space<semaphore_mem>> -> memref<!tpu.dma_semaphore, #tpu.memory_space<semaphore_mem>>
    tpu.enqueue_dma source(%36 : memref<1x32xf32, #tpu.memory_space<any>>) target(%37 : memref<1x32xf32, #tpu.memory_space<vmem>>) target_semaphore(%39 : memref<!tpu.dma_semaphore, #tpu.memory_space<semaphore_mem>>)
    %c2_i32_27 = arith.constant 2 : i32
    %c1_i32_28 = arith.constant 1 : i32
    %c0_i32_29 = arith.constant 0 : i32
    %40 = tpu.memref_slice %arg6[%31, %c0_i32_29] : memref<64x32xf32, #tpu.memory_space<any>> -> memref<1x32xf32, #tpu.memory_space<any>>
    %c1_i32_30 = arith.constant 1 : i32
    %c0_i32_31 = arith.constant 0 : i32
    %41 = tpu.memref_slice %arg11[%c1_i32_30, %c0_i32_31] : memref<8x32xf32, #tpu.memory_space<vmem>> -> memref<1x32xf32, #tpu.memory_space<vmem>>
    %42 = tpu.memref_slice %arg12[%c2_i32_27, %c1_i32_28] : memref<3x8x!tpu.dma_semaphore, #tpu.memory_space<semaphore_mem>> -> memref<1x1x!tpu.dma_semaphore, #tpu.memory_space<semaphore_mem>>
    %43 = tpu.memref_squeeze %42 : memref<1x1x!tpu.dma_semaphore, #tpu.memory_space<semaphore_mem>> -> memref<!tpu.dma_semaphore, #tpu.memory_space<semaphore_mem>>
    tpu.enqueue_dma source(%40 : memref<1x32xf32, #tpu.memory_space<any>>) target(%41 : memref<1x32xf32, #tpu.memory_space<vmem>>) target_semaphore(%43 : memref<!tpu.dma_semaphore, #tpu.memory_space<semaphore_mem>>)
    %c2_i32_32 = arith.constant 2 : i32
    %44 = arith.addi %2, %c2_i32_32 : i32
    %45 = arith.index_cast %44 : i32 to index
    %46 = memref.load %arg2[%45] : memref<32xi32, #tpu.memory_space<smem>>
    %47 = arith.index_cast %44 : i32 to index
    %48 = memref.load %arg3[%47] : memref<32xi32, #tpu.memory_space<smem>>
    %49 = arith.index_cast %44 : i32 to index
    %50 = memref.load %arg4[%49] : memref<32xi32, #tpu.memory_space<smem>>
    %c0_i32_33 = arith.constant 0 : i32
    %c2_i32_34 = arith.constant 2 : i32
    %c0_i32_35 = arith.constant 0 : i32
    %51 = tpu.memref_slice %arg5[%46, %c0_i32_35] : memref<64x32xf32, #tpu.memory_space<any>> -> memref<1x32xf32, #tpu.memory_space<any>>
    %c2_i32_36 = arith.constant 2 : i32
    %c0_i32_37 = arith.constant 0 : i32
    %52 = tpu.memref_slice %arg9[%c2_i32_36, %c0_i32_37] : memref<8x32xf32, #tpu.memory_space<vmem>> -> memref<1x32xf32, #tpu.memory_space<vmem>>
    %53 = tpu.memref_slice %arg12[%c0_i32_33, %c2_i32_34] : memref<3x8x!tpu.dma_semaphore, #tpu.memory_space<semaphore_mem>> -> memref<1x1x!tpu.dma_semaphore, #tpu.memory_space<semaphore_mem>>
    %54 = tpu.memref_squeeze %53 : memref<1x1x!tpu.dma_semaphore, #tpu.memory_space<semaphore_mem>> -> memref<!tpu.dma_semaphore, #tpu.memory_space<semaphore_mem>>
    tpu.enqueue_dma source(%51 : memref<1x32xf32, #tpu.memory_space<any>>) target(%52 : memref<1x32xf32, #tpu.memory_space<vmem>>) target_semaphore(%54 : memref<!tpu.dma_semaphore, #tpu.memory_space<semaphore_mem>>)
    %c1_i32_38 = arith.constant 1 : i32
    %c2_i32_39 = arith.constant 2 : i32
    %c0_i32_40 = arith.constant 0 : i32
    %55 = tpu.memref_slice %arg6[%48, %c0_i32_40] : memref<64x32xf32, #tpu.memory_space<any>> -> memref<1x32xf32, #tpu.memory_space<any>>
    %c2_i32_41 = arith.constant 2 : i32
    %c0_i32_42 = arith.constant 0 : i32
    %56 = tpu.memref_slice %arg10[%c2_i32_41, %c0_i32_42] : memref<8x32xf32, #tpu.memory_space<vmem>> -> memref<1x32xf32, #tpu.memory_space<vmem>>
    %57 = tpu.memref_slice %arg12[%c1_i32_38, %c2_i32_39] : memref<3x8x!tpu.dma_semaphore, #tpu.memory_space<semaphore_mem>> -> memref<1x1x!tpu.dma_semaphore, #tpu.memory_space<semaphore_mem>>
    %58 = tpu.memref_squeeze %57 : memref<1x1x!tpu.dma_semaphore, #tpu.memory_space<semaphore_mem>> -> memref<!tpu.dma_semaphore, #tpu.memory_space<semaphore_mem>>
    tpu.enqueue_dma source(%55 : memref<1x32xf32, #tpu.memory_space<any>>) target(%56 : memref<1x32xf32, #tpu.memory_space<vmem>>) target_semaphore(%58 : memref<!tpu.dma_semaphore, #tpu.memory_space<semaphore_mem>>)
    %c2_i32_43 = arith.constant 2 : i32
    %c2_i32_44 = arith.constant 2 : i32
    %c0_i32_45 = arith.constant 0 : i32
    %59 = tpu.memref_slice %arg6[%50, %c0_i32_45] : memref<64x32xf32, #tpu.memory_space<any>> -> memref<1x32xf32, #tpu.memory_space<any>>
    %c2_i32_46 = arith.constant 2 : i32
    %c0_i32_47 = arith.constant 0 : i32
    %60 = tpu.memref_slice %arg11[%c2_i32_46, %c0_i32_47] : memref<8x32xf32, #tpu.memory_space<vmem>> -> memref<1x32xf32, #tpu.memory_space<vmem>>
    %61 = tpu.memref_slice %arg12[%c2_i32_43, %c2_i32_44] : memref<3x8x!tpu.dma_semaphore, #tpu.memory_space<semaphore_mem>> -> memref<1x1x!tpu.dma_semaphore, #tpu.memory_space<semaphore_mem>>
    %62 = tpu.memref_squeeze %61 : memref<1x1x!tpu.dma_semaphore, #tpu.memory_space<semaphore_mem>> -> memref<!tpu.dma_semaphore, #tpu.memory_space<semaphore_mem>>
    tpu.enqueue_dma source(%59 : memref<1x32xf32, #tpu.memory_space<any>>) target(%60 : memref<1x32xf32, #tpu.memory_space<vmem>>) target_semaphore(%62 : memref<!tpu.dma_semaphore, #tpu.memory_space<semaphore_mem>>)
    %c3_i32 = arith.constant 3 : i32
    %63 = arith.addi %2, %c3_i32 : i32
    %64 = arith.index_cast %63 : i32 to index
    %65 = memref.load %arg2[%64] : memref<32xi32, #tpu.memory_space<smem>>
    %66 = arith.index_cast %63 : i32 to index
    %67 = memref.load %arg3[%66] : memref<32xi32, #tpu.memory_space<smem>>
    %68 = arith.index_cast %63 : i32 to index
    %69 = memref.load %arg4[%68] : memref<32xi32, #tpu.memory_space<smem>>
    %c0_i32_48 = arith.constant 0 : i32
    %c3_i32_49 = arith.constant 3 : i32
    %c0_i32_50 = arith.constant 0 : i32
    %70 = tpu.memref_slice %arg5[%65, %c0_i32_50] : memref<64x32xf32, #tpu.memory_space<any>> -> memref<1x32xf32, #tpu.memory_space<any>>
    %c3_i32_51 = arith.constant 3 : i32
    %c0_i32_52 = arith.constant 0 : i32
    %71 = tpu.memref_slice %arg9[%c3_i32_51, %c0_i32_52] : memref<8x32xf32, #tpu.memory_space<vmem>> -> memref<1x32xf32, #tpu.memory_space<vmem>>
    %72 = tpu.memref_slice %arg12[%c0_i32_48, %c3_i32_49] : memref<3x8x!tpu.dma_semaphore, #tpu.memory_space<semaphore_mem>> -> memref<1x1x!tpu.dma_semaphore, #tpu.memory_space<semaphore_mem>>
    %73 = tpu.memref_squeeze %72 : memref<1x1x!tpu.dma_semaphore, #tpu.memory_space<semaphore_mem>> -> memref<!tpu.dma_semaphore, #tpu.memory_space<semaphore_mem>>
    tpu.enqueue_dma source(%70 : memref<1x32xf32, #tpu.memory_space<any>>) target(%71 : memref<1x32xf32, #tpu.memory_space<vmem>>) target_semaphore(%73 : memref<!tpu.dma_semaphore, #tpu.memory_space<semaphore_mem>>)
    %c1_i32_53 = arith.constant 1 : i32
    %c3_i32_54 = arith.constant 3 : i32
    %c0_i32_55 = arith.constant 0 : i32
    %74 = tpu.memref_slice %arg6[%67, %c0_i32_55] : memref<64x32xf32, #tpu.memory_space<any>> -> memref<1x32xf32, #tpu.memory_space<any>>
    %c3_i32_56 = arith.constant 3 : i32
    %c0_i32_57 = arith.constant 0 : i32
    %75 = tpu.memref_slice %arg10[%c3_i32_56, %c0_i32_57] : memref<8x32xf32, #tpu.memory_space<vmem>> -> memref<1x32xf32, #tpu.memory_space<vmem>>
    %76 = tpu.memref_slice %arg12[%c1_i32_53, %c3_i32_54] : memref<3x8x!tpu.dma_semaphore, #tpu.memory_space<semaphore_mem>> -> memref<1x1x!tpu.dma_semaphore, #tpu.memory_space<semaphore_mem>>
    %77 = tpu.memref_squeeze %76 : memref<1x1x!tpu.dma_semaphore, #tpu.memory_space<semaphore_mem>> -> memref<!tpu.dma_semaphore, #tpu.memory_space<semaphore_mem>>
    tpu.enqueue_dma source(%74 : memref<1x32xf32, #tpu.memory_space<any>>) target(%75 : memref<1x32xf32, #tpu.memory_space<vmem>>) target_semaphore(%77 : memref<!tpu.dma_semaphore, #tpu.memory_space<semaphore_mem>>)
    %c2_i32_58 = arith.constant 2 : i32
    %c3_i32_59 = arith.constant 3 : i32
    %c0_i32_60 = arith.constant 0 : i32
    %78 = tpu.memref_slice %arg6[%69, %c0_i32_60] : memref<64x32xf32, #tpu.memory_space<any>> -> memref<1x32xf32, #tpu.memory_space<any>>
    %c3_i32_61 = arith.constant 3 : i32
    %c0_i32_62 = arith.constant 0 : i32
    %79 = tpu.memref_slice %arg11[%c3_i32_61, %c0_i32_62] : memref<8x32xf32, #tpu.memory_space<vmem>> -> memref<1x32xf32, #tpu.memory_space<vmem>>
    %80 = tpu.memref_slice %arg12[%c2_i32_58, %c3_i32_59] : memref<3x8x!tpu.dma_semaphore, #tpu.memory_space<semaphore_mem>> -> memref<1x1x!tpu.dma_semaphore, #tpu.memory_space<semaphore_mem>>
    %81 = tpu.memref_squeeze %80 : memref<1x1x!tpu.dma_semaphore, #tpu.memory_space<semaphore_mem>> -> memref<!tpu.dma_semaphore, #tpu.memory_space<semaphore_mem>>
    tpu.enqueue_dma source(%78 : memref<1x32xf32, #tpu.memory_space<any>>) target(%79 : memref<1x32xf32, #tpu.memory_space<vmem>>) target_semaphore(%81 : memref<!tpu.dma_semaphore, #tpu.memory_space<semaphore_mem>>)
    %c4_i32 = arith.constant 4 : i32
    %82 = arith.addi %2, %c4_i32 : i32
    %83 = arith.index_cast %82 : i32 to index
    %84 = memref.load %arg2[%83] : memref<32xi32, #tpu.memory_space<smem>>
    %85 = arith.index_cast %82 : i32 to index
    %86 = memref.load %arg3[%85] : memref<32xi32, #tpu.memory_space<smem>>
    %87 = arith.index_cast %82 : i32 to index
    %88 = memref.load %arg4[%87] : memref<32xi32, #tpu.memory_space<smem>>
    %c0_i32_63 = arith.constant 0 : i32
    %c4_i32_64 = arith.constant 4 : i32
    %c0_i32_65 = arith.constant 0 : i32
    %89 = tpu.memref_slice %arg5[%84, %c0_i32_65] : memref<64x32xf32, #tpu.memory_space<any>> -> memref<1x32xf32, #tpu.memory_space<any>>
    %c4_i32_66 = arith.constant 4 : i32
    %c0_i32_67 = arith.constant 0 : i32
    %90 = tpu.memref_slice %arg9[%c4_i32_66, %c0_i32_67] : memref<8x32xf32, #tpu.memory_space<vmem>> -> memref<1x32xf32, #tpu.memory_space<vmem>>
    %91 = tpu.memref_slice %arg12[%c0_i32_63, %c4_i32_64] : memref<3x8x!tpu.dma_semaphore, #tpu.memory_space<semaphore_mem>> -> memref<1x1x!tpu.dma_semaphore, #tpu.memory_space<semaphore_mem>>
    %92 = tpu.memref_squeeze %91 : memref<1x1x!tpu.dma_semaphore, #tpu.memory_space<semaphore_mem>> -> memref<!tpu.dma_semaphore, #tpu.memory_space<semaphore_mem>>
    tpu.enqueue_dma source(%89 : memref<1x32xf32, #tpu.memory_space<any>>) target(%90 : memref<1x32xf32, #tpu.memory_space<vmem>>) target_semaphore(%92 : memref<!tpu.dma_semaphore, #tpu.memory_space<semaphore_mem>>)
    %c1_i32_68 = arith.constant 1 : i32
    %c4_i32_69 = arith.constant 4 : i32
    %c0_i32_70 = arith.constant 0 : i32
    %93 = tpu.memref_slice %arg6[%86, %c0_i32_70] : memref<64x32xf32, #tpu.memory_space<any>> -> memref<1x32xf32, #tpu.memory_space<any>>
    %c4_i32_71 = arith.constant 4 : i32
    %c0_i32_72 = arith.constant 0 : i32
    %94 = tpu.memref_slice %arg10[%c4_i32_71, %c0_i32_72] : memref<8x32xf32, #tpu.memory_space<vmem>> -> memref<1x32xf32, #tpu.memory_space<vmem>>
    %95 = tpu.memref_slice %arg12[%c1_i32_68, %c4_i32_69] : memref<3x8x!tpu.dma_semaphore, #tpu.memory_space<semaphore_mem>> -> memref<1x1x!tpu.dma_semaphore, #tpu.memory_space<semaphore_mem>>
    %96 = tpu.memref_squeeze %95 : memref<1x1x!tpu.dma_semaphore, #tpu.memory_space<semaphore_mem>> -> memref<!tpu.dma_semaphore, #tpu.memory_space<semaphore_mem>>
    tpu.enqueue_dma source(%93 : memref<1x32xf32, #tpu.memory_space<any>>) target(%94 : memref<1x32xf32, #tpu.memory_space<vmem>>) target_semaphore(%96 : memref<!tpu.dma_semaphore, #tpu.memory_space<semaphore_mem>>)
    %c2_i32_73 = arith.constant 2 : i32
    %c4_i32_74 = arith.constant 4 : i32
    %c0_i32_75 = arith.constant 0 : i32
    %97 = tpu.memref_slice %arg6[%88, %c0_i32_75] : memref<64x32xf32, #tpu.memory_space<any>> -> memref<1x32xf32, #tpu.memory_space<any>>
    %c4_i32_76 = arith.constant 4 : i32
    %c0_i32_77 = arith.constant 0 : i32
    %98 = tpu.memref_slice %arg11[%c4_i32_76, %c0_i32_77] : memref<8x32xf32, #tpu.memory_space<vmem>> -> memref<1x32xf32, #tpu.memory_space<vmem>>
    %99 = tpu.memref_slice %arg12[%c2_i32_73, %c4_i32_74] : memref<3x8x!tpu.dma_semaphore, #tpu.memory_space<semaphore_mem>> -> memref<1x1x!tpu.dma_semaphore, #tpu.memory_space<semaphore_mem>>
    %100 = tpu.memref_squeeze %99 : memref<1x1x!tpu.dma_semaphore, #tpu.memory_space<semaphore_mem>> -> memref<!tpu.dma_semaphore, #tpu.memory_space<semaphore_mem>>
    tpu.enqueue_dma source(%97 : memref<1x32xf32, #tpu.memory_space<any>>) target(%98 : memref<1x32xf32, #tpu.memory_space<vmem>>) target_semaphore(%100 : memref<!tpu.dma_semaphore, #tpu.memory_space<semaphore_mem>>)
    %c5_i32 = arith.constant 5 : i32
    %101 = arith.addi %2, %c5_i32 : i32
    %102 = arith.index_cast %101 : i32 to index
    %103 = memref.load %arg2[%102] : memref<32xi32, #tpu.memory_space<smem>>
    %104 = arith.index_cast %101 : i32 to index
    %105 = memref.load %arg3[%104] : memref<32xi32, #tpu.memory_space<smem>>
    %106 = arith.index_cast %101 : i32 to index
    %107 = memref.load %arg4[%106] : memref<32xi32, #tpu.memory_space<smem>>
    %c0_i32_78 = arith.constant 0 : i32
    %c5_i32_79 = arith.constant 5 : i32
    %c0_i32_80 = arith.constant 0 : i32
    %108 = tpu.memref_slice %arg5[%103, %c0_i32_80] : memref<64x32xf32, #tpu.memory_space<any>> -> memref<1x32xf32, #tpu.memory_space<any>>
    %c5_i32_81 = arith.constant 5 : i32
    %c0_i32_82 = arith.constant 0 : i32
    %109 = tpu.memref_slice %arg9[%c5_i32_81, %c0_i32_82] : memref<8x32xf32, #tpu.memory_space<vmem>> -> memref<1x32xf32, #tpu.memory_space<vmem>>
    %110 = tpu.memref_slice %arg12[%c0_i32_78, %c5_i32_79] : memref<3x8x!tpu.dma_semaphore, #tpu.memory_space<semaphore_mem>> -> memref<1x1x!tpu.dma_semaphore, #tpu.memory_space<semaphore_mem>>
    %111 = tpu.memref_squeeze %110 : memref<1x1x!tpu.dma_semaphore, #tpu.memory_space<semaphore_mem>> -> memref<!tpu.dma_semaphore, #tpu.memory_space<semaphore_mem>>
    tpu.enqueue_dma source(%108 : memref<1x32xf32, #tpu.memory_space<any>>) target(%109 : memref<1x32xf32, #tpu.memory_space<vmem>>) target_semaphore(%111 : memref<!tpu.dma_semaphore, #tpu.memory_space<semaphore_mem>>)
    %c1_i32_83 = arith.constant 1 : i32
    %c5_i32_84 = arith.constant 5 : i32
    %c0_i32_85 = arith.constant 0 : i32
    %112 = tpu.memref_slice %arg6[%105, %c0_i32_85] : memref<64x32xf32, #tpu.memory_space<any>> -> memref<1x32xf32, #tpu.memory_space<any>>
    %c5_i32_86 = arith.constant 5 : i32
    %c0_i32_87 = arith.constant 0 : i32
    %113 = tpu.memref_slice %arg10[%c5_i32_86, %c0_i32_87] : memref<8x32xf32, #tpu.memory_space<vmem>> -> memref<1x32xf32, #tpu.memory_space<vmem>>
    %114 = tpu.memref_slice %arg12[%c1_i32_83, %c5_i32_84] : memref<3x8x!tpu.dma_semaphore, #tpu.memory_space<semaphore_mem>> -> memref<1x1x!tpu.dma_semaphore, #tpu.memory_space<semaphore_mem>>
    %115 = tpu.memref_squeeze %114 : memref<1x1x!tpu.dma_semaphore, #tpu.memory_space<semaphore_mem>> -> memref<!tpu.dma_semaphore, #tpu.memory_space<semaphore_mem>>
    tpu.enqueue_dma source(%112 : memref<1x32xf32, #tpu.memory_space<any>>) target(%113 : memref<1x32xf32, #tpu.memory_space<vmem>>) target_semaphore(%115 : memref<!tpu.dma_semaphore, #tpu.memory_space<semaphore_mem>>)
    %c2_i32_88 = arith.constant 2 : i32
    %c5_i32_89 = arith.constant 5 : i32
    %c0_i32_90 = arith.constant 0 : i32
    %116 = tpu.memref_slice %arg6[%107, %c0_i32_90] : memref<64x32xf32, #tpu.memory_space<any>> -> memref<1x32xf32, #tpu.memory_space<any>>
    %c5_i32_91 = arith.constant 5 : i32
    %c0_i32_92 = arith.constant 0 : i32
    %117 = tpu.memref_slice %arg11[%c5_i32_91, %c0_i32_92] : memref<8x32xf32, #tpu.memory_space<vmem>> -> memref<1x32xf32, #tpu.memory_space<vmem>>
    %118 = tpu.memref_slice %arg12[%c2_i32_88, %c5_i32_89] : memref<3x8x!tpu.dma_semaphore, #tpu.memory_space<semaphore_mem>> -> memref<1x1x!tpu.dma_semaphore, #tpu.memory_space<semaphore_mem>>
    %119 = tpu.memref_squeeze %118 : memref<1x1x!tpu.dma_semaphore, #tpu.memory_space<semaphore_mem>> -> memref<!tpu.dma_semaphore, #tpu.memory_space<semaphore_mem>>
    tpu.enqueue_dma source(%116 : memref<1x32xf32, #tpu.memory_space<any>>) target(%117 : memref<1x32xf32, #tpu.memory_space<vmem>>) target_semaphore(%119 : memref<!tpu.dma_semaphore, #tpu.memory_space<semaphore_mem>>)
    %c6_i32 = arith.constant 6 : i32
    %120 = arith.addi %2, %c6_i32 : i32
    %121 = arith.index_cast %120 : i32 to index
    %122 = memref.load %arg2[%121] : memref<32xi32, #tpu.memory_space<smem>>
    %123 = arith.index_cast %120 : i32 to index
    %124 = memref.load %arg3[%123] : memref<32xi32, #tpu.memory_space<smem>>
    %125 = arith.index_cast %120 : i32 to index
    %126 = memref.load %arg4[%125] : memref<32xi32, #tpu.memory_space<smem>>
    %c0_i32_93 = arith.constant 0 : i32
    %c6_i32_94 = arith.constant 6 : i32
    %c0_i32_95 = arith.constant 0 : i32
    %127 = tpu.memref_slice %arg5[%122, %c0_i32_95] : memref<64x32xf32, #tpu.memory_space<any>> -> memref<1x32xf32, #tpu.memory_space<any>>
    %c6_i32_96 = arith.constant 6 : i32
    %c0_i32_97 = arith.constant 0 : i32
    %128 = tpu.memref_slice %arg9[%c6_i32_96, %c0_i32_97] : memref<8x32xf32, #tpu.memory_space<vmem>> -> memref<1x32xf32, #tpu.memory_space<vmem>>
    %129 = tpu.memref_slice %arg12[%c0_i32_93, %c6_i32_94] : memref<3x8x!tpu.dma_semaphore, #tpu.memory_space<semaphore_mem>> -> memref<1x1x!tpu.dma_semaphore, #tpu.memory_space<semaphore_mem>>
    %130 = tpu.memref_squeeze %129 : memref<1x1x!tpu.dma_semaphore, #tpu.memory_space<semaphore_mem>> -> memref<!tpu.dma_semaphore, #tpu.memory_space<semaphore_mem>>
    tpu.enqueue_dma source(%127 : memref<1x32xf32, #tpu.memory_space<any>>) target(%128 : memref<1x32xf32, #tpu.memory_space<vmem>>) target_semaphore(%130 : memref<!tpu.dma_semaphore, #tpu.memory_space<semaphore_mem>>)
    %c1_i32_98 = arith.constant 1 : i32
    %c6_i32_99 = arith.constant 6 : i32
    %c0_i32_100 = arith.constant 0 : i32
    %131 = tpu.memref_slice %arg6[%124, %c0_i32_100] : memref<64x32xf32, #tpu.memory_space<any>> -> memref<1x32xf32, #tpu.memory_space<any>>
    %c6_i32_101 = arith.constant 6 : i32
    %c0_i32_102 = arith.constant 0 : i32
    %132 = tpu.memref_slice %arg10[%c6_i32_101, %c0_i32_102] : memref<8x32xf32, #tpu.memory_space<vmem>> -> memref<1x32xf32, #tpu.memory_space<vmem>>
    %133 = tpu.memref_slice %arg12[%c1_i32_98, %c6_i32_99] : memref<3x8x!tpu.dma_semaphore, #tpu.memory_space<semaphore_mem>> -> memref<1x1x!tpu.dma_semaphore, #tpu.memory_space<semaphore_mem>>
    %134 = tpu.memref_squeeze %133 : memref<1x1x!tpu.dma_semaphore, #tpu.memory_space<semaphore_mem>> -> memref<!tpu.dma_semaphore, #tpu.memory_space<semaphore_mem>>
    tpu.enqueue_dma source(%131 : memref<1x32xf32, #tpu.memory_space<any>>) target(%132 : memref<1x32xf32, #tpu.memory_space<vmem>>) target_semaphore(%134 : memref<!tpu.dma_semaphore, #tpu.memory_space<semaphore_mem>>)
    %c2_i32_103 = arith.constant 2 : i32
    %c6_i32_104 = arith.constant 6 : i32
    %c0_i32_105 = arith.constant 0 : i32
    %135 = tpu.memref_slice %arg6[%126, %c0_i32_105] : memref<64x32xf32, #tpu.memory_space<any>> -> memref<1x32xf32, #tpu.memory_space<any>>
    %c6_i32_106 = arith.constant 6 : i32
    %c0_i32_107 = arith.constant 0 : i32
    %136 = tpu.memref_slice %arg11[%c6_i32_106, %c0_i32_107] : memref<8x32xf32, #tpu.memory_space<vmem>> -> memref<1x32xf32, #tpu.memory_space<vmem>>
    %137 = tpu.memref_slice %arg12[%c2_i32_103, %c6_i32_104] : memref<3x8x!tpu.dma_semaphore, #tpu.memory_space<semaphore_mem>> -> memref<1x1x!tpu.dma_semaphore, #tpu.memory_space<semaphore_mem>>
    %138 = tpu.memref_squeeze %137 : memref<1x1x!tpu.dma_semaphore, #tpu.memory_space<semaphore_mem>> -> memref<!tpu.dma_semaphore, #tpu.memory_space<semaphore_mem>>
    tpu.enqueue_dma source(%135 : memref<1x32xf32, #tpu.memory_space<any>>) target(%136 : memref<1x32xf32, #tpu.memory_space<vmem>>) target_semaphore(%138 : memref<!tpu.dma_semaphore, #tpu.memory_space<semaphore_mem>>)
    %c7_i32 = arith.constant 7 : i32
    %139 = arith.addi %2, %c7_i32 : i32
    %140 = arith.index_cast %139 : i32 to index
    %141 = memref.load %arg2[%140] : memref<32xi32, #tpu.memory_space<smem>>
    %142 = arith.index_cast %139 : i32 to index
    %143 = memref.load %arg3[%142] : memref<32xi32, #tpu.memory_space<smem>>
    %144 = arith.index_cast %139 : i32 to index
    %145 = memref.load %arg4[%144] : memref<32xi32, #tpu.memory_space<smem>>
    %c0_i32_108 = arith.constant 0 : i32
    %c7_i32_109 = arith.constant 7 : i32
    %c0_i32_110 = arith.constant 0 : i32
    %146 = tpu.memref_slice %arg5[%141, %c0_i32_110] : memref<64x32xf32, #tpu.memory_space<any>> -> memref<1x32xf32, #tpu.memory_space<any>>
    %c7_i32_111 = arith.constant 7 : i32
    %c0_i32_112 = arith.constant 0 : i32
    %147 = tpu.memref_slice %arg9[%c7_i32_111, %c0_i32_112] : memref<8x32xf32, #tpu.memory_space<vmem>> -> memref<1x32xf32, #tpu.memory_space<vmem>>
    %148 = tpu.memref_slice %arg12[%c0_i32_108, %c7_i32_109] : memref<3x8x!tpu.dma_semaphore, #tpu.memory_space<semaphore_mem>> -> memref<1x1x!tpu.dma_semaphore, #tpu.memory_space<semaphore_mem>>
    %149 = tpu.memref_squeeze %148 : memref<1x1x!tpu.dma_semaphore, #tpu.memory_space<semaphore_mem>> -> memref<!tpu.dma_semaphore, #tpu.memory_space<semaphore_mem>>
    tpu.enqueue_dma source(%146 : memref<1x32xf32, #tpu.memory_space<any>>) target(%147 : memref<1x32xf32, #tpu.memory_space<vmem>>) target_semaphore(%149 : memref<!tpu.dma_semaphore, #tpu.memory_space<semaphore_mem>>)
    %c1_i32_113 = arith.constant 1 : i32
    %c7_i32_114 = arith.constant 7 : i32
    %c0_i32_115 = arith.constant 0 : i32
    %150 = tpu.memref_slice %arg6[%143, %c0_i32_115] : memref<64x32xf32, #tpu.memory_space<any>> -> memref<1x32xf32, #tpu.memory_space<any>>
    %c7_i32_116 = arith.constant 7 : i32
    %c0_i32_117 = arith.constant 0 : i32
    %151 = tpu.memref_slice %arg10[%c7_i32_116, %c0_i32_117] : memref<8x32xf32, #tpu.memory_space<vmem>> -> memref<1x32xf32, #tpu.memory_space<vmem>>
    %152 = tpu.memref_slice %arg12[%c1_i32_113, %c7_i32_114] : memref<3x8x!tpu.dma_semaphore, #tpu.memory_space<semaphore_mem>> -> memref<1x1x!tpu.dma_semaphore, #tpu.memory_space<semaphore_mem>>
    %153 = tpu.memref_squeeze %152 : memref<1x1x!tpu.dma_semaphore, #tpu.memory_space<semaphore_mem>> -> memref<!tpu.dma_semaphore, #tpu.memory_space<semaphore_mem>>
    tpu.enqueue_dma source(%150 : memref<1x32xf32, #tpu.memory_space<any>>) target(%151 : memref<1x32xf32, #tpu.memory_space<vmem>>) target_semaphore(%153 : memref<!tpu.dma_semaphore, #tpu.memory_space<semaphore_mem>>)
    %c2_i32_118 = arith.constant 2 : i32
    %c7_i32_119 = arith.constant 7 : i32
    %c0_i32_120 = arith.constant 0 : i32
    %154 = tpu.memref_slice %arg6[%145, %c0_i32_120] : memref<64x32xf32, #tpu.memory_space<any>> -> memref<1x32xf32, #tpu.memory_space<any>>
    %c7_i32_121 = arith.constant 7 : i32
    %c0_i32_122 = arith.constant 0 : i32
    %155 = tpu.memref_slice %arg11[%c7_i32_121, %c0_i32_122] : memref<8x32xf32, #tpu.memory_space<vmem>> -> memref<1x32xf32, #tpu.memory_space<vmem>>
    %156 = tpu.memref_slice %arg12[%c2_i32_118, %c7_i32_119] : memref<3x8x!tpu.dma_semaphore, #tpu.memory_space<semaphore_mem>> -> memref<1x1x!tpu.dma_semaphore, #tpu.memory_space<semaphore_mem>>
    %157 = tpu.memref_squeeze %156 : memref<1x1x!tpu.dma_semaphore, #tpu.memory_space<semaphore_mem>> -> memref<!tpu.dma_semaphore, #tpu.memory_space<semaphore_mem>>
    tpu.enqueue_dma source(%154 : memref<1x32xf32, #tpu.memory_space<any>>) target(%155 : memref<1x32xf32, #tpu.memory_space<vmem>>) target_semaphore(%157 : memref<!tpu.dma_semaphore, #tpu.memory_space<semaphore_mem>>)
    %c0_i32_123 = arith.constant 0 : i32
    %c0_i32_124 = arith.constant 0 : i32
    %c0_i32_125 = arith.constant 0 : i32
    %158 = tpu.memref_slice %arg5[%8, %c0_i32_125] : memref<64x32xf32, #tpu.memory_space<any>> -> memref<1x32xf32, #tpu.memory_space<any>>
    %c0_i32_126 = arith.constant 0 : i32
    %c0_i32_127 = arith.constant 0 : i32
    %159 = tpu.memref_slice %arg9[%c0_i32_126, %c0_i32_127] : memref<8x32xf32, #tpu.memory_space<vmem>> -> memref<1x32xf32, #tpu.memory_space<vmem>>
    %160 = tpu.memref_slice %arg12[%c0_i32_123, %c0_i32_124] : memref<3x8x!tpu.dma_semaphore, #tpu.memory_space<semaphore_mem>> -> memref<1x1x!tpu.dma_semaphore, #tpu.memory_space<semaphore_mem>>
    %161 = tpu.memref_squeeze %160 : memref<1x1x!tpu.dma_semaphore, #tpu.memory_space<semaphore_mem>> -> memref<!tpu.dma_semaphore, #tpu.memory_space<semaphore_mem>>
    tpu.wait_dma2 semaphore(%161 : memref<!tpu.dma_semaphore, #tpu.memory_space<semaphore_mem>>) src(%158 : memref<1x32xf32, #tpu.memory_space<any>>) dst(%159 : memref<1x32xf32, #tpu.memory_space<vmem>>)
    %c1_i32_128 = arith.constant 1 : i32
    %c0_i32_129 = arith.constant 0 : i32
    %c0_i32_130 = arith.constant 0 : i32
    %162 = tpu.memref_slice %arg6[%10, %c0_i32_130] : memref<64x32xf32, #tpu.memory_space<any>> -> memref<1x32xf32, #tpu.memory_space<any>>
    %c0_i32_131 = arith.constant 0 : i32
    %c0_i32_132 = arith.constant 0 : i32
    %163 = tpu.memref_slice %arg10[%c0_i32_131, %c0_i32_132] : memref<8x32xf32, #tpu.memory_space<vmem>> -> memref<1x32xf32, #tpu.memory_space<vmem>>
    %164 = tpu.memref_slice %arg12[%c1_i32_128, %c0_i32_129] : memref<3x8x!tpu.dma_semaphore, #tpu.memory_space<semaphore_mem>> -> memref<1x1x!tpu.dma_semaphore, #tpu.memory_space<semaphore_mem>>
    %165 = tpu.memref_squeeze %164 : memref<1x1x!tpu.dma_semaphore, #tpu.memory_space<semaphore_mem>> -> memref<!tpu.dma_semaphore, #tpu.memory_space<semaphore_mem>>
    tpu.wait_dma2 semaphore(%165 : memref<!tpu.dma_semaphore, #tpu.memory_space<semaphore_mem>>) src(%162 : memref<1x32xf32, #tpu.memory_space<any>>) dst(%163 : memref<1x32xf32, #tpu.memory_space<vmem>>)
    %c2_i32_133 = arith.constant 2 : i32
    %c0_i32_134 = arith.constant 0 : i32
    %c0_i32_135 = arith.constant 0 : i32
    %166 = tpu.memref_slice %arg6[%12, %c0_i32_135] : memref<64x32xf32, #tpu.memory_space<any>> -> memref<1x32xf32, #tpu.memory_space<any>>
    %c0_i32_136 = arith.constant 0 : i32
    %c0_i32_137 = arith.constant 0 : i32
    %167 = tpu.memref_slice %arg11[%c0_i32_136, %c0_i32_137] : memref<8x32xf32, #tpu.memory_space<vmem>> -> memref<1x32xf32, #tpu.memory_space<vmem>>
    %168 = tpu.memref_slice %arg12[%c2_i32_133, %c0_i32_134] : memref<3x8x!tpu.dma_semaphore, #tpu.memory_space<semaphore_mem>> -> memref<1x1x!tpu.dma_semaphore, #tpu.memory_space<semaphore_mem>>
    %169 = tpu.memref_squeeze %168 : memref<1x1x!tpu.dma_semaphore, #tpu.memory_space<semaphore_mem>> -> memref<!tpu.dma_semaphore, #tpu.memory_space<semaphore_mem>>
    tpu.wait_dma2 semaphore(%169 : memref<!tpu.dma_semaphore, #tpu.memory_space<semaphore_mem>>) src(%166 : memref<1x32xf32, #tpu.memory_space<any>>) dst(%167 : memref<1x32xf32, #tpu.memory_space<vmem>>)
    %c0_i32_138 = arith.constant 0 : i32
    %c1_i32_139 = arith.constant 1 : i32
    %c0_i32_140 = arith.constant 0 : i32
    %170 = tpu.memref_slice %arg5[%27, %c0_i32_140] : memref<64x32xf32, #tpu.memory_space<any>> -> memref<1x32xf32, #tpu.memory_space<any>>
    %c1_i32_141 = arith.constant 1 : i32
    %c0_i32_142 = arith.constant 0 : i32
    %171 = tpu.memref_slice %arg9[%c1_i32_141, %c0_i32_142] : memref<8x32xf32, #tpu.memory_space<vmem>> -> memref<1x32xf32, #tpu.memory_space<vmem>>
    %172 = tpu.memref_slice %arg12[%c0_i32_138, %c1_i32_139] : memref<3x8x!tpu.dma_semaphore, #tpu.memory_space<semaphore_mem>> -> memref<1x1x!tpu.dma_semaphore, #tpu.memory_space<semaphore_mem>>
    %173 = tpu.memref_squeeze %172 : memref<1x1x!tpu.dma_semaphore, #tpu.memory_space<semaphore_mem>> -> memref<!tpu.dma_semaphore, #tpu.memory_space<semaphore_mem>>
    tpu.wait_dma2 semaphore(%173 : memref<!tpu.dma_semaphore, #tpu.memory_space<semaphore_mem>>) src(%170 : memref<1x32xf32, #tpu.memory_space<any>>) dst(%171 : memref<1x32xf32, #tpu.memory_space<vmem>>)
    %c1_i32_143 = arith.constant 1 : i32
    %c1_i32_144 = arith.constant 1 : i32
    %c0_i32_145 = arith.constant 0 : i32
    %174 = tpu.memref_slice %arg6[%29, %c0_i32_145] : memref<64x32xf32, #tpu.memory_space<any>> -> memref<1x32xf32, #tpu.memory_space<any>>
    %c1_i32_146 = arith.constant 1 : i32
    %c0_i32_147 = arith.constant 0 : i32
    %175 = tpu.memref_slice %arg10[%c1_i32_146, %c0_i32_147] : memref<8x32xf32, #tpu.memory_space<vmem>> -> memref<1x32xf32, #tpu.memory_space<vmem>>
    %176 = tpu.memref_slice %arg12[%c1_i32_143, %c1_i32_144] : memref<3x8x!tpu.dma_semaphore, #tpu.memory_space<semaphore_mem>> -> memref<1x1x!tpu.dma_semaphore, #tpu.memory_space<semaphore_mem>>
    %177 = tpu.memref_squeeze %176 : memref<1x1x!tpu.dma_semaphore, #tpu.memory_space<semaphore_mem>> -> memref<!tpu.dma_semaphore, #tpu.memory_space<semaphore_mem>>
    tpu.wait_dma2 semaphore(%177 : memref<!tpu.dma_semaphore, #tpu.memory_space<semaphore_mem>>) src(%174 : memref<1x32xf32, #tpu.memory_space<any>>) dst(%175 : memref<1x32xf32, #tpu.memory_space<vmem>>)
    %c2_i32_148 = arith.constant 2 : i32
    %c1_i32_149 = arith.constant 1 : i32
    %c0_i32_150 = arith.constant 0 : i32
    %178 = tpu.memref_slice %arg6[%31, %c0_i32_150] : memref<64x32xf32, #tpu.memory_space<any>> -> memref<1x32xf32, #tpu.memory_space<any>>
    %c1_i32_151 = arith.constant 1 : i32
    %c0_i32_152 = arith.constant 0 : i32
    %179 = tpu.memref_slice %arg11[%c1_i32_151, %c0_i32_152] : memref<8x32xf32, #tpu.memory_space<vmem>> -> memref<1x32xf32, #tpu.memory_space<vmem>>
    %180 = tpu.memref_slice %arg12[%c2_i32_148, %c1_i32_149] : memref<3x8x!tpu.dma_semaphore, #tpu.memory_space<semaphore_mem>> -> memref<1x1x!tpu.dma_semaphore, #tpu.memory_space<semaphore_mem>>
    %181 = tpu.memref_squeeze %180 : memref<1x1x!tpu.dma_semaphore, #tpu.memory_space<semaphore_mem>> -> memref<!tpu.dma_semaphore, #tpu.memory_space<semaphore_mem>>
    tpu.wait_dma2 semaphore(%181 : memref<!tpu.dma_semaphore, #tpu.memory_space<semaphore_mem>>) src(%178 : memref<1x32xf32, #tpu.memory_space<any>>) dst(%179 : memref<1x32xf32, #tpu.memory_space<vmem>>)
    %c0_i32_153 = arith.constant 0 : i32
    %c2_i32_154 = arith.constant 2 : i32
    %c0_i32_155 = arith.constant 0 : i32
    %182 = tpu.memref_slice %arg5[%46, %c0_i32_155] : memref<64x32xf32, #tpu.memory_space<any>> -> memref<1x32xf32, #tpu.memory_space<any>>
    %c2_i32_156 = arith.constant 2 : i32
    %c0_i32_157 = arith.constant 0 : i32
    %183 = tpu.memref_slice %arg9[%c2_i32_156, %c0_i32_157] : memref<8x32xf32, #tpu.memory_space<vmem>> -> memref<1x32xf32, #tpu.memory_space<vmem>>
    %184 = tpu.memref_slice %arg12[%c0_i32_153, %c2_i32_154] : memref<3x8x!tpu.dma_semaphore, #tpu.memory_space<semaphore_mem>> -> memref<1x1x!tpu.dma_semaphore, #tpu.memory_space<semaphore_mem>>
    %185 = tpu.memref_squeeze %184 : memref<1x1x!tpu.dma_semaphore, #tpu.memory_space<semaphore_mem>> -> memref<!tpu.dma_semaphore, #tpu.memory_space<semaphore_mem>>
    tpu.wait_dma2 semaphore(%185 : memref<!tpu.dma_semaphore, #tpu.memory_space<semaphore_mem>>) src(%182 : memref<1x32xf32, #tpu.memory_space<any>>) dst(%183 : memref<1x32xf32, #tpu.memory_space<vmem>>)
    %c1_i32_158 = arith.constant 1 : i32
    %c2_i32_159 = arith.constant 2 : i32
    %c0_i32_160 = arith.constant 0 : i32
    %186 = tpu.memref_slice %arg6[%48, %c0_i32_160] : memref<64x32xf32, #tpu.memory_space<any>> -> memref<1x32xf32, #tpu.memory_space<any>>
    %c2_i32_161 = arith.constant 2 : i32
    %c0_i32_162 = arith.constant 0 : i32
    %187 = tpu.memref_slice %arg10[%c2_i32_161, %c0_i32_162] : memref<8x32xf32, #tpu.memory_space<vmem>> -> memref<1x32xf32, #tpu.memory_space<vmem>>
    %188 = tpu.memref_slice %arg12[%c1_i32_158, %c2_i32_159] : memref<3x8x!tpu.dma_semaphore, #tpu.memory_space<semaphore_mem>> -> memref<1x1x!tpu.dma_semaphore, #tpu.memory_space<semaphore_mem>>
    %189 = tpu.memref_squeeze %188 : memref<1x1x!tpu.dma_semaphore, #tpu.memory_space<semaphore_mem>> -> memref<!tpu.dma_semaphore, #tpu.memory_space<semaphore_mem>>
    tpu.wait_dma2 semaphore(%189 : memref<!tpu.dma_semaphore, #tpu.memory_space<semaphore_mem>>) src(%186 : memref<1x32xf32, #tpu.memory_space<any>>) dst(%187 : memref<1x32xf32, #tpu.memory_space<vmem>>)
    %c2_i32_163 = arith.constant 2 : i32
    %c2_i32_164 = arith.constant 2 : i32
    %c0_i32_165 = arith.constant 0 : i32
    %190 = tpu.memref_slice %arg6[%50, %c0_i32_165] : memref<64x32xf32, #tpu.memory_space<any>> -> memref<1x32xf32, #tpu.memory_space<any>>
    %c2_i32_166 = arith.constant 2 : i32
    %c0_i32_167 = arith.constant 0 : i32
    %191 = tpu.memref_slice %arg11[%c2_i32_166, %c0_i32_167] : memref<8x32xf32, #tpu.memory_space<vmem>> -> memref<1x32xf32, #tpu.memory_space<vmem>>
    %192 = tpu.memref_slice %arg12[%c2_i32_163, %c2_i32_164] : memref<3x8x!tpu.dma_semaphore, #tpu.memory_space<semaphore_mem>> -> memref<1x1x!tpu.dma_semaphore, #tpu.memory_space<semaphore_mem>>
    %193 = tpu.memref_squeeze %192 : memref<1x1x!tpu.dma_semaphore, #tpu.memory_space<semaphore_mem>> -> memref<!tpu.dma_semaphore, #tpu.memory_space<semaphore_mem>>
    tpu.wait_dma2 semaphore(%193 : memref<!tpu.dma_semaphore, #tpu.memory_space<semaphore_mem>>) src(%190 : memref<1x32xf32, #tpu.memory_space<any>>) dst(%191 : memref<1x32xf32, #tpu.memory_space<vmem>>)
    %c0_i32_168 = arith.constant 0 : i32
    %c3_i32_169 = arith.constant 3 : i32
    %c0_i32_170 = arith.constant 0 : i32
    %194 = tpu.memref_slice %arg5[%65, %c0_i32_170] : memref<64x32xf32, #tpu.memory_space<any>> -> memref<1x32xf32, #tpu.memory_space<any>>
    %c3_i32_171 = arith.constant 3 : i32
    %c0_i32_172 = arith.constant 0 : i32
    %195 = tpu.memref_slice %arg9[%c3_i32_171, %c0_i32_172] : memref<8x32xf32, #tpu.memory_space<vmem>> -> memref<1x32xf32, #tpu.memory_space<vmem>>
    %196 = tpu.memref_slice %arg12[%c0_i32_168, %c3_i32_169] : memref<3x8x!tpu.dma_semaphore, #tpu.memory_space<semaphore_mem>> -> memref<1x1x!tpu.dma_semaphore, #tpu.memory_space<semaphore_mem>>
    %197 = tpu.memref_squeeze %196 : memref<1x1x!tpu.dma_semaphore, #tpu.memory_space<semaphore_mem>> -> memref<!tpu.dma_semaphore, #tpu.memory_space<semaphore_mem>>
    tpu.wait_dma2 semaphore(%197 : memref<!tpu.dma_semaphore, #tpu.memory_space<semaphore_mem>>) src(%194 : memref<1x32xf32, #tpu.memory_space<any>>) dst(%195 : memref<1x32xf32, #tpu.memory_space<vmem>>)
    %c1_i32_173 = arith.constant 1 : i32
    %c3_i32_174 = arith.constant 3 : i32
    %c0_i32_175 = arith.constant 0 : i32
    %198 = tpu.memref_slice %arg6[%67, %c0_i32_175] : memref<64x32xf32, #tpu.memory_space<any>> -> memref<1x32xf32, #tpu.memory_space<any>>
    %c3_i32_176 = arith.constant 3 : i32
    %c0_i32_177 = arith.constant 0 : i32
    %199 = tpu.memref_slice %arg10[%c3_i32_176, %c0_i32_177] : memref<8x32xf32, #tpu.memory_space<vmem>> -> memref<1x32xf32, #tpu.memory_space<vmem>>
    %200 = tpu.memref_slice %arg12[%c1_i32_173, %c3_i32_174] : memref<3x8x!tpu.dma_semaphore, #tpu.memory_space<semaphore_mem>> -> memref<1x1x!tpu.dma_semaphore, #tpu.memory_space<semaphore_mem>>
    %201 = tpu.memref_squeeze %200 : memref<1x1x!tpu.dma_semaphore, #tpu.memory_space<semaphore_mem>> -> memref<!tpu.dma_semaphore, #tpu.memory_space<semaphore_mem>>
    tpu.wait_dma2 semaphore(%201 : memref<!tpu.dma_semaphore, #tpu.memory_space<semaphore_mem>>) src(%198 : memref<1x32xf32, #tpu.memory_space<any>>) dst(%199 : memref<1x32xf32, #tpu.memory_space<vmem>>)
    %c2_i32_178 = arith.constant 2 : i32
    %c3_i32_179 = arith.constant 3 : i32
    %c0_i32_180 = arith.constant 0 : i32
    %202 = tpu.memref_slice %arg6[%69, %c0_i32_180] : memref<64x32xf32, #tpu.memory_space<any>> -> memref<1x32xf32, #tpu.memory_space<any>>
    %c3_i32_181 = arith.constant 3 : i32
    %c0_i32_182 = arith.constant 0 : i32
    %203 = tpu.memref_slice %arg11[%c3_i32_181, %c0_i32_182] : memref<8x32xf32, #tpu.memory_space<vmem>> -> memref<1x32xf32, #tpu.memory_space<vmem>>
    %204 = tpu.memref_slice %arg12[%c2_i32_178, %c3_i32_179] : memref<3x8x!tpu.dma_semaphore, #tpu.memory_space<semaphore_mem>> -> memref<1x1x!tpu.dma_semaphore, #tpu.memory_space<semaphore_mem>>
    %205 = tpu.memref_squeeze %204 : memref<1x1x!tpu.dma_semaphore, #tpu.memory_space<semaphore_mem>> -> memref<!tpu.dma_semaphore, #tpu.memory_space<semaphore_mem>>
    tpu.wait_dma2 semaphore(%205 : memref<!tpu.dma_semaphore, #tpu.memory_space<semaphore_mem>>) src(%202 : memref<1x32xf32, #tpu.memory_space<any>>) dst(%203 : memref<1x32xf32, #tpu.memory_space<vmem>>)
    %c0_i32_183 = arith.constant 0 : i32
    %c4_i32_184 = arith.constant 4 : i32
    %c0_i32_185 = arith.constant 0 : i32
    %206 = tpu.memref_slice %arg5[%84, %c0_i32_185] : memref<64x32xf32, #tpu.memory_space<any>> -> memref<1x32xf32, #tpu.memory_space<any>>
    %c4_i32_186 = arith.constant 4 : i32
    %c0_i32_187 = arith.constant 0 : i32
    %207 = tpu.memref_slice %arg9[%c4_i32_186, %c0_i32_187] : memref<8x32xf32, #tpu.memory_space<vmem>> -> memref<1x32xf32, #tpu.memory_space<vmem>>
    %208 = tpu.memref_slice %arg12[%c0_i32_183, %c4_i32_184] : memref<3x8x!tpu.dma_semaphore, #tpu.memory_space<semaphore_mem>> -> memref<1x1x!tpu.dma_semaphore, #tpu.memory_space<semaphore_mem>>
    %209 = tpu.memref_squeeze %208 : memref<1x1x!tpu.dma_semaphore, #tpu.memory_space<semaphore_mem>> -> memref<!tpu.dma_semaphore, #tpu.memory_space<semaphore_mem>>
    tpu.wait_dma2 semaphore(%209 : memref<!tpu.dma_semaphore, #tpu.memory_space<semaphore_mem>>) src(%206 : memref<1x32xf32, #tpu.memory_space<any>>) dst(%207 : memref<1x32xf32, #tpu.memory_space<vmem>>)
    %c1_i32_188 = arith.constant 1 : i32
    %c4_i32_189 = arith.constant 4 : i32
    %c0_i32_190 = arith.constant 0 : i32
    %210 = tpu.memref_slice %arg6[%86, %c0_i32_190] : memref<64x32xf32, #tpu.memory_space<any>> -> memref<1x32xf32, #tpu.memory_space<any>>
    %c4_i32_191 = arith.constant 4 : i32
    %c0_i32_192 = arith.constant 0 : i32
    %211 = tpu.memref_slice %arg10[%c4_i32_191, %c0_i32_192] : memref<8x32xf32, #tpu.memory_space<vmem>> -> memref<1x32xf32, #tpu.memory_space<vmem>>
    %212 = tpu.memref_slice %arg12[%c1_i32_188, %c4_i32_189] : memref<3x8x!tpu.dma_semaphore, #tpu.memory_space<semaphore_mem>> -> memref<1x1x!tpu.dma_semaphore, #tpu.memory_space<semaphore_mem>>
    %213 = tpu.memref_squeeze %212 : memref<1x1x!tpu.dma_semaphore, #tpu.memory_space<semaphore_mem>> -> memref<!tpu.dma_semaphore, #tpu.memory_space<semaphore_mem>>
    tpu.wait_dma2 semaphore(%213 : memref<!tpu.dma_semaphore, #tpu.memory_space<semaphore_mem>>) src(%210 : memref<1x32xf32, #tpu.memory_space<any>>) dst(%211 : memref<1x32xf32, #tpu.memory_space<vmem>>)
    %c2_i32_193 = arith.constant 2 : i32
    %c4_i32_194 = arith.constant 4 : i32
    %c0_i32_195 = arith.constant 0 : i32
    %214 = tpu.memref_slice %arg6[%88, %c0_i32_195] : memref<64x32xf32, #tpu.memory_space<any>> -> memref<1x32xf32, #tpu.memory_space<any>>
    %c4_i32_196 = arith.constant 4 : i32
    %c0_i32_197 = arith.constant 0 : i32
    %215 = tpu.memref_slice %arg11[%c4_i32_196, %c0_i32_197] : memref<8x32xf32, #tpu.memory_space<vmem>> -> memref<1x32xf32, #tpu.memory_space<vmem>>
    %216 = tpu.memref_slice %arg12[%c2_i32_193, %c4_i32_194] : memref<3x8x!tpu.dma_semaphore, #tpu.memory_space<semaphore_mem>> -> memref<1x1x!tpu.dma_semaphore, #tpu.memory_space<semaphore_mem>>
    %217 = tpu.memref_squeeze %216 : memref<1x1x!tpu.dma_semaphore, #tpu.memory_space<semaphore_mem>> -> memref<!tpu.dma_semaphore, #tpu.memory_space<semaphore_mem>>
    tpu.wait_dma2 semaphore(%217 : memref<!tpu.dma_semaphore, #tpu.memory_space<semaphore_mem>>) src(%214 : memref<1x32xf32, #tpu.memory_space<any>>) dst(%215 : memref<1x32xf32, #tpu.memory_space<vmem>>)
    %c0_i32_198 = arith.constant 0 : i32
    %c5_i32_199 = arith.constant 5 : i32
    %c0_i32_200 = arith.constant 0 : i32
    %218 = tpu.memref_slice %arg5[%103, %c0_i32_200] : memref<64x32xf32, #tpu.memory_space<any>> -> memref<1x32xf32, #tpu.memory_space<any>>
    %c5_i32_201 = arith.constant 5 : i32
    %c0_i32_202 = arith.constant 0 : i32
    %219 = tpu.memref_slice %arg9[%c5_i32_201, %c0_i32_202] : memref<8x32xf32, #tpu.memory_space<vmem>> -> memref<1x32xf32, #tpu.memory_space<vmem>>
    %220 = tpu.memref_slice %arg12[%c0_i32_198, %c5_i32_199] : memref<3x8x!tpu.dma_semaphore, #tpu.memory_space<semaphore_mem>> -> memref<1x1x!tpu.dma_semaphore, #tpu.memory_space<semaphore_mem>>
    %221 = tpu.memref_squeeze %220 : memref<1x1x!tpu.dma_semaphore, #tpu.memory_space<semaphore_mem>> -> memref<!tpu.dma_semaphore, #tpu.memory_space<semaphore_mem>>
    tpu.wait_dma2 semaphore(%221 : memref<!tpu.dma_semaphore, #tpu.memory_space<semaphore_mem>>) src(%218 : memref<1x32xf32, #tpu.memory_space<any>>) dst(%219 : memref<1x32xf32, #tpu.memory_space<vmem>>)
    %c1_i32_203 = arith.constant 1 : i32
    %c5_i32_204 = arith.constant 5 : i32
    %c0_i32_205 = arith.constant 0 : i32
    %222 = tpu.memref_slice %arg6[%105, %c0_i32_205] : memref<64x32xf32, #tpu.memory_space<any>> -> memref<1x32xf32, #tpu.memory_space<any>>
    %c5_i32_206 = arith.constant 5 : i32
    %c0_i32_207 = arith.constant 0 : i32
    %223 = tpu.memref_slice %arg10[%c5_i32_206, %c0_i32_207] : memref<8x32xf32, #tpu.memory_space<vmem>> -> memref<1x32xf32, #tpu.memory_space<vmem>>
    %224 = tpu.memref_slice %arg12[%c1_i32_203, %c5_i32_204] : memref<3x8x!tpu.dma_semaphore, #tpu.memory_space<semaphore_mem>> -> memref<1x1x!tpu.dma_semaphore, #tpu.memory_space<semaphore_mem>>
    %225 = tpu.memref_squeeze %224 : memref<1x1x!tpu.dma_semaphore, #tpu.memory_space<semaphore_mem>> -> memref<!tpu.dma_semaphore, #tpu.memory_space<semaphore_mem>>
    tpu.wait_dma2 semaphore(%225 : memref<!tpu.dma_semaphore, #tpu.memory_space<semaphore_mem>>) src(%222 : memref<1x32xf32, #tpu.memory_space<any>>) dst(%223 : memref<1x32xf32, #tpu.memory_space<vmem>>)
    %c2_i32_208 = arith.constant 2 : i32
    %c5_i32_209 = arith.constant 5 : i32
    %c0_i32_210 = arith.constant 0 : i32
    %226 = tpu.memref_slice %arg6[%107, %c0_i32_210] : memref<64x32xf32, #tpu.memory_space<any>> -> memref<1x32xf32, #tpu.memory_space<any>>
    %c5_i32_211 = arith.constant 5 : i32
    %c0_i32_212 = arith.constant 0 : i32
    %227 = tpu.memref_slice %arg11[%c5_i32_211, %c0_i32_212] : memref<8x32xf32, #tpu.memory_space<vmem>> -> memref<1x32xf32, #tpu.memory_space<vmem>>
    %228 = tpu.memref_slice %arg12[%c2_i32_208, %c5_i32_209] : memref<3x8x!tpu.dma_semaphore, #tpu.memory_space<semaphore_mem>> -> memref<1x1x!tpu.dma_semaphore, #tpu.memory_space<semaphore_mem>>
    %229 = tpu.memref_squeeze %228 : memref<1x1x!tpu.dma_semaphore, #tpu.memory_space<semaphore_mem>> -> memref<!tpu.dma_semaphore, #tpu.memory_space<semaphore_mem>>
    tpu.wait_dma2 semaphore(%229 : memref<!tpu.dma_semaphore, #tpu.memory_space<semaphore_mem>>) src(%226 : memref<1x32xf32, #tpu.memory_space<any>>) dst(%227 : memref<1x32xf32, #tpu.memory_space<vmem>>)
    %c0_i32_213 = arith.constant 0 : i32
    %c6_i32_214 = arith.constant 6 : i32
    %c0_i32_215 = arith.constant 0 : i32
    %230 = tpu.memref_slice %arg5[%122, %c0_i32_215] : memref<64x32xf32, #tpu.memory_space<any>> -> memref<1x32xf32, #tpu.memory_space<any>>
    %c6_i32_216 = arith.constant 6 : i32
    %c0_i32_217 = arith.constant 0 : i32
    %231 = tpu.memref_slice %arg9[%c6_i32_216, %c0_i32_217] : memref<8x32xf32, #tpu.memory_space<vmem>> -> memref<1x32xf32, #tpu.memory_space<vmem>>
    %232 = tpu.memref_slice %arg12[%c0_i32_213, %c6_i32_214] : memref<3x8x!tpu.dma_semaphore, #tpu.memory_space<semaphore_mem>> -> memref<1x1x!tpu.dma_semaphore, #tpu.memory_space<semaphore_mem>>
    %233 = tpu.memref_squeeze %232 : memref<1x1x!tpu.dma_semaphore, #tpu.memory_space<semaphore_mem>> -> memref<!tpu.dma_semaphore, #tpu.memory_space<semaphore_mem>>
    tpu.wait_dma2 semaphore(%233 : memref<!tpu.dma_semaphore, #tpu.memory_space<semaphore_mem>>) src(%230 : memref<1x32xf32, #tpu.memory_space<any>>) dst(%231 : memref<1x32xf32, #tpu.memory_space<vmem>>)
    %c1_i32_218 = arith.constant 1 : i32
    %c6_i32_219 = arith.constant 6 : i32
    %c0_i32_220 = arith.constant 0 : i32
    %234 = tpu.memref_slice %arg6[%124, %c0_i32_220] : memref<64x32xf32, #tpu.memory_space<any>> -> memref<1x32xf32, #tpu.memory_space<any>>
    %c6_i32_221 = arith.constant 6 : i32
    %c0_i32_222 = arith.constant 0 : i32
    %235 = tpu.memref_slice %arg10[%c6_i32_221, %c0_i32_222] : memref<8x32xf32, #tpu.memory_space<vmem>> -> memref<1x32xf32, #tpu.memory_space<vmem>>
    %236 = tpu.memref_slice %arg12[%c1_i32_218, %c6_i32_219] : memref<3x8x!tpu.dma_semaphore, #tpu.memory_space<semaphore_mem>> -> memref<1x1x!tpu.dma_semaphore, #tpu.memory_space<semaphore_mem>>
    %237 = tpu.memref_squeeze %236 : memref<1x1x!tpu.dma_semaphore, #tpu.memory_space<semaphore_mem>> -> memref<!tpu.dma_semaphore, #tpu.memory_space<semaphore_mem>>
    tpu.wait_dma2 semaphore(%237 : memref<!tpu.dma_semaphore, #tpu.memory_space<semaphore_mem>>) src(%234 : memref<1x32xf32, #tpu.memory_space<any>>) dst(%235 : memref<1x32xf32, #tpu.memory_space<vmem>>)
    %c2_i32_223 = arith.constant 2 : i32
    %c6_i32_224 = arith.constant 6 : i32
    %c0_i32_225 = arith.constant 0 : i32
    %238 = tpu.memref_slice %arg6[%126, %c0_i32_225] : memref<64x32xf32, #tpu.memory_space<any>> -> memref<1x32xf32, #tpu.memory_space<any>>
    %c6_i32_226 = arith.constant 6 : i32
    %c0_i32_227 = arith.constant 0 : i32
    %239 = tpu.memref_slice %arg11[%c6_i32_226, %c0_i32_227] : memref<8x32xf32, #tpu.memory_space<vmem>> -> memref<1x32xf32, #tpu.memory_space<vmem>>
    %240 = tpu.memref_slice %arg12[%c2_i32_223, %c6_i32_224] : memref<3x8x!tpu.dma_semaphore, #tpu.memory_space<semaphore_mem>> -> memref<1x1x!tpu.dma_semaphore, #tpu.memory_space<semaphore_mem>>
    %241 = tpu.memref_squeeze %240 : memref<1x1x!tpu.dma_semaphore, #tpu.memory_space<semaphore_mem>> -> memref<!tpu.dma_semaphore, #tpu.memory_space<semaphore_mem>>
    tpu.wait_dma2 semaphore(%241 : memref<!tpu.dma_semaphore, #tpu.memory_space<semaphore_mem>>) src(%238 : memref<1x32xf32, #tpu.memory_space<any>>) dst(%239 : memref<1x32xf32, #tpu.memory_space<vmem>>)
    %c0_i32_228 = arith.constant 0 : i32
    %c7_i32_229 = arith.constant 7 : i32
    %c0_i32_230 = arith.constant 0 : i32
    %242 = tpu.memref_slice %arg5[%141, %c0_i32_230] : memref<64x32xf32, #tpu.memory_space<any>> -> memref<1x32xf32, #tpu.memory_space<any>>
    %c7_i32_231 = arith.constant 7 : i32
    %c0_i32_232 = arith.constant 0 : i32
    %243 = tpu.memref_slice %arg9[%c7_i32_231, %c0_i32_232] : memref<8x32xf32, #tpu.memory_space<vmem>> -> memref<1x32xf32, #tpu.memory_space<vmem>>
    %244 = tpu.memref_slice %arg12[%c0_i32_228, %c7_i32_229] : memref<3x8x!tpu.dma_semaphore, #tpu.memory_space<semaphore_mem>> -> memref<1x1x!tpu.dma_semaphore, #tpu.memory_space<semaphore_mem>>
    %245 = tpu.memref_squeeze %244 : memref<1x1x!tpu.dma_semaphore, #tpu.memory_space<semaphore_mem>> -> memref<!tpu.dma_semaphore, #tpu.memory_space<semaphore_mem>>
    tpu.wait_dma2 semaphore(%245 : memref<!tpu.dma_semaphore, #tpu.memory_space<semaphore_mem>>) src(%242 : memref<1x32xf32, #tpu.memory_space<any>>) dst(%243 : memref<1x32xf32, #tpu.memory_space<vmem>>)
    %c1_i32_233 = arith.constant 1 : i32
    %c7_i32_234 = arith.constant 7 : i32
    %c0_i32_235 = arith.constant 0 : i32
    %246 = tpu.memref_slice %arg6[%143, %c0_i32_235] : memref<64x32xf32, #tpu.memory_space<any>> -> memref<1x32xf32, #tpu.memory_space<any>>
    %c7_i32_236 = arith.constant 7 : i32
    %c0_i32_237 = arith.constant 0 : i32
    %247 = tpu.memref_slice %arg10[%c7_i32_236, %c0_i32_237] : memref<8x32xf32, #tpu.memory_space<vmem>> -> memref<1x32xf32, #tpu.memory_space<vmem>>
    %248 = tpu.memref_slice %arg12[%c1_i32_233, %c7_i32_234] : memref<3x8x!tpu.dma_semaphore, #tpu.memory_space<semaphore_mem>> -> memref<1x1x!tpu.dma_semaphore, #tpu.memory_space<semaphore_mem>>
    %249 = tpu.memref_squeeze %248 : memref<1x1x!tpu.dma_semaphore, #tpu.memory_space<semaphore_mem>> -> memref<!tpu.dma_semaphore, #tpu.memory_space<semaphore_mem>>
    tpu.wait_dma2 semaphore(%249 : memref<!tpu.dma_semaphore, #tpu.memory_space<semaphore_mem>>) src(%246 : memref<1x32xf32, #tpu.memory_space<any>>) dst(%247 : memref<1x32xf32, #tpu.memory_space<vmem>>)
    %c2_i32_238 = arith.constant 2 : i32
    %c7_i32_239 = arith.constant 7 : i32
    %c0_i32_240 = arith.constant 0 : i32
    %250 = tpu.memref_slice %arg6[%145, %c0_i32_240] : memref<64x32xf32, #tpu.memory_space<any>> -> memref<1x32xf32, #tpu.memory_space<any>>
    %c7_i32_241 = arith.constant 7 : i32
    %c0_i32_242 = arith.constant 0 : i32
    %251 = tpu.memref_slice %arg11[%c7_i32_241, %c0_i32_242] : memref<8x32xf32, #tpu.memory_space<vmem>> -> memref<1x32xf32, #tpu.memory_space<vmem>>
    %252 = tpu.memref_slice %arg12[%c2_i32_238, %c7_i32_239] : memref<3x8x!tpu.dma_semaphore, #tpu.memory_space<semaphore_mem>> -> memref<1x1x!tpu.dma_semaphore, #tpu.memory_space<semaphore_mem>>
    %253 = tpu.memref_squeeze %252 : memref<1x1x!tpu.dma_semaphore, #tpu.memory_space<semaphore_mem>> -> memref<!tpu.dma_semaphore, #tpu.memory_space<semaphore_mem>>
    tpu.wait_dma2 semaphore(%253 : memref<!tpu.dma_semaphore, #tpu.memory_space<semaphore_mem>>) src(%250 : memref<1x32xf32, #tpu.memory_space<any>>) dst(%251 : memref<1x32xf32, #tpu.memory_space<vmem>>)
    %c0 = arith.constant 0 : index
    %c0_243 = arith.constant 0 : index
    %254 = vector.load %arg9[%c0, %c0_243] : memref<8x32xf32, #tpu.memory_space<vmem>>, vector<8x32xf32>
    %c0_244 = arith.constant 0 : index
    %c0_245 = arith.constant 0 : index
    %255 = vector.load %arg10[%c0_244, %c0_245] : memref<8x32xf32, #tpu.memory_space<vmem>>, vector<8x32xf32>
    %256 = arith.mulf %254, %255 : vector<8x32xf32>
    %cst = arith.constant dense<0.000000e+00> : vector<8xf32>
    %257 = vector.multi_reduction <add>, %256, %cst [1] : vector<8x32xf32> to vector<8xf32>
    %258 = vector.shape_cast %257 : vector<8xf32> to vector<8x1xf32>
    %c0_246 = arith.constant 0 : index
    %c0_247 = arith.constant 0 : index
    %259 = vector.load %arg11[%c0_246, %c0_247] : memref<8x32xf32, #tpu.memory_space<vmem>>, vector<8x32xf32>
    %260 = arith.mulf %254, %259 : vector<8x32xf32>
    %cst_248 = arith.constant dense<0.000000e+00> : vector<8xf32>
    %261 = vector.multi_reduction <add>, %260, %cst_248 [1] : vector<8x32xf32> to vector<8xf32>
    %262 = vector.shape_cast %261 : vector<8xf32> to vector<8x1xf32>
    %cst_249 = arith.constant 0.000000e+00 : f32
    %263 = vector.broadcast %cst_249 : f32 to vector<8x1xf32>
    %264 = arith.subf %263, %258 : vector<8x1xf32>
    %265 = math.exp %264 : vector<8x1xf32>
    %cst_250 = arith.constant 1.000000e+00 : f32
    %266 = vector.broadcast %cst_250 : f32 to vector<8x1xf32>
    %267 = arith.addf %266, %265 : vector<8x1xf32>
    %cst_251 = arith.constant 1.000000e+00 : f32
    %268 = vector.broadcast %cst_251 : f32 to vector<8x1xf32>
    %269 = arith.divf %268, %267 : vector<8x1xf32>
    %cst_252 = arith.constant 0.000000e+00 : f32
    %270 = vector.broadcast %cst_252 : f32 to vector<8x1xf32>
    %271 = arith.subf %270, %262 : vector<8x1xf32>
    %272 = math.exp %271 : vector<8x1xf32>
    %cst_253 = arith.constant 1.000000e+00 : f32
    %273 = vector.broadcast %cst_253 : f32 to vector<8x1xf32>
    %274 = arith.addf %273, %272 : vector<8x1xf32>
    %cst_254 = arith.constant 1.000000e+00 : f32
    %275 = vector.broadcast %cst_254 : f32 to vector<8x1xf32>
    %276 = arith.divf %275, %274 : vector<8x1xf32>
    %277 = tpu.iota {dimensions = array<i32: 0>} : vector<8x1xi32>
    %278 = vector.broadcast %2 : i32 to vector<8x1xi32>
    %279 = arith.addi %278, %277 : vector<8x1xi32>
    %c32_i32 = arith.constant 32 : i32
    %280 = vector.broadcast %c32_i32 : i32 to vector<8x1xi32>
    %281 = arith.cmpi slt, %279, %280 : vector<8x1xi32>
    %cst_255 = arith.constant 0.000000e+00 : f32
    %282 = vector.broadcast %cst_255 : f32 to vector<8x1xf32>
    %283 = arith.select %281, %269, %282 : vector<8x1xi1>, vector<8x1xf32>
    %cst_256 = arith.constant 0.000000e+00 : f32
    %284 = vector.broadcast %cst_256 : f32 to vector<8x1xf32>
    %285 = arith.select %281, %276, %284 : vector<8x1xi1>, vector<8x1xf32>
    %c0_257 = arith.constant 0 : index
    %c0_258 = arith.constant 0 : index
    %c0_259 = arith.constant 0 : index
    %286 = vector.load %arg7[%c0_257, %c0_258, %c0_259] : memref<1x1x1xf32, #tpu.memory_space<vmem>>, vector<1x1x1xf32>
    %cst_260 = arith.constant dense<0.000000e+00> : vector<1xf32>
    %287 = vector.multi_reduction <add>, %283, %cst_260 [0] : vector<8x1xf32> to vector<1xf32>
    %288 = vector.shape_cast %287 : vector<1xf32> to vector<1x1xf32>
    %289 = vector.shape_cast %288 : vector<1x1xf32> to vector<1x1x1xf32>
    %290 = arith.addf %286, %289 : vector<1x1x1xf32>
    %c0_261 = arith.constant 0 : index
    %c0_262 = arith.constant 0 : index
    %c0_263 = arith.constant 0 : index
    %291 = vector.load %arg7[%c0_261, %c0_262, %c0_263] : memref<1x1x1xf32, #tpu.memory_space<vmem>>, vector<1x1x1xf32>
    tpu.vector_store %arg7[%c0_261, %c0_262, %c0_263], %290 {strides = array<i32>} : memref<1x1x1xf32, #tpu.memory_space<vmem>>, vector<1x1x1xf32>,
    %c0_264 = arith.constant 0 : index
    %c0_265 = arith.constant 0 : index
    %c0_266 = arith.constant 0 : index
    %292 = vector.load %arg8[%c0_264, %c0_265, %c0_266] : memref<1x1x1xf32, #tpu.memory_space<vmem>>, vector<1x1x1xf32>
    %cst_267 = arith.constant dense<0.000000e+00> : vector<1xf32>
    %293 = vector.multi_reduction <add>, %285, %cst_267 [0] : vector<8x1xf32> to vector<1xf32>
    %294 = vector.shape_cast %293 : vector<1xf32> to vector<1x1xf32>
    %295 = vector.shape_cast %294 : vector<1x1xf32> to vector<1x1x1xf32>
    %296 = arith.addf %292, %295 : vector<1x1x1xf32>
    %c0_268 = arith.constant 0 : index
    %c0_269 = arith.constant 0 : index
    %c0_270 = arith.constant 0 : index
    %297 = vector.load %arg8[%c0_268, %c0_269, %c0_270] : memref<1x1x1xf32, #tpu.memory_space<vmem>>, vector<1x1x1xf32>
    tpu.vector_store %arg8[%c0_268, %c0_269, %c0_270], %296 {strides = array<i32>} : memref<1x1x1xf32, #tpu.memory_space<vmem>>, vector<1x1x1xf32>,
    return
  }
  func.func @transform_2(%arg0: i32, %arg1: i32, %arg2: memref<32xi32, #tpu.memory_space<smem>>, %arg3: memref<32xi32, #tpu.memory_space<smem>>, %arg4: memref<32xi32, #tpu.memory_space<smem>>) -> (i32, i32, i32) {
    %c0_i32 = arith.constant 0 : i32
    %c0_i32_0 = arith.constant 0 : i32
    %c0_i32_1 = arith.constant 0 : i32
    return %arg0, %c0_i32, %c0_i32_0 : i32, i32, i32
  }
  func.func @transform_3(%arg0: i32, %arg1: i32, %arg2: memref<32xi32, #tpu.memory_space<smem>>, %arg3: memref<32xi32, #tpu.memory_space<smem>>, %arg4: memref<32xi32, #tpu.memory_space<smem>>) -> (i32, i32, i32) {
    %c0_i32 = arith.constant 0 : i32
    %c0_i32_0 = arith.constant 0 : i32
    %c0_i32_1 = arith.constant 0 : i32
    return %arg0, %c0_i32, %c0_i32_0 : i32, i32, i32
  }
}

</mosaic_0001>

<llo_original>
// kernel: tpu_custom_call.1
$region0: #{tpu_custom_call.1}
  #allocation0 [shape = 'u32[]', space=smem, size = 0x4, offset = 0x4, fixed_abs, tag = 'smem constant byte address 0x4 - core index']
  #allocation1 [shape = 'u32[144,128]{1,0:T(1,128)}', space=vmem, size = 0x12000, scoped, tag = 'internal scratch']
  #allocation2 [shape = 'f32[8,32]{1,0:T(8,128)}', space=vmem, size = 0x1000, scoped, tag = 'scratch operand']
  #allocation3 [shape = 'f32[8,32]{1,0:T(8,128)}', space=vmem, size = 0x1000, scoped, tag = 'scratch operand']
  #allocation4 [shape = 'f32[8,32]{1,0:T(8,128)}', space=vmem, size = 0x1000, scoped, tag = 'scratch operand']
  #allocation5 [shape = 's32[24]{0}', space=sflag, size = 0x60, scoped, tag = 'scratch operand']
  #allocation6 [shape = 's32[1]{0}', space=sflag, size = 0x4, scoped, tag = 'scoped memory for tpu_custom_call.1']
  #allocation7 [shape = 'u8[512]{0}', space=smem, size = 0x200, scoped, tag = 'prefetched SMEM operand 0']
  #allocation8 [shape = 'u8[512]{0}', space=smem, size = 0x200, scoped, tag = 'prefetched SMEM operand 1']
  #allocation9 [shape = 'u8[512]{0}', space=smem, size = 0x200, scoped, tag = 'prefetched SMEM operand 2']
  #allocation10 [shape = 's32[]', space=sflag, size = 0x4, offset = 0, fixed_abs, tag = 'sflag constant byte address 0x0 - dummy sync flag']
  #allocation11 [shape = 's32[]', space=sflag, size = 0x4, offset = 0, fixed_abs, tag = 'sflag constant byte address 0x0 - dummy sync flag']
  #allocation12 [shape = 's32[]', space=sflag, size = 0x4, offset = 0, fixed_abs, tag = 'sflag constant byte address 0x0 - dummy sync flag']
  #allocation13 [shape = 's32[]', space=sflag, size = 0x4, offset = 0, fixed_abs, tag = 'sflag constant byte address 0x0 - dummy sync flag']
  #allocation14 [shape = 's32[]', space=sflag, size = 0x4, offset = 0, fixed_abs, tag = 'sflag constant byte address 0x0 - dummy sync flag']
  #allocation15 [shape = 's32[]', space=sflag, size = 0x4, offset = 0, fixed_abs, tag = 'sflag constant byte address 0x0 - dummy sync flag']
  #allocation16 [shape = 's32[]', space=sflag, size = 0x4, offset = 0, fixed_abs, tag = 'sflag constant byte address 0x0 - dummy sync flag']
  #allocation17 [shape = 's32[]', space=sflag, size = 0x4, offset = 0, fixed_abs, tag = 'sflag constant byte address 0x0 - dummy sync flag']
  #allocation18 [shape = 's32[]', space=sflag, size = 0x4, offset = 0, fixed_abs, tag = 'sflag constant byte address 0x0 - dummy sync flag']
  #allocation19 [shape = 's32[]', space=sflag, size = 0x4, offset = 0, fixed_abs, tag = 'sflag constant byte address 0x0 - dummy sync flag']
  #allocation20 [shape = 's32[]', space=sflag, size = 0x4, offset = 0, fixed_abs, tag = 'sflag constant byte address 0x0 - dummy sync flag']
  #allocation21 [shape = 's32[]', space=sflag, size = 0x4, offset = 0, fixed_abs, tag = 'sflag constant byte address 0x0 - dummy sync flag']
  #allocation22 [shape = 's32[]', space=sflag, size = 0x4, offset = 0, fixed_abs, tag = 'sflag constant byte address 0x0 - dummy sync flag']
  #allocation23 [shape = 's32[]', space=sflag, size = 0x4, offset = 0, fixed_abs, tag = 'sflag constant byte address 0x0 - dummy sync flag']
  #allocation24 [shape = 's32[]', space=sflag, size = 0x4, offset = 0, fixed_abs, tag = 'sflag constant byte address 0x0 - dummy sync flag']
  #allocation25 [shape = 's32[]', space=sflag, size = 0x4, offset = 0, fixed_abs, tag = 'sflag constant byte address 0x0 - dummy sync flag']
  #allocation26 [shape = 's32[]', space=sflag, size = 0x4, offset = 0, fixed_abs, tag = 'sflag constant byte address 0x0 - dummy sync flag']
  #allocation27 [shape = 's32[]', space=sflag, size = 0x4, offset = 0, fixed_abs, tag = 'sflag constant byte address 0x0 - dummy sync flag']
  #allocation28 [shape = 's32[]', space=sflag, size = 0x4, offset = 0, fixed_abs, tag = 'sflag constant byte address 0x0 - dummy sync flag']
  #allocation29 [shape = 's32[]', space=sflag, size = 0x4, offset = 0, fixed_abs, tag = 'sflag constant byte address 0x0 - dummy sync flag']
  #allocation30 [shape = 's32[]', space=sflag, size = 0x4, offset = 0, fixed_abs, tag = 'sflag constant byte address 0x0 - dummy sync flag']
  #allocation31 [shape = 's32[]', space=sflag, size = 0x4, offset = 0, fixed_abs, tag = 'sflag constant byte address 0x0 - dummy sync flag']
  #allocation32 [shape = 's32[]', space=sflag, size = 0x4, offset = 0, fixed_abs, tag = 'sflag constant byte address 0x0 - dummy sync flag']
  #allocation33 [shape = 's32[]', space=sflag, size = 0x4, offset = 0, fixed_abs, tag = 'sflag constant byte address 0x0 - dummy sync flag']
  %s0 = inlined_call_operand.vmem [shape: s32[32], index: 0, kind: input, shape index: {}]
  %s1 = inlined_call_operand.vmem [shape: s32[32], index: 1, kind: input, shape index: {}]
  %s2 = inlined_call_operand.vmem [shape: s32[32], index: 2, kind: input, shape index: {}]
  %s3 = inlined_call_operand.vmem [shape: f32[64,32], index: 3, kind: input, shape index: {}]
  %s4 = inlined_call_operand.vmem [shape: f32[64,32], index: 4, kind: input, shape index: {}]
  %s5 = inlined_call_operand.vmem [shape: f32[2,1,1], index: 5, kind: output, shape index: {0}]
  %s6 = inlined_call_operand.vmem [shape: f32[2,1,1], index: 6, kind: output, shape index: {1}]
  %7 = xla_tuple %s5, %s6
  %s8 = sld [smem:[#allocation0]]
  $region757: #{tpu_custom_call.1} parent=0
    _
  %s10 = ssub.s32 1, %s8
  %s11 = scalar_select 0, %s10, %s8
  %s12 = sshll.u32 %s0, 4
  %s13 = int_to_ptr.vmem [resolvable:$true] %s12
  %15 = dma.vmem_to_smem %s13, 16, [#allocation7], [#allocation6]
  %s16 = sshll.u32 %s1, 4
  %s17 = int_to_ptr.vmem [resolvable:$true] %s16
  %19 = dma.vmem_to_smem %s17, 16, [#allocation8], [#allocation6]
  %s20 = sshll.u32 %s2, 4
  %s21 = int_to_ptr.vmem [resolvable:$true] %s20
  %23 = dma.vmem_to_smem %s21, 16, [#allocation9], [#allocation6]
  %24 = dma.done [#allocation6], 48
  %25 = sfence
  loop: start=0, step=1, limit=5
  $region2: #{tpu_custom_call.1} parent=0 // loop_pre_header
    _
  $region3: #{tpu_custom_call.1} parent=0 // loop_header
    %s27 = sphi 0, %s31
    %p28 = scmp.ge.s32.totalorder %s27, 5
    %s33 = sphi 0, %s43
    %s34 = sphi 0, %s39
    %s35 = sphi 0, %s33
    %s36 = sphi 0, %s34
    %s46 = sphi 0, %s48
    %s49 = sphi 0, %s46
    %s59 = sphi 0, %s49
    %s65 = sphi 0, %s67
    %s68 = sphi 0, %s65
    %s78 = sphi 0, %s68
  $region4: #{tpu_custom_call.1} parent=0 // loop_header_branch
    %30 = sbr.rel (%p28) target = $region8
  $region5: #{tpu_custom_call.1} parent=0 // loop_body
    %s32 = ssub.s32 %s27, 1
    %s37 = sadd.s32 1, %s34
    %p38 = scmp.ge.s32.totalorder %s37, 2
    %s39 = scalar_select %p38, 0, %s37
    %s40 = sadd.s32 1, %s33
    %s41 = scalar_select %p38, %s40, %s33
    %p42 = scmp.ge.s32.totalorder %s41, 2
    %s43 = scalar_select %p42, 0, %s41
    %s44 = ssub.s32 %s33, %s43
    %p45 = scmp.eq.s32.totalorder %s44, 0
    %s47 = sadd.s32 %s46, 1
    %s48 = scalar_select %p45, %s46, %s47
    %p50 = pneg %p45
    %p51 = scmp.eq.s32.totalorder %s27, 3
    %p52 = por %p50, %p51
    %p53 = scmp.ne.s32.totalorder %s46, %s49
    %p54 = scmp.eq.s32.totalorder %s27, 0
    %p55 = por %p53, %p54
    %p56 = scmp.ne.s32.totalorder %s46, %s49
    %p57 = scmp.eq.s32.totalorder %s32, 3
    %p58 = por %p56, %p57
    %p60 = scmp.ne.s32.totalorder %s49, %s59
    %p61 = scmp.eq.s32.totalorder %s32, 0
    %p62 = por %p60, %p61
    %s63 = ssub.s32 %s33, %s43
    %p64 = scmp.eq.s32.totalorder %s63, 0
    %s66 = sadd.s32 %s65, 1
    %s67 = scalar_select %p64, %s65, %s66
    %p69 = pneg %p64
    %p70 = scmp.eq.s32.totalorder %s27, 3
    %p71 = por %p69, %p70
    %p72 = scmp.ne.s32.totalorder %s65, %s68
    %p73 = scmp.eq.s32.totalorder %s27, 0
    %p74 = por %p72, %p73
    %p75 = scmp.ne.s32.totalorder %s65, %s68
    %p76 = scmp.eq.s32.totalorder %s32, 3
    %p77 = por %p75, %p76
    %p79 = scmp.ne.s32.totalorder %s68, %s78
    %p80 = scmp.eq.s32.totalorder %s32, 0
    %p81 = por %p79, %p80
    %p82 = scmp.lt.s32.totalorder %s27, 4
    // Predicated region
    $region9: #{tpu_custom_call.1} parent=5 // pred_check
      %p83 = pneg %p82
    $region10: #{tpu_custom_call.1} parent=5 // pred_check_branch
      %85 = sbr.rel (%p83) target = $region12
    $region11: #{tpu_custom_call.1} parent=5 // pred_region
      %p86 = pneg %p55
      %p87 = pneg %p52
      %p88 = scmp.lt.s32.totalorder %s33, 1
      %s89 = scalar_select %p88, %s33, 1
      %s90 = scalar_lea.vmem %s5, %s89
      %p91 = pneg %p74
      %p92 = pneg %p71
      %p93 = scmp.lt.s32.totalorder %s33, 1
      %s94 = scalar_select %p93, %s33, 1
      %s95 = scalar_lea.vmem %s6, %s94
      %p96 = scmp.lt.s32.totalorder %s33, 1
      %s97 = scalar_select %p96, %s33, 1
      %s98 = scalar_lea.vmem %s5, %s97
      %p99 = scmp.lt.s32.totalorder %s33, 1
      %s100 = scalar_select %p99, %s33, 1
      %s101 = scalar_lea.vmem %s6, %s100
      %s102 = smul.u32 %s33, 2
      %s103 = sadd.s32 %s102, %s34
      %s104 = smul.u32 %s103, 8
      %p105 = scmp.eq.s32.totalorder %s34, 0
      // Predicated region
      $region13: #{tpu_custom_call.1} parent=11 // pred_check
        %p106 = pneg %p105
      $region14: #{tpu_custom_call.1} parent=11 // pred_check_branch
        %108 = sbr.rel (%p106) target = $region16
      $region15: #{tpu_custom_call.1} parent=11 // pred_region
        %vm109 = vcmask 0
        %110 = vst.msk [vmem:[%s98] sm:$0x1] %vm109, 0.0
        %111 = vst.msk [vmem:[%s101] sm:$0x1] %vm109, 0.0
      $region16: #{tpu_custom_call.1} parent=11 // pred_fallthru
        _
      %s112 = sld [smem:[#allocation7 + %s104]]
      %s113 = sld [smem:[#allocation8 + %s104]]
      %s114 = sld [smem:[#allocation9 + %s104]]
      %s115 = scalar_lea.vmem %s3, %s112
      %p117 = scmp.lt.u32.totalorder 1, 8
      %p118 = pneg %p117
      // Predicated region
      $region17: #{tpu_custom_call.1} parent=11 // pred_check
        _
      $region18: #{tpu_custom_call.1} parent=11 // pred_check_branch
        %120 = sbr.rel (%p117) target = $region20
      $region19: #{tpu_custom_call.1} parent=11 // pred_region
        %s135 = sand.u32 1, 7
        %p136 = scmp.eq.s32.totalorder %s135, 0
        %p137 = pneg %p136
        // Predicated region
        $region32: #{tpu_custom_call.1} parent=19 // pred_check
          _
        $region33: #{tpu_custom_call.1} parent=19 // pred_check_branch
          %139 = sbr.rel (%p136) target = $region35
        $region34: #{tpu_custom_call.1} parent=19 // pred_region
          %s140 = sand.u32 1, 7
          %s141 = ssub.s32 1, %s140
          %s142 = scalar_lea.vmem %s115, %s141
          %s143 = ssub.s32 1, %s140
          %s144 = scalar_lea.vmem [#allocation2], %s143
          %s145 = sshllo.u32 0, %s140
          loop: start=0, step=1, limit=1
          $region36: #{tpu_custom_call.1} parent=34 // loop_pre_header
            _
          $region37: #{tpu_custom_call.1} parent=34 // loop_header
            %s147 = sphi 0, %s151
            %p148 = scmp.ge.s32.totalorder %s147, 1
            %s152 = sphi %s142, %s142
            %s153 = sphi %s144, %s144
          $region38: #{tpu_custom_call.1} parent=34 // loop_header_branch
            %150 = sbr.rel (%p148) target = $region42
          $region39: #{tpu_custom_call.1} parent=34 // loop_body
            %v154 = vld [vmem:[%s152] sm:%s145]
            %155 = vst [vmem:[%s153] sm:%s145] %v154
          $region40: #{tpu_custom_call.1} parent=34 // loop_footer
            %s151 = sadd.s32 1, %s147
          $region41: #{tpu_custom_call.1} parent=34 // loop_footer_branch
            %146 = sbr.rel target = $region37
          $region42: #{tpu_custom_call.1} parent=34 // loop_exit
            _
        $region35: #{tpu_custom_call.1} parent=19 // pred_fallthru
          _
      $region20: #{tpu_custom_call.1} parent=11 // pred_fallthru
        _
      // Predicated region
      $region21: #{tpu_custom_call.1} parent=11 // pred_check
        %p121 = pneg %p117
      $region22: #{tpu_custom_call.1} parent=11 // pred_check_branch
        %123 = sbr.rel (%p121) target = $region24
      $region23: #{tpu_custom_call.1} parent=11 // pred_region
        %s124 = sshllo.u32 0, 1
        loop: start=0, step=1, limit=1
        $region25: #{tpu_custom_call.1} parent=23 // loop_pre_header
          _
        $region26: #{tpu_custom_call.1} parent=23 // loop_header
          %s126 = sphi 0, %s130
          %p127 = scmp.ge.s32.totalorder %s126, 1
          %s131 = sphi %s115, %s115
          %s132 = sphi [#allocation2], [#allocation2]
        $region27: #{tpu_custom_call.1} parent=23 // loop_header_branch
          %129 = sbr.rel (%p127) target = $region31
        $region28: #{tpu_custom_call.1} parent=23 // loop_body
          %v133 = vld [vmem:[%s131] sm:%s124]
          %134 = vst [vmem:[%s132] sm:%s124] %v133
        $region29: #{tpu_custom_call.1} parent=23 // loop_footer
          %s130 = sadd.s32 1, %s126
        $region30: #{tpu_custom_call.1} parent=23 // loop_footer_branch
          %125 = sbr.rel target = $region26
        $region31: #{tpu_custom_call.1} parent=23 // loop_exit
          _
      $region24: #{tpu_custom_call.1} parent=11 // pred_fallthru
        _
      // Predicated region
      $region43: #{tpu_custom_call.1} parent=11 // pred_check
        _
      $region44: #{tpu_custom_call.1} parent=11 // pred_check_branch
        %158 = sbr.rel (0) target = $region46
      $region45: #{tpu_custom_call.1} parent=11 // pred_region
        %159 = vsyncadd [#allocation5], 16
      $region46: #{tpu_custom_call.1} parent=11 // pred_fallthru
        _
      %s160 = scalar_lea.vmem %s4, %s113
      %s161 = scalar_lea.sflag [#allocation5], 8
      %p163 = scmp.lt.u32.totalorder 1, 8
      %p164 = pneg %p163
      // Predicated region
      $region47: #{tpu_custom_call.1} parent=11 // pred_check
        _
      $region48: #{tpu_custom_call.1} parent=11 // pred_check_branch
        %166 = sbr.rel (%p163) target = $region50
      $region49: #{tpu_custom_call.1} parent=11 // pred_region
        %s181 = sand.u32 1, 7
        %p182 = scmp.eq.s32.totalorder %s181, 0
        %p183 = pneg %p182
        // Predicated region
        $region62: #{tpu_custom_call.1} parent=49 // pred_check
          _
        $region63: #{tpu_custom_call.1} parent=49 // pred_check_branch
          %185 = sbr.rel (%p182) target = $region65
        $region64: #{tpu_custom_call.1} parent=49 // pred_region
          %s186 = sand.u32 1, 7
          %s187 = ssub.s32 1, %s186
          %s188 = scalar_lea.vmem %s160, %s187
          %s189 = ssub.s32 1, %s186
          %s190 = scalar_lea.vmem [#allocation3], %s189
          %s191 = sshllo.u32 0, %s186
          loop: start=0, step=1, limit=1
          $region66: #{tpu_custom_call.1} parent=64 // loop_pre_header
            _
          $region67: #{tpu_custom_call.1} parent=64 // loop_header
            %s193 = sphi 0, %s197
            %p194 = scmp.ge.s32.totalorder %s193, 1
            %s198 = sphi %s188, %s188
            %s199 = sphi %s190, %s190
          $region68: #{tpu_custom_call.1} parent=64 // loop_header_branch
            %196 = sbr.rel (%p194) target = $region72
          $region69: #{tpu_custom_call.1} parent=64 // loop_body
            %v200 = vld [vmem:[%s198] sm:%s191]
            %201 = vst [vmem:[%s199] sm:%s191] %v200
          $region70: #{tpu_custom_call.1} parent=64 // loop_footer
            %s197 = sadd.s32 1, %s193
          $region71: #{tpu_custom_call.1} parent=64 // loop_footer_branch
            %192 = sbr.rel target = $region67
          $region72: #{tpu_custom_call.1} parent=64 // loop_exit
            _
        $region65: #{tpu_custom_call.1} parent=49 // pred_fallthru
          _
      $region50: #{tpu_custom_call.1} parent=11 // pred_fallthru
        _
      // Predicated region
      $region51: #{tpu_custom_call.1} parent=11 // pred_check
        %p167 = pneg %p163
      $region52: #{tpu_custom_call.1} parent=11 // pred_check_branch
        %169 = sbr.rel (%p167) target = $region54
      $region53: #{tpu_custom_call.1} parent=11 // pred_region
        %s170 = sshllo.u32 0, 1
        loop: start=0, step=1, limit=1
        $region55: #{tpu_custom_call.1} parent=53 // loop_pre_header
          _
        $region56: #{tpu_custom_call.1} parent=53 // loop_header
          %s172 = sphi 0, %s176
          %p173 = scmp.ge.s32.totalorder %s172, 1
          %s177 = sphi %s160, %s160
          %s178 = sphi [#allocation3], [#allocation3]
        $region57: #{tpu_custom_call.1} parent=53 // loop_header_branch
          %175 = sbr.rel (%p173) target = $region61
        $region58: #{tpu_custom_call.1} parent=53 // loop_body
          %v179 = vld [vmem:[%s177] sm:%s170]
          %180 = vst [vmem:[%s178] sm:%s170] %v179
        $region59: #{tpu_custom_call.1} parent=53 // loop_footer
          %s176 = sadd.s32 1, %s172
        $region60: #{tpu_custom_call.1} parent=53 // loop_footer_branch
          %171 = sbr.rel target = $region56
        $region61: #{tpu_custom_call.1} parent=53 // loop_exit
          _
      $region54: #{tpu_custom_call.1} parent=11 // pred_fallthru
        _
      // Predicated region
      $region73: #{tpu_custom_call.1} parent=11 // pred_check
        _
      $region74: #{tpu_custom_call.1} parent=11 // pred_check_branch
        %204 = sbr.rel (0) target = $region76
      $region75: #{tpu_custom_call.1} parent=11 // pred_region
        %205 = vsyncadd %s161, 16
      $region76: #{tpu_custom_call.1} parent=11 // pred_fallthru
        _
      %s206 = scalar_lea.vmem %s4, %s114
      %s207 = scalar_lea.sflag [#allocation5], 16
      %p209 = scmp.lt.u32.totalorder 1, 8
      %p210 = pneg %p209
      // Predicated region
      $region77: #{tpu_custom_call.1} parent=11 // pred_check
        _
      $region78: #{tpu_custom_call.1} parent=11 // pred_check_branch
        %212 = sbr.rel (%p209) target = $region80
      $region79: #{tpu_custom_call.1} parent=11 // pred_region
        %s227 = sand.u32 1, 7
        %p228 = scmp.eq.s32.totalorder %s227, 0
        %p229 = pneg %p228
        // Predicated region
        $region92: #{tpu_custom_call.1} parent=79 // pred_check
          _
        $region93: #{tpu_custom_call.1} parent=79 // pred_check_branch
          %231 = sbr.rel (%p228) target = $region95
        $region94: #{tpu_custom_call.1} parent=79 // pred_region
          %s232 = sand.u32 1, 7
          %s233 = ssub.s32 1, %s232
          %s234 = scalar_lea.vmem %s206, %s233
          %s235 = ssub.s32 1, %s232
          %s236 = scalar_lea.vmem [#allocation4], %s235
          %s237 = sshllo.u32 0, %s232
          loop: start=0, step=1, limit=1
          $region96: #{tpu_custom_call.1} parent=94 // loop_pre_header
            _
          $region97: #{tpu_custom_call.1} parent=94 // loop_header
            %s239 = sphi 0, %s243
            %p240 = scmp.ge.s32.totalorder %s239, 1
            %s244 = sphi %s234, %s234
            %s245 = sphi %s236, %s236
          $region98: #{tpu_custom_call.1} parent=94 // loop_header_branch
            %242 = sbr.rel (%p240) target = $region102
          $region99: #{tpu_custom_call.1} parent=94 // loop_body
            %v246 = vld [vmem:[%s244] sm:%s237]
            %247 = vst [vmem:[%s245] sm:%s237] %v246
          $region100: #{tpu_custom_call.1} parent=94 // loop_footer
            %s243 = sadd.s32 1, %s239
          $region101: #{tpu_custom_call.1} parent=94 // loop_footer_branch
            %238 = sbr.rel target = $region97
          $region102: #{tpu_custom_call.1} parent=94 // loop_exit
            _
        $region95: #{tpu_custom_call.1} parent=79 // pred_fallthru
          _
      $region80: #{tpu_custom_call.1} parent=11 // pred_fallthru
        _
      // Predicated region
      $region81: #{tpu_custom_call.1} parent=11 // pred_check
        %p213 = pneg %p209
      $region82: #{tpu_custom_call.1} parent=11 // pred_check_branch
        %215 = sbr.rel (%p213) target = $region84
      $region83: #{tpu_custom_call.1} parent=11 // pred_region
        %s216 = sshllo.u32 0, 1
        loop: start=0, step=1, limit=1
        $region85: #{tpu_custom_call.1} parent=83 // loop_pre_header
          _
        $region86: #{tpu_custom_call.1} parent=83 // loop_header
          %s218 = sphi 0, %s222
          %p219 = scmp.ge.s32.totalorder %s218, 1
          %s223 = sphi %s206, %s206
          %s224 = sphi [#allocation4], [#allocation4]
        $region87: #{tpu_custom_call.1} parent=83 // loop_header_branch
          %221 = sbr.rel (%p219) target = $region91
        $region88: #{tpu_custom_call.1} parent=83 // loop_body
          %v225 = vld [vmem:[%s223] sm:%s216]
          %226 = vst [vmem:[%s224] sm:%s216] %v225
        $region89: #{tpu_custom_call.1} parent=83 // loop_footer
          %s222 = sadd.s32 1, %s218
        $region90: #{tpu_custom_call.1} parent=83 // loop_footer_branch
          %217 = sbr.rel target = $region86
        $region91: #{tpu_custom_call.1} parent=83 // loop_exit
          _
      $region84: #{tpu_custom_call.1} parent=11 // pred_fallthru
        _
      // Predicated region
      $region103: #{tpu_custom_call.1} parent=11 // pred_check
        _
      $region104: #{tpu_custom_call.1} parent=11 // pred_check_branch
        %250 = sbr.rel (0) target = $region106
      $region105: #{tpu_custom_call.1} parent=11 // pred_region
        %251 = vsyncadd %s207, 16
      $region106: #{tpu_custom_call.1} parent=11 // pred_fallthru
        _
      %s252 = sadd.s32 %s104, 1
      %s253 = sld [smem:[#allocation7 + %s252]]
      %s254 = sld [smem:[#allocation8 + %s252]]
      %s255 = sld [smem:[#allocation9 + %s252]]
      %s256 = scalar_lea.vmem %s3, %s253
      %s257 = scalar_lea.vmem [#allocation2], 1
      %s258 = scalar_lea.sflag [#allocation5], 1
      %p260 = scmp.lt.u32.totalorder 1, 8
      %p261 = pneg %p260
      // Predicated region
      $region107: #{tpu_custom_call.1} parent=11 // pred_check
        _
      $region108: #{tpu_custom_call.1} parent=11 // pred_check_branch
        %263 = sbr.rel (%p260) target = $region110
      $region109: #{tpu_custom_call.1} parent=11 // pred_region
        %s278 = sand.u32 1, 7
        %p279 = scmp.eq.s32.totalorder %s278, 0
        %p280 = pneg %p279
        // Predicated region
        $region122: #{tpu_custom_call.1} parent=109 // pred_check
          _
        $region123: #{tpu_custom_call.1} parent=109 // pred_check_branch
          %282 = sbr.rel (%p279) target = $region125
        $region124: #{tpu_custom_call.1} parent=109 // pred_region
          %s283 = sand.u32 1, 7
          %s284 = ssub.s32 1, %s283
          %s285 = scalar_lea.vmem %s256, %s284
          %s286 = ssub.s32 1, %s283
          %s287 = scalar_lea.vmem %s257, %s286 [#allocation2]
          %s288 = sshllo.u32 0, %s283
          loop: start=0, step=1, limit=1
          $region126: #{tpu_custom_call.1} parent=124 // loop_pre_header
            _
          $region127: #{tpu_custom_call.1} parent=124 // loop_header
            %s290 = sphi 0, %s294
            %p291 = scmp.ge.s32.totalorder %s290, 1
            %s295 = sphi %s285, %s285
            %s296 = sphi %s287, %s287
          $region128: #{tpu_custom_call.1} parent=124 // loop_header_branch
            %293 = sbr.rel (%p291) target = $region132
          $region129: #{tpu_custom_call.1} parent=124 // loop_body
            %v297 = vld [vmem:[%s295] sm:%s288]
            %298 = vst [vmem:[%s296] sm:%s288] %v297
          $region130: #{tpu_custom_call.1} parent=124 // loop_footer
            %s294 = sadd.s32 1, %s290
          $region131: #{tpu_custom_call.1} parent=124 // loop_footer_branch
            %289 = sbr.rel target = $region127
          $region132: #{tpu_custom_call.1} parent=124 // loop_exit
            _
        $region125: #{tpu_custom_call.1} parent=109 // pred_fallthru
          _
      $region110: #{tpu_custom_call.1} parent=11 // pred_fallthru
        _
      // Predicated region
      $region111: #{tpu_custom_call.1} parent=11 // pred_check
        %p264 = pneg %p260
      $region112: #{tpu_custom_call.1} parent=11 // pred_check_branch
        %266 = sbr.rel (%p264) target = $region114
      $region113: #{tpu_custom_call.1} parent=11 // pred_region
        %s267 = sshllo.u32 0, 1
        loop: start=0, step=1, limit=1
        $region115: #{tpu_custom_call.1} parent=113 // loop_pre_header
          _
        $region116: #{tpu_custom_call.1} parent=113 // loop_header
          %s269 = sphi 0, %s273
          %p270 = scmp.ge.s32.totalorder %s269, 1
          %s274 = sphi %s256, %s256
          %s275 = sphi %s257, %s257
        $region117: #{tpu_custom_call.1} parent=113 // loop_header_branch
          %272 = sbr.rel (%p270) target = $region121
        $region118: #{tpu_custom_call.1} parent=113 // loop_body
          %v276 = vld [vmem:[%s274] sm:%s267]
          %277 = vst [vmem:[%s275] sm:%s267] %v276
        $region119: #{tpu_custom_call.1} parent=113 // loop_footer
          %s273 = sadd.s32 1, %s269
        $region120: #{tpu_custom_call.1} parent=113 // loop_footer_branch
          %268 = sbr.rel target = $region116
        $region121: #{tpu_custom_call.1} parent=113 // loop_exit
          _
      $region114: #{tpu_custom_call.1} parent=11 // pred_fallthru
        _
      // Predicated region
      $region133: #{tpu_custom_call.1} parent=11 // pred_check
        _
      $region134: #{tpu_custom_call.1} parent=11 // pred_check_branch
        %301 = sbr.rel (0) target = $region136
      $region135: #{tpu_custom_call.1} parent=11 // pred_region
        %302 = vsyncadd %s258, 16
      $region136: #{tpu_custom_call.1} parent=11 // pred_fallthru
        _
      %s303 = scalar_lea.vmem %s4, %s254
      %s304 = scalar_lea.vmem [#allocation3], 1
      %s305 = scalar_lea.sflag [#allocation5], 9
      %p307 = scmp.lt.u32.totalorder 1, 8
      %p308 = pneg %p307
      // Predicated region
      $region137: #{tpu_custom_call.1} parent=11 // pred_check
        _
      $region138: #{tpu_custom_call.1} parent=11 // pred_check_branch
        %310 = sbr.rel (%p307) target = $region140
      $region139: #{tpu_custom_call.1} parent=11 // pred_region
        %s325 = sand.u32 1, 7
        %p326 = scmp.eq.s32.totalorder %s325, 0
        %p327 = pneg %p326
        // Predicated region
        $region152: #{tpu_custom_call.1} parent=139 // pred_check
          _
        $region153: #{tpu_custom_call.1} parent=139 // pred_check_branch
          %329 = sbr.rel (%p326) target = $region155
        $region154: #{tpu_custom_call.1} parent=139 // pred_region
          %s330 = sand.u32 1, 7
          %s331 = ssub.s32 1, %s330
          %s332 = scalar_lea.vmem %s303, %s331
          %s333 = ssub.s32 1, %s330
          %s334 = scalar_lea.vmem %s304, %s333 [#allocation3]
          %s335 = sshllo.u32 0, %s330
          loop: start=0, step=1, limit=1
          $region156: #{tpu_custom_call.1} parent=154 // loop_pre_header
            _
          $region157: #{tpu_custom_call.1} parent=154 // loop_header
            %s337 = sphi 0, %s341
            %p338 = scmp.ge.s32.totalorder %s337, 1
            %s342 = sphi %s332, %s332
            %s343 = sphi %s334, %s334
          $region158: #{tpu_custom_call.1} parent=154 // loop_header_branch
            %340 = sbr.rel (%p338) target = $region162
          $region159: #{tpu_custom_call.1} parent=154 // loop_body
            %v344 = vld [vmem:[%s342] sm:%s335]
            %345 = vst [vmem:[%s343] sm:%s335] %v344
          $region160: #{tpu_custom_call.1} parent=154 // loop_footer
            %s341 = sadd.s32 1, %s337
          $region161: #{tpu_custom_call.1} parent=154 // loop_footer_branch
            %336 = sbr.rel target = $region157
          $region162: #{tpu_custom_call.1} parent=154 // loop_exit
            _
        $region155: #{tpu_custom_call.1} parent=139 // pred_fallthru
          _
      $region140: #{tpu_custom_call.1} parent=11 // pred_fallthru
        _
      // Predicated region
      $region141: #{tpu_custom_call.1} parent=11 // pred_check
        %p311 = pneg %p307
      $region142: #{tpu_custom_call.1} parent=11 // pred_check_branch
        %313 = sbr.rel (%p311) target = $region144
      $region143: #{tpu_custom_call.1} parent=11 // pred_region
        %s314 = sshllo.u32 0, 1
        loop: start=0, step=1, limit=1
        $region145: #{tpu_custom_call.1} parent=143 // loop_pre_header
          _
        $region146: #{tpu_custom_call.1} parent=143 // loop_header
          %s316 = sphi 0, %s320
          %p317 = scmp.ge.s32.totalorder %s316, 1
          %s321 = sphi %s303, %s303
          %s322 = sphi %s304, %s304
        $region147: #{tpu_custom_call.1} parent=143 // loop_header_branch
          %319 = sbr.rel (%p317) target = $region151
        $region148: #{tpu_custom_call.1} parent=143 // loop_body
          %v323 = vld [vmem:[%s321] sm:%s314]
          %324 = vst [vmem:[%s322] sm:%s314] %v323
        $region149: #{tpu_custom_call.1} parent=143 // loop_footer
          %s320 = sadd.s32 1, %s316
        $region150: #{tpu_custom_call.1} parent=143 // loop_footer_branch
          %315 = sbr.rel target = $region146
        $region151: #{tpu_custom_call.1} parent=143 // loop_exit
          _
      $region144: #{tpu_custom_call.1} parent=11 // pred_fallthru
        _
      // Predicated region
      $region163: #{tpu_custom_call.1} parent=11 // pred_check
        _
      $region164: #{tpu_custom_call.1} parent=11 // pred_check_branch
        %348 = sbr.rel (0) target = $region166
      $region165: #{tpu_custom_call.1} parent=11 // pred_region
        %349 = vsyncadd %s305, 16
      $region166: #{tpu_custom_call.1} parent=11 // pred_fallthru
        _
      %s350 = scalar_lea.vmem %s4, %s255
      %s351 = scalar_lea.vmem [#allocation4], 1
      %s352 = scalar_lea.sflag [#allocation5], 17
      %p354 = scmp.lt.u32.totalorder 1, 8
      %p355 = pneg %p354
      // Predicated region
      $region167: #{tpu_custom_call.1} parent=11 // pred_check
        _
      $region168: #{tpu_custom_call.1} parent=11 // pred_check_branch
        %357 = sbr.rel (%p354) target = $region170
      $region169: #{tpu_custom_call.1} parent=11 // pred_region
        %s372 = sand.u32 1, 7
        %p373 = scmp.eq.s32.totalorder %s372, 0
        %p374 = pneg %p373
        // Predicated region
        $region182: #{tpu_custom_call.1} parent=169 // pred_check
          _
        $region183: #{tpu_custom_call.1} parent=169 // pred_check_branch
          %376 = sbr.rel (%p373) target = $region185
        $region184: #{tpu_custom_call.1} parent=169 // pred_region
          %s377 = sand.u32 1, 7
          %s378 = ssub.s32 1, %s377
          %s379 = scalar_lea.vmem %s350, %s378
          %s380 = ssub.s32 1, %s377
          %s381 = scalar_lea.vmem %s351, %s380 [#allocation4]
          %s382 = sshllo.u32 0, %s377
          loop: start=0, step=1, limit=1
          $region186: #{tpu_custom_call.1} parent=184 // loop_pre_header
            _
          $region187: #{tpu_custom_call.1} parent=184 // loop_header
            %s384 = sphi 0, %s388
            %p385 = scmp.ge.s32.totalorder %s384, 1
            %s389 = sphi %s379, %s379
            %s390 = sphi %s381, %s381
          $region188: #{tpu_custom_call.1} parent=184 // loop_header_branch
            %387 = sbr.rel (%p385) target = $region192
          $region189: #{tpu_custom_call.1} parent=184 // loop_body
            %v391 = vld [vmem:[%s389] sm:%s382]
            %392 = vst [vmem:[%s390] sm:%s382] %v391
          $region190: #{tpu_custom_call.1} parent=184 // loop_footer
            %s388 = sadd.s32 1, %s384
          $region191: #{tpu_custom_call.1} parent=184 // loop_footer_branch
            %383 = sbr.rel target = $region187
          $region192: #{tpu_custom_call.1} parent=184 // loop_exit
            _
        $region185: #{tpu_custom_call.1} parent=169 // pred_fallthru
          _
      $region170: #{tpu_custom_call.1} parent=11 // pred_fallthru
        _
      // Predicated region
      $region171: #{tpu_custom_call.1} parent=11 // pred_check
        %p358 = pneg %p354
      $region172: #{tpu_custom_call.1} parent=11 // pred_check_branch
        %360 = sbr.rel (%p358) target = $region174
      $region173: #{tpu_custom_call.1} parent=11 // pred_region
        %s361 = sshllo.u32 0, 1
        loop: start=0, step=1, limit=1
        $region175: #{tpu_custom_call.1} parent=173 // loop_pre_header
          _
        $region176: #{tpu_custom_call.1} parent=173 // loop_header
          %s363 = sphi 0, %s367
          %p364 = scmp.ge.s32.totalorder %s363, 1
          %s368 = sphi %s350, %s350
          %s369 = sphi %s351, %s351
        $region177: #{tpu_custom_call.1} parent=173 // loop_header_branch
          %366 = sbr.rel (%p364) target = $region181
        $region178: #{tpu_custom_call.1} parent=173 // loop_body
          %v370 = vld [vmem:[%s368] sm:%s361]
          %371 = vst [vmem:[%s369] sm:%s361] %v370
        $region179: #{tpu_custom_call.1} parent=173 // loop_footer
          %s367 = sadd.s32 1, %s363
        $region180: #{tpu_custom_call.1} parent=173 // loop_footer_branch
          %362 = sbr.rel target = $region176
        $region181: #{tpu_custom_call.1} parent=173 // loop_exit
          _
      $region174: #{tpu_custom_call.1} parent=11 // pred_fallthru
        _
      // Predicated region
      $region193: #{tpu_custom_call.1} parent=11 // pred_check
        _
      $region194: #{tpu_custom_call.1} parent=11 // pred_check_branch
        %395 = sbr.rel (0) target = $region196
      $region195: #{tpu_custom_call.1} parent=11 // pred_region
        %396 = vsyncadd %s352, 16
      $region196: #{tpu_custom_call.1} parent=11 // pred_fallthru
        _
      %s397 = sadd.s32 %s104, 2
      %s398 = sld [smem:[#allocation7 + %s397]]
      %s399 = sld [smem:[#allocation8 + %s397]]
      %s400 = sld [smem:[#allocation9 + %s397]]
      %s401 = scalar_lea.vmem %s3, %s398
      %s402 = scalar_lea.vmem [#allocation2], 2
      %s403 = scalar_lea.sflag [#allocation5], 2
      %p405 = scmp.lt.u32.totalorder 1, 8
      %p406 = pneg %p405
      // Predicated region
      $region197: #{tpu_custom_call.1} parent=11 // pred_check
        _
      $region198: #{tpu_custom_call.1} parent=11 // pred_check_branch
        %408 = sbr.rel (%p405) target = $region200
      $region199: #{tpu_custom_call.1} parent=11 // pred_region
        %s423 = sand.u32 1, 7
        %p424 = scmp.eq.s32.totalorder %s423, 0
        %p425 = pneg %p424
        // Predicated region
        $region212: #{tpu_custom_call.1} parent=199 // pred_check
          _
        $region213: #{tpu_custom_call.1} parent=199 // pred_check_branch
          %427 = sbr.rel (%p424) target = $region215
        $region214: #{tpu_custom_call.1} parent=199 // pred_region
          %s428 = sand.u32 1, 7
          %s429 = ssub.s32 1, %s428
          %s430 = scalar_lea.vmem %s401, %s429
          %s431 = ssub.s32 1, %s428
          %s432 = scalar_lea.vmem %s402, %s431 [#allocation2]
          %s433 = sshllo.u32 0, %s428
          loop: start=0, step=1, limit=1
          $region216: #{tpu_custom_call.1} parent=214 // loop_pre_header
            _
          $region217: #{tpu_custom_call.1} parent=214 // loop_header
            %s435 = sphi 0, %s439
            %p436 = scmp.ge.s32.totalorder %s435, 1
            %s440 = sphi %s430, %s430
            %s441 = sphi %s432, %s432
          $region218: #{tpu_custom_call.1} parent=214 // loop_header_branch
            %438 = sbr.rel (%p436) target = $region222
          $region219: #{tpu_custom_call.1} parent=214 // loop_body
            %v442 = vld [vmem:[%s440] sm:%s433]
            %443 = vst [vmem:[%s441] sm:%s433] %v442
          $region220: #{tpu_custom_call.1} parent=214 // loop_footer
            %s439 = sadd.s32 1, %s435
          $region221: #{tpu_custom_call.1} parent=214 // loop_footer_branch
            %434 = sbr.rel target = $region217
          $region222: #{tpu_custom_call.1} parent=214 // loop_exit
            _
        $region215: #{tpu_custom_call.1} parent=199 // pred_fallthru
          _
      $region200: #{tpu_custom_call.1} parent=11 // pred_fallthru
        _
      // Predicated region
      $region201: #{tpu_custom_call.1} parent=11 // pred_check
        %p409 = pneg %p405
      $region202: #{tpu_custom_call.1} parent=11 // pred_check_branch
        %411 = sbr.rel (%p409) target = $region204
      $region203: #{tpu_custom_call.1} parent=11 // pred_region
        %s412 = sshllo.u32 0, 1
        loop: start=0, step=1, limit=1
        $region205: #{tpu_custom_call.1} parent=203 // loop_pre_header
          _
        $region206: #{tpu_custom_call.1} parent=203 // loop_header
          %s414 = sphi 0, %s418
          %p415 = scmp.ge.s32.totalorder %s414, 1
          %s419 = sphi %s401, %s401
          %s420 = sphi %s402, %s402
        $region207: #{tpu_custom_call.1} parent=203 // loop_header_branch
          %417 = sbr.rel (%p415) target = $region211
        $region208: #{tpu_custom_call.1} parent=203 // loop_body
          %v421 = vld [vmem:[%s419] sm:%s412]
          %422 = vst [vmem:[%s420] sm:%s412] %v421
        $region209: #{tpu_custom_call.1} parent=203 // loop_footer
          %s418 = sadd.s32 1, %s414
        $region210: #{tpu_custom_call.1} parent=203 // loop_footer_branch
          %413 = sbr.rel target = $region206
        $region211: #{tpu_custom_call.1} parent=203 // loop_exit
          _
      $region204: #{tpu_custom_call.1} parent=11 // pred_fallthru
        _
      // Predicated region
      $region223: #{tpu_custom_call.1} parent=11 // pred_check
        _
      $region224: #{tpu_custom_call.1} parent=11 // pred_check_branch
        %446 = sbr.rel (0) target = $region226
      $region225: #{tpu_custom_call.1} parent=11 // pred_region
        %447 = vsyncadd %s403, 16
      $region226: #{tpu_custom_call.1} parent=11 // pred_fallthru
        _
      %s448 = scalar_lea.vmem %s4, %s399
      %s449 = scalar_lea.vmem [#allocation3], 2
      %s450 = scalar_lea.sflag [#allocation5], 10
      %p452 = scmp.lt.u32.totalorder 1, 8
      %p453 = pneg %p452
      // Predicated region
      $region227: #{tpu_custom_call.1} parent=11 // pred_check
        _
      $region228: #{tpu_custom_call.1} parent=11 // pred_check_branch
        %455 = sbr.rel (%p452) target = $region230
      $region229: #{tpu_custom_call.1} parent=11 // pred_region
        %s470 = sand.u32 1, 7
        %p471 = scmp.eq.s32.totalorder %s470, 0
        %p472 = pneg %p471
        // Predicated region
        $region242: #{tpu_custom_call.1} parent=229 // pred_check
          _
        $region243: #{tpu_custom_call.1} parent=229 // pred_check_branch
          %474 = sbr.rel (%p471) target = $region245
        $region244: #{tpu_custom_call.1} parent=229 // pred_region
          %s475 = sand.u32 1, 7
          %s476 = ssub.s32 1, %s475
          %s477 = scalar_lea.vmem %s448, %s476
          %s478 = ssub.s32 1, %s475
          %s479 = scalar_lea.vmem %s449, %s478 [#allocation3]
          %s480 = sshllo.u32 0, %s475
          loop: start=0, step=1, limit=1
          $region246: #{tpu_custom_call.1} parent=244 // loop_pre_header
            _
          $region247: #{tpu_custom_call.1} parent=244 // loop_header
            %s482 = sphi 0, %s486
            %p483 = scmp.ge.s32.totalorder %s482, 1
            %s487 = sphi %s477, %s477
            %s488 = sphi %s479, %s479
          $region248: #{tpu_custom_call.1} parent=244 // loop_header_branch
            %485 = sbr.rel (%p483) target = $region252
          $region249: #{tpu_custom_call.1} parent=244 // loop_body
            %v489 = vld [vmem:[%s487] sm:%s480]
            %490 = vst [vmem:[%s488] sm:%s480] %v489
          $region250: #{tpu_custom_call.1} parent=244 // loop_footer
            %s486 = sadd.s32 1, %s482
          $region251: #{tpu_custom_call.1} parent=244 // loop_footer_branch
            %481 = sbr.rel target = $region247
          $region252: #{tpu_custom_call.1} parent=244 // loop_exit
            _
        $region245: #{tpu_custom_call.1} parent=229 // pred_fallthru
          _
      $region230: #{tpu_custom_call.1} parent=11 // pred_fallthru
        _
      // Predicated region
      $region231: #{tpu_custom_call.1} parent=11 // pred_check
        %p456 = pneg %p452
      $region232: #{tpu_custom_call.1} parent=11 // pred_check_branch
        %458 = sbr.rel (%p456) target = $region234
      $region233: #{tpu_custom_call.1} parent=11 // pred_region
        %s459 = sshllo.u32 0, 1
        loop: start=0, step=1, limit=1
        $region235: #{tpu_custom_call.1} parent=233 // loop_pre_header
          _
        $region236: #{tpu_custom_call.1} parent=233 // loop_header
          %s461 = sphi 0, %s465
          %p462 = scmp.ge.s32.totalorder %s461, 1
          %s466 = sphi %s448, %s448
          %s467 = sphi %s449, %s449
        $region237: #{tpu_custom_call.1} parent=233 // loop_header_branch
          %464 = sbr.rel (%p462) target = $region241
        $region238: #{tpu_custom_call.1} parent=233 // loop_body
          %v468 = vld [vmem:[%s466] sm:%s459]
          %469 = vst [vmem:[%s467] sm:%s459] %v468
        $region239: #{tpu_custom_call.1} parent=233 // loop_footer
          %s465 = sadd.s32 1, %s461
        $region240: #{tpu_custom_call.1} parent=233 // loop_footer_branch
          %460 = sbr.rel target = $region236
        $region241: #{tpu_custom_call.1} parent=233 // loop_exit
          _
      $region234: #{tpu_custom_call.1} parent=11 // pred_fallthru
        _
      // Predicated region
      $region253: #{tpu_custom_call.1} parent=11 // pred_check
        _
      $region254: #{tpu_custom_call.1} parent=11 // pred_check_branch
        %493 = sbr.rel (0) target = $region256
      $region255: #{tpu_custom_call.1} parent=11 // pred_region
        %494 = vsyncadd %s450, 16
      $region256: #{tpu_custom_call.1} parent=11 // pred_fallthru
        _
      %s495 = scalar_lea.vmem %s4, %s400
      %s496 = scalar_lea.vmem [#allocation4], 2
      %s497 = scalar_lea.sflag [#allocation5], 18
      %p499 = scmp.lt.u32.totalorder 1, 8
      %p500 = pneg %p499
      // Predicated region
      $region257: #{tpu_custom_call.1} parent=11 // pred_check
        _
      $region258: #{tpu_custom_call.1} parent=11 // pred_check_branch
        %502 = sbr.rel (%p499) target = $region260
      $region259: #{tpu_custom_call.1} parent=11 // pred_region
        %s517 = sand.u32 1, 7
        %p518 = scmp.eq.s32.totalorder %s517, 0
        %p519 = pneg %p518
        // Predicated region
        $region272: #{tpu_custom_call.1} parent=259 // pred_check
          _
        $region273: #{tpu_custom_call.1} parent=259 // pred_check_branch
          %521 = sbr.rel (%p518) target = $region275
        $region274: #{tpu_custom_call.1} parent=259 // pred_region
          %s522 = sand.u32 1, 7
          %s523 = ssub.s32 1, %s522
          %s524 = scalar_lea.vmem %s495, %s523
          %s525 = ssub.s32 1, %s522
          %s526 = scalar_lea.vmem %s496, %s525 [#allocation4]
          %s527 = sshllo.u32 0, %s522
          loop: start=0, step=1, limit=1
          $region276: #{tpu_custom_call.1} parent=274 // loop_pre_header
            _
          $region277: #{tpu_custom_call.1} parent=274 // loop_header
            %s529 = sphi 0, %s533
            %p530 = scmp.ge.s32.totalorder %s529, 1
            %s534 = sphi %s524, %s524
            %s535 = sphi %s526, %s526
          $region278: #{tpu_custom_call.1} parent=274 // loop_header_branch
            %532 = sbr.rel (%p530) target = $region282
          $region279: #{tpu_custom_call.1} parent=274 // loop_body
            %v536 = vld [vmem:[%s534] sm:%s527]
            %537 = vst [vmem:[%s535] sm:%s527] %v536
          $region280: #{tpu_custom_call.1} parent=274 // loop_footer
            %s533 = sadd.s32 1, %s529
          $region281: #{tpu_custom_call.1} parent=274 // loop_footer_branch
            %528 = sbr.rel target = $region277
          $region282: #{tpu_custom_call.1} parent=274 // loop_exit
            _
        $region275: #{tpu_custom_call.1} parent=259 // pred_fallthru
          _
      $region260: #{tpu_custom_call.1} parent=11 // pred_fallthru
        _
      // Predicated region
      $region261: #{tpu_custom_call.1} parent=11 // pred_check
        %p503 = pneg %p499
      $region262: #{tpu_custom_call.1} parent=11 // pred_check_branch
        %505 = sbr.rel (%p503) target = $region264
      $region263: #{tpu_custom_call.1} parent=11 // pred_region
        %s506 = sshllo.u32 0, 1
        loop: start=0, step=1, limit=1
        $region265: #{tpu_custom_call.1} parent=263 // loop_pre_header
          _
        $region266: #{tpu_custom_call.1} parent=263 // loop_header
          %s508 = sphi 0, %s512
          %p509 = scmp.ge.s32.totalorder %s508, 1
          %s513 = sphi %s495, %s495
          %s514 = sphi %s496, %s496
        $region267: #{tpu_custom_call.1} parent=263 // loop_header_branch
          %511 = sbr.rel (%p509) target = $region271
        $region268: #{tpu_custom_call.1} parent=263 // loop_body
          %v515 = vld [vmem:[%s513] sm:%s506]
          %516 = vst [vmem:[%s514] sm:%s506] %v515
        $region269: #{tpu_custom_call.1} parent=263 // loop_footer
          %s512 = sadd.s32 1, %s508
        $region270: #{tpu_custom_call.1} parent=263 // loop_footer_branch
          %507 = sbr.rel target = $region266
        $region271: #{tpu_custom_call.1} parent=263 // loop_exit
          _
      $region264: #{tpu_custom_call.1} parent=11 // pred_fallthru
        _
      // Predicated region
      $region283: #{tpu_custom_call.1} parent=11 // pred_check
        _
      $region284: #{tpu_custom_call.1} parent=11 // pred_check_branch
        %540 = sbr.rel (0) target = $region286
      $region285: #{tpu_custom_call.1} parent=11 // pred_region
        %541 = vsyncadd %s497, 16
      $region286: #{tpu_custom_call.1} parent=11 // pred_fallthru
        _
      %s542 = sadd.s32 %s104, 3
      %s543 = sld [smem:[#allocation7 + %s542]]
      %s544 = sld [smem:[#allocation8 + %s542]]
      %s545 = sld [smem:[#allocation9 + %s542]]
      %s546 = scalar_lea.vmem %s3, %s543
      %s547 = scalar_lea.vmem [#allocation2], 3
      %s548 = scalar_lea.sflag [#allocation5], 3
      %p550 = scmp.lt.u32.totalorder 1, 8
      %p551 = pneg %p550
      // Predicated region
      $region287: #{tpu_custom_call.1} parent=11 // pred_check
        _
      $region288: #{tpu_custom_call.1} parent=11 // pred_check_branch
        %553 = sbr.rel (%p550) target = $region290
      $region289: #{tpu_custom_call.1} parent=11 // pred_region
        %s568 = sand.u32 1, 7
        %p569 = scmp.eq.s32.totalorder %s568, 0
        %p570 = pneg %p569
        // Predicated region
        $region302: #{tpu_custom_call.1} parent=289 // pred_check
          _
        $region303: #{tpu_custom_call.1} parent=289 // pred_check_branch
          %572 = sbr.rel (%p569) target = $region305
        $region304: #{tpu_custom_call.1} parent=289 // pred_region
          %s573 = sand.u32 1, 7
          %s574 = ssub.s32 1, %s573
          %s575 = scalar_lea.vmem %s546, %s574
          %s576 = ssub.s32 1, %s573
          %s577 = scalar_lea.vmem %s547, %s576 [#allocation2]
          %s578 = sshllo.u32 0, %s573
          loop: start=0, step=1, limit=1
          $region306: #{tpu_custom_call.1} parent=304 // loop_pre_header
            _
          $region307: #{tpu_custom_call.1} parent=304 // loop_header
            %s580 = sphi 0, %s584
            %p581 = scmp.ge.s32.totalorder %s580, 1
            %s585 = sphi %s575, %s575
            %s586 = sphi %s577, %s577
          $region308: #{tpu_custom_call.1} parent=304 // loop_header_branch
            %583 = sbr.rel (%p581) target = $region312
          $region309: #{tpu_custom_call.1} parent=304 // loop_body
            %v587 = vld [vmem:[%s585] sm:%s578]
            %588 = vst [vmem:[%s586] sm:%s578] %v587
          $region310: #{tpu_custom_call.1} parent=304 // loop_footer
            %s584 = sadd.s32 1, %s580
          $region311: #{tpu_custom_call.1} parent=304 // loop_footer_branch
            %579 = sbr.rel target = $region307
          $region312: #{tpu_custom_call.1} parent=304 // loop_exit
            _
        $region305: #{tpu_custom_call.1} parent=289 // pred_fallthru
          _
      $region290: #{tpu_custom_call.1} parent=11 // pred_fallthru
        _
      // Predicated region
      $region291: #{tpu_custom_call.1} parent=11 // pred_check
        %p554 = pneg %p550
      $region292: #{tpu_custom_call.1} parent=11 // pred_check_branch
        %556 = sbr.rel (%p554) target = $region294
      $region293: #{tpu_custom_call.1} parent=11 // pred_region
        %s557 = sshllo.u32 0, 1
        loop: start=0, step=1, limit=1
        $region295: #{tpu_custom_call.1} parent=293 // loop_pre_header
          _
        $region296: #{tpu_custom_call.1} parent=293 // loop_header
          %s559 = sphi 0, %s563
          %p560 = scmp.ge.s32.totalorder %s559, 1
          %s564 = sphi %s546, %s546
          %s565 = sphi %s547, %s547
        $region297: #{tpu_custom_call.1} parent=293 // loop_header_branch
          %562 = sbr.rel (%p560) target = $region301
        $region298: #{tpu_custom_call.1} parent=293 // loop_body
          %v566 = vld [vmem:[%s564] sm:%s557]
          %567 = vst [vmem:[%s565] sm:%s557] %v566
        $region299: #{tpu_custom_call.1} parent=293 // loop_footer
          %s563 = sadd.s32 1, %s559
        $region300: #{tpu_custom_call.1} parent=293 // loop_footer_branch
          %558 = sbr.rel target = $region296
        $region301: #{tpu_custom_call.1} parent=293 // loop_exit
          _
      $region294: #{tpu_custom_call.1} parent=11 // pred_fallthru
        _
      // Predicated region
      $region313: #{tpu_custom_call.1} parent=11 // pred_check
        _
      $region314: #{tpu_custom_call.1} parent=11 // pred_check_branch
        %591 = sbr.rel (0) target = $region316
      $region315: #{tpu_custom_call.1} parent=11 // pred_region
        %592 = vsyncadd %s548, 16
      $region316: #{tpu_custom_call.1} parent=11 // pred_fallthru
        _
      %s593 = scalar_lea.vmem %s4, %s544
      %s594 = scalar_lea.vmem [#allocation3], 3
      %s595 = scalar_lea.sflag [#allocation5], 11
      %p597 = scmp.lt.u32.totalorder 1, 8
      %p598 = pneg %p597
      // Predicated region
      $region317: #{tpu_custom_call.1} parent=11 // pred_check
        _
      $region318: #{tpu_custom_call.1} parent=11 // pred_check_branch
        %600 = sbr.rel (%p597) target = $region320
      $region319: #{tpu_custom_call.1} parent=11 // pred_region
        %s615 = sand.u32 1, 7
        %p616 = scmp.eq.s32.totalorder %s615, 0
        %p617 = pneg %p616
        // Predicated region
        $region332: #{tpu_custom_call.1} parent=319 // pred_check
          _
        $region333: #{tpu_custom_call.1} parent=319 // pred_check_branch
          %619 = sbr.rel (%p616) target = $region335
        $region334: #{tpu_custom_call.1} parent=319 // pred_region
          %s620 = sand.u32 1, 7
          %s621 = ssub.s32 1, %s620
          %s622 = scalar_lea.vmem %s593, %s621
          %s623 = ssub.s32 1, %s620
          %s624 = scalar_lea.vmem %s594, %s623 [#allocation3]
          %s625 = sshllo.u32 0, %s620
          loop: start=0, step=1, limit=1
          $region336: #{tpu_custom_call.1} parent=334 // loop_pre_header
            _
          $region337: #{tpu_custom_call.1} parent=334 // loop_header
            %s627 = sphi 0, %s631
            %p628 = scmp.ge.s32.totalorder %s627, 1
            %s632 = sphi %s622, %s622
            %s633 = sphi %s624, %s624
          $region338: #{tpu_custom_call.1} parent=334 // loop_header_branch
            %630 = sbr.rel (%p628) target = $region342
          $region339: #{tpu_custom_call.1} parent=334 // loop_body
            %v634 = vld [vmem:[%s632] sm:%s625]
            %635 = vst [vmem:[%s633] sm:%s625] %v634
          $region340: #{tpu_custom_call.1} parent=334 // loop_footer
            %s631 = sadd.s32 1, %s627
          $region341: #{tpu_custom_call.1} parent=334 // loop_footer_branch
            %626 = sbr.rel target = $region337
          $region342: #{tpu_custom_call.1} parent=334 // loop_exit
            _
        $region335: #{tpu_custom_call.1} parent=319 // pred_fallthru
          _
      $region320: #{tpu_custom_call.1} parent=11 // pred_fallthru
        _
      // Predicated region
      $region321: #{tpu_custom_call.1} parent=11 // pred_check
        %p601 = pneg %p597
      $region322: #{tpu_custom_call.1} parent=11 // pred_check_branch
        %603 = sbr.rel (%p601) target = $region324
      $region323: #{tpu_custom_call.1} parent=11 // pred_region
        %s604 = sshllo.u32 0, 1
        loop: start=0, step=1, limit=1
        $region325: #{tpu_custom_call.1} parent=323 // loop_pre_header
          _
        $region326: #{tpu_custom_call.1} parent=323 // loop_header
          %s606 = sphi 0, %s610
          %p607 = scmp.ge.s32.totalorder %s606, 1
          %s611 = sphi %s593, %s593
          %s612 = sphi %s594, %s594
        $region327: #{tpu_custom_call.1} parent=323 // loop_header_branch
          %609 = sbr.rel (%p607) target = $region331
        $region328: #{tpu_custom_call.1} parent=323 // loop_body
          %v613 = vld [vmem:[%s611] sm:%s604]
          %614 = vst [vmem:[%s612] sm:%s604] %v613
        $region329: #{tpu_custom_call.1} parent=323 // loop_footer
          %s610 = sadd.s32 1, %s606
        $region330: #{tpu_custom_call.1} parent=323 // loop_footer_branch
          %605 = sbr.rel target = $region326
        $region331: #{tpu_custom_call.1} parent=323 // loop_exit
          _
      $region324: #{tpu_custom_call.1} parent=11 // pred_fallthru
        _
      // Predicated region
      $region343: #{tpu_custom_call.1} parent=11 // pred_check
        _
      $region344: #{tpu_custom_call.1} parent=11 // pred_check_branch
        %638 = sbr.rel (0) target = $region346
      $region345: #{tpu_custom_call.1} parent=11 // pred_region
        %639 = vsyncadd %s595, 16
      $region346: #{tpu_custom_call.1} parent=11 // pred_fallthru
        _
      %s640 = scalar_lea.vmem %s4, %s545
      %s641 = scalar_lea.vmem [#allocation4], 3
      %s642 = scalar_lea.sflag [#allocation5], 19
      %p644 = scmp.lt.u32.totalorder 1, 8
      %p645 = pneg %p644
      // Predicated region
      $region347: #{tpu_custom_call.1} parent=11 // pred_check
        _
      $region348: #{tpu_custom_call.1} parent=11 // pred_check_branch
        %647 = sbr.rel (%p644) target = $region350
      $region349: #{tpu_custom_call.1} parent=11 // pred_region
        %s662 = sand.u32 1, 7
        %p663 = scmp.eq.s32.totalorder %s662, 0
        %p664 = pneg %p663
        // Predicated region
        $region362: #{tpu_custom_call.1} parent=349 // pred_check
          _
        $region363: #{tpu_custom_call.1} parent=349 // pred_check_branch
          %666 = sbr.rel (%p663) target = $region365
        $region364: #{tpu_custom_call.1} parent=349 // pred_region
          %s667 = sand.u32 1, 7
          %s668 = ssub.s32 1, %s667
          %s669 = scalar_lea.vmem %s640, %s668
          %s670 = ssub.s32 1, %s667
          %s671 = scalar_lea.vmem %s641, %s670 [#allocation4]
          %s672 = sshllo.u32 0, %s667
          loop: start=0, step=1, limit=1
          $region366: #{tpu_custom_call.1} parent=364 // loop_pre_header
            _
          $region367: #{tpu_custom_call.1} parent=364 // loop_header
            %s674 = sphi 0, %s678
            %p675 = scmp.ge.s32.totalorder %s674, 1
            %s679 = sphi %s669, %s669
            %s680 = sphi %s671, %s671
          $region368: #{tpu_custom_call.1} parent=364 // loop_header_branch
            %677 = sbr.rel (%p675) target = $region372
          $region369: #{tpu_custom_call.1} parent=364 // loop_body
            %v681 = vld [vmem:[%s679] sm:%s672]
            %682 = vst [vmem:[%s680] sm:%s672] %v681
          $region370: #{tpu_custom_call.1} parent=364 // loop_footer
            %s678 = sadd.s32 1, %s674
          $region371: #{tpu_custom_call.1} parent=364 // loop_footer_branch
            %673 = sbr.rel target = $region367
          $region372: #{tpu_custom_call.1} parent=364 // loop_exit
            _
        $region365: #{tpu_custom_call.1} parent=349 // pred_fallthru
          _
      $region350: #{tpu_custom_call.1} parent=11 // pred_fallthru
        _
      // Predicated region
      $region351: #{tpu_custom_call.1} parent=11 // pred_check
        %p648 = pneg %p644
      $region352: #{tpu_custom_call.1} parent=11 // pred_check_branch
        %650 = sbr.rel (%p648) target = $region354
      $region353: #{tpu_custom_call.1} parent=11 // pred_region
        %s651 = sshllo.u32 0, 1
        loop: start=0, step=1, limit=1
        $region355: #{tpu_custom_call.1} parent=353 // loop_pre_header
          _
        $region356: #{tpu_custom_call.1} parent=353 // loop_header
          %s653 = sphi 0, %s657
          %p654 = scmp.ge.s32.totalorder %s653, 1
          %s658 = sphi %s640, %s640
          %s659 = sphi %s641, %s641
        $region357: #{tpu_custom_call.1} parent=353 // loop_header_branch
          %656 = sbr.rel (%p654) target = $region361
        $region358: #{tpu_custom_call.1} parent=353 // loop_body
          %v660 = vld [vmem:[%s658] sm:%s651]
          %661 = vst [vmem:[%s659] sm:%s651] %v660
        $region359: #{tpu_custom_call.1} parent=353 // loop_footer
          %s657 = sadd.s32 1, %s653
        $region360: #{tpu_custom_call.1} parent=353 // loop_footer_branch
          %652 = sbr.rel target = $region356
        $region361: #{tpu_custom_call.1} parent=353 // loop_exit
          _
      $region354: #{tpu_custom_call.1} parent=11 // pred_fallthru
        _
      // Predicated region
      $region373: #{tpu_custom_call.1} parent=11 // pred_check
        _
      $region374: #{tpu_custom_call.1} parent=11 // pred_check_branch
        %685 = sbr.rel (0) target = $region376
      $region375: #{tpu_custom_call.1} parent=11 // pred_region
        %686 = vsyncadd %s642, 16
      $region376: #{tpu_custom_call.1} parent=11 // pred_fallthru
        _
      %s687 = sadd.s32 %s104, 4
      %s688 = sld [smem:[#allocation7 + %s687]]
      %s689 = sld [smem:[#allocation8 + %s687]]
      %s690 = sld [smem:[#allocation9 + %s687]]
      %s691 = scalar_lea.vmem %s3, %s688
      %s692 = scalar_lea.vmem [#allocation2], 4
      %s693 = scalar_lea.sflag [#allocation5], 4
      %p695 = scmp.lt.u32.totalorder 1, 8
      %p696 = pneg %p695
      // Predicated region
      $region377: #{tpu_custom_call.1} parent=11 // pred_check
        _
      $region378: #{tpu_custom_call.1} parent=11 // pred_check_branch
        %698 = sbr.rel (%p695) target = $region380
      $region379: #{tpu_custom_call.1} parent=11 // pred_region
        %s713 = sand.u32 1, 7
        %p714 = scmp.eq.s32.totalorder %s713, 0
        %p715 = pneg %p714
        // Predicated region
        $region392: #{tpu_custom_call.1} parent=379 // pred_check
          _
        $region393: #{tpu_custom_call.1} parent=379 // pred_check_branch
          %717 = sbr.rel (%p714) target = $region395
        $region394: #{tpu_custom_call.1} parent=379 // pred_region
          %s718 = sand.u32 1, 7
          %s719 = ssub.s32 1, %s718
          %s720 = scalar_lea.vmem %s691, %s719
          %s721 = ssub.s32 1, %s718
          %s722 = scalar_lea.vmem %s692, %s721 [#allocation2]
          %s723 = sshllo.u32 0, %s718
          loop: start=0, step=1, limit=1
          $region396: #{tpu_custom_call.1} parent=394 // loop_pre_header
            _
          $region397: #{tpu_custom_call.1} parent=394 // loop_header
            %s725 = sphi 0, %s729
            %p726 = scmp.ge.s32.totalorder %s725, 1
            %s730 = sphi %s720, %s720
            %s731 = sphi %s722, %s722
          $region398: #{tpu_custom_call.1} parent=394 // loop_header_branch
            %728 = sbr.rel (%p726) target = $region402
          $region399: #{tpu_custom_call.1} parent=394 // loop_body
            %v732 = vld [vmem:[%s730] sm:%s723]
            %733 = vst [vmem:[%s731] sm:%s723] %v732
          $region400: #{tpu_custom_call.1} parent=394 // loop_footer
            %s729 = sadd.s32 1, %s725
          $region401: #{tpu_custom_call.1} parent=394 // loop_footer_branch
            %724 = sbr.rel target = $region397
          $region402: #{tpu_custom_call.1} parent=394 // loop_exit
            _
        $region395: #{tpu_custom_call.1} parent=379 // pred_fallthru
          _
      $region380: #{tpu_custom_call.1} parent=11 // pred_fallthru
        _
      // Predicated region
      $region381: #{tpu_custom_call.1} parent=11 // pred_check
        %p699 = pneg %p695
      $region382: #{tpu_custom_call.1} parent=11 // pred_check_branch
        %701 = sbr.rel (%p699) target = $region384
      $region383: #{tpu_custom_call.1} parent=11 // pred_region
        %s702 = sshllo.u32 0, 1
        loop: start=0, step=1, limit=1
        $region385: #{tpu_custom_call.1} parent=383 // loop_pre_header
          _
        $region386: #{tpu_custom_call.1} parent=383 // loop_header
          %s704 = sphi 0, %s708
          %p705 = scmp.ge.s32.totalorder %s704, 1
          %s709 = sphi %s691, %s691
          %s710 = sphi %s692, %s692
        $region387: #{tpu_custom_call.1} parent=383 // loop_header_branch
          %707 = sbr.rel (%p705) target = $region391
        $region388: #{tpu_custom_call.1} parent=383 // loop_body
          %v711 = vld [vmem:[%s709] sm:%s702]
          %712 = vst [vmem:[%s710] sm:%s702] %v711
        $region389: #{tpu_custom_call.1} parent=383 // loop_footer
          %s708 = sadd.s32 1, %s704
        $region390: #{tpu_custom_call.1} parent=383 // loop_footer_branch
          %703 = sbr.rel target = $region386
        $region391: #{tpu_custom_call.1} parent=383 // loop_exit
          _
      $region384: #{tpu_custom_call.1} parent=11 // pred_fallthru
        _
      // Predicated region
      $region403: #{tpu_custom_call.1} parent=11 // pred_check
        _
      $region404: #{tpu_custom_call.1} parent=11 // pred_check_branch
        %736 = sbr.rel (0) target = $region406
      $region405: #{tpu_custom_call.1} parent=11 // pred_region
        %737 = vsyncadd %s693, 16
      $region406: #{tpu_custom_call.1} parent=11 // pred_fallthru
        _
      %s738 = scalar_lea.vmem %s4, %s689
      %s739 = scalar_lea.vmem [#allocation3], 4
      %s740 = scalar_lea.sflag [#allocation5], 12
      %p742 = scmp.lt.u32.totalorder 1, 8
      %p743 = pneg %p742
      // Predicated region
      $region407: #{tpu_custom_call.1} parent=11 // pred_check
        _
      $region408: #{tpu_custom_call.1} parent=11 // pred_check_branch
        %745 = sbr.rel (%p742) target = $region410
      $region409: #{tpu_custom_call.1} parent=11 // pred_region
        %s760 = sand.u32 1, 7
        %p761 = scmp.eq.s32.totalorder %s760, 0
        %p762 = pneg %p761
        // Predicated region
        $region422: #{tpu_custom_call.1} parent=409 // pred_check
          _
        $region423: #{tpu_custom_call.1} parent=409 // pred_check_branch
          %764 = sbr.rel (%p761) target = $region425
        $region424: #{tpu_custom_call.1} parent=409 // pred_region
          %s765 = sand.u32 1, 7
          %s766 = ssub.s32 1, %s765
          %s767 = scalar_lea.vmem %s738, %s766
          %s768 = ssub.s32 1, %s765
          %s769 = scalar_lea.vmem %s739, %s768 [#allocation3]
          %s770 = sshllo.u32 0, %s765
          loop: start=0, step=1, limit=1
          $region426: #{tpu_custom_call.1} parent=424 // loop_pre_header
            _
          $region427: #{tpu_custom_call.1} parent=424 // loop_header
            %s772 = sphi 0, %s776
            %p773 = scmp.ge.s32.totalorder %s772, 1
            %s777 = sphi %s767, %s767
            %s778 = sphi %s769, %s769
          $region428: #{tpu_custom_call.1} parent=424 // loop_header_branch
            %775 = sbr.rel (%p773) target = $region432
          $region429: #{tpu_custom_call.1} parent=424 // loop_body
            %v779 = vld [vmem:[%s777] sm:%s770]
            %780 = vst [vmem:[%s778] sm:%s770] %v779
          $region430: #{tpu_custom_call.1} parent=424 // loop_footer
            %s776 = sadd.s32 1, %s772
          $region431: #{tpu_custom_call.1} parent=424 // loop_footer_branch
            %771 = sbr.rel target = $region427
          $region432: #{tpu_custom_call.1} parent=424 // loop_exit
            _
        $region425: #{tpu_custom_call.1} parent=409 // pred_fallthru
          _
      $region410: #{tpu_custom_call.1} parent=11 // pred_fallthru
        _
      // Predicated region
      $region411: #{tpu_custom_call.1} parent=11 // pred_check
        %p746 = pneg %p742
      $region412: #{tpu_custom_call.1} parent=11 // pred_check_branch
        %748 = sbr.rel (%p746) target = $region414
      $region413: #{tpu_custom_call.1} parent=11 // pred_region
        %s749 = sshllo.u32 0, 1
        loop: start=0, step=1, limit=1
        $region415: #{tpu_custom_call.1} parent=413 // loop_pre_header
          _
        $region416: #{tpu_custom_call.1} parent=413 // loop_header
          %s751 = sphi 0, %s755
          %p752 = scmp.ge.s32.totalorder %s751, 1
          %s756 = sphi %s738, %s738
          %s757 = sphi %s739, %s739
        $region417: #{tpu_custom_call.1} parent=413 // loop_header_branch
          %754 = sbr.rel (%p752) target = $region421
        $region418: #{tpu_custom_call.1} parent=413 // loop_body
          %v758 = vld [vmem:[%s756] sm:%s749]
          %759 = vst [vmem:[%s757] sm:%s749] %v758
        $region419: #{tpu_custom_call.1} parent=413 // loop_footer
          %s755 = sadd.s32 1, %s751
        $region420: #{tpu_custom_call.1} parent=413 // loop_footer_branch
          %750 = sbr.rel target = $region416
        $region421: #{tpu_custom_call.1} parent=413 // loop_exit
          _
      $region414: #{tpu_custom_call.1} parent=11 // pred_fallthru
        _
      // Predicated region
      $region433: #{tpu_custom_call.1} parent=11 // pred_check
        _
      $region434: #{tpu_custom_call.1} parent=11 // pred_check_branch
        %783 = sbr.rel (0) target = $region436
      $region435: #{tpu_custom_call.1} parent=11 // pred_region
        %784 = vsyncadd %s740, 16
      $region436: #{tpu_custom_call.1} parent=11 // pred_fallthru
        _
      %s785 = scalar_lea.vmem %s4, %s690
      %s786 = scalar_lea.vmem [#allocation4], 4
      %s787 = scalar_lea.sflag [#allocation5], 20
      %p789 = scmp.lt.u32.totalorder 1, 8
      %p790 = pneg %p789
      // Predicated region
      $region437: #{tpu_custom_call.1} parent=11 // pred_check
        _
      $region438: #{tpu_custom_call.1} parent=11 // pred_check_branch
        %792 = sbr.rel (%p789) target = $region440
      $region439: #{tpu_custom_call.1} parent=11 // pred_region
        %s807 = sand.u32 1, 7
        %p808 = scmp.eq.s32.totalorder %s807, 0
        %p809 = pneg %p808
        // Predicated region
        $region452: #{tpu_custom_call.1} parent=439 // pred_check
          _
        $region453: #{tpu_custom_call.1} parent=439 // pred_check_branch
          %811 = sbr.rel (%p808) target = $region455
        $region454: #{tpu_custom_call.1} parent=439 // pred_region
          %s812 = sand.u32 1, 7
          %s813 = ssub.s32 1, %s812
          %s814 = scalar_lea.vmem %s785, %s813
          %s815 = ssub.s32 1, %s812
          %s816 = scalar_lea.vmem %s786, %s815 [#allocation4]
          %s817 = sshllo.u32 0, %s812
          loop: start=0, step=1, limit=1
          $region456: #{tpu_custom_call.1} parent=454 // loop_pre_header
            _
          $region457: #{tpu_custom_call.1} parent=454 // loop_header
            %s819 = sphi 0, %s823
            %p820 = scmp.ge.s32.totalorder %s819, 1
            %s824 = sphi %s814, %s814
            %s825 = sphi %s816, %s816
          $region458: #{tpu_custom_call.1} parent=454 // loop_header_branch
            %822 = sbr.rel (%p820) target = $region462
          $region459: #{tpu_custom_call.1} parent=454 // loop_body
            %v826 = vld [vmem:[%s824] sm:%s817]
            %827 = vst [vmem:[%s825] sm:%s817] %v826
          $region460: #{tpu_custom_call.1} parent=454 // loop_footer
            %s823 = sadd.s32 1, %s819
          $region461: #{tpu_custom_call.1} parent=454 // loop_footer_branch
            %818 = sbr.rel target = $region457
          $region462: #{tpu_custom_call.1} parent=454 // loop_exit
            _
        $region455: #{tpu_custom_call.1} parent=439 // pred_fallthru
          _
      $region440: #{tpu_custom_call.1} parent=11 // pred_fallthru
        _
      // Predicated region
      $region441: #{tpu_custom_call.1} parent=11 // pred_check
        %p793 = pneg %p789
      $region442: #{tpu_custom_call.1} parent=11 // pred_check_branch
        %795 = sbr.rel (%p793) target = $region444
      $region443: #{tpu_custom_call.1} parent=11 // pred_region
        %s796 = sshllo.u32 0, 1
        loop: start=0, step=1, limit=1
        $region445: #{tpu_custom_call.1} parent=443 // loop_pre_header
          _
        $region446: #{tpu_custom_call.1} parent=443 // loop_header
          %s798 = sphi 0, %s802
          %p799 = scmp.ge.s32.totalorder %s798, 1
          %s803 = sphi %s785, %s785
          %s804 = sphi %s786, %s786
        $region447: #{tpu_custom_call.1} parent=443 // loop_header_branch
          %801 = sbr.rel (%p799) target = $region451
        $region448: #{tpu_custom_call.1} parent=443 // loop_body
          %v805 = vld [vmem:[%s803] sm:%s796]
          %806 = vst [vmem:[%s804] sm:%s796] %v805
        $region449: #{tpu_custom_call.1} parent=443 // loop_footer
          %s802 = sadd.s32 1, %s798
        $region450: #{tpu_custom_call.1} parent=443 // loop_footer_branch
          %797 = sbr.rel target = $region446
        $region451: #{tpu_custom_call.1} parent=443 // loop_exit
          _
      $region444: #{tpu_custom_call.1} parent=11 // pred_fallthru
        _
      // Predicated region
      $region463: #{tpu_custom_call.1} parent=11 // pred_check
        _
      $region464: #{tpu_custom_call.1} parent=11 // pred_check_branch
        %830 = sbr.rel (0) target = $region466
      $region465: #{tpu_custom_call.1} parent=11 // pred_region
        %831 = vsyncadd %s787, 16
      $region466: #{tpu_custom_call.1} parent=11 // pred_fallthru
        _
      %s832 = sadd.s32 %s104, 5
      %s833 = sld [smem:[#allocation7 + %s832]]
      %s834 = sld [smem:[#allocation8 + %s832]]
      %s835 = sld [smem:[#allocation9 + %s832]]
      %s836 = scalar_lea.vmem %s3, %s833
      %s837 = scalar_lea.vmem [#allocation2], 5
      %s838 = scalar_lea.sflag [#allocation5], 5
      %p840 = scmp.lt.u32.totalorder 1, 8
      %p841 = pneg %p840
      // Predicated region
      $region467: #{tpu_custom_call.1} parent=11 // pred_check
        _
      $region468: #{tpu_custom_call.1} parent=11 // pred_check_branch
        %843 = sbr.rel (%p840) target = $region470
      $region469: #{tpu_custom_call.1} parent=11 // pred_region
        %s858 = sand.u32 1, 7
        %p859 = scmp.eq.s32.totalorder %s858, 0
        %p860 = pneg %p859
        // Predicated region
        $region482: #{tpu_custom_call.1} parent=469 // pred_check
          _
        $region483: #{tpu_custom_call.1} parent=469 // pred_check_branch
          %862 = sbr.rel (%p859) target = $region485
        $region484: #{tpu_custom_call.1} parent=469 // pred_region
          %s863 = sand.u32 1, 7
          %s864 = ssub.s32 1, %s863
          %s865 = scalar_lea.vmem %s836, %s864
          %s866 = ssub.s32 1, %s863
          %s867 = scalar_lea.vmem %s837, %s866 [#allocation2]
          %s868 = sshllo.u32 0, %s863
          loop: start=0, step=1, limit=1
          $region486: #{tpu_custom_call.1} parent=484 // loop_pre_header
            _
          $region487: #{tpu_custom_call.1} parent=484 // loop_header
            %s870 = sphi 0, %s874
            %p871 = scmp.ge.s32.totalorder %s870, 1
            %s875 = sphi %s865, %s865
            %s876 = sphi %s867, %s867
          $region488: #{tpu_custom_call.1} parent=484 // loop_header_branch
            %873 = sbr.rel (%p871) target = $region492
          $region489: #{tpu_custom_call.1} parent=484 // loop_body
            %v877 = vld [vmem:[%s875] sm:%s868]
            %878 = vst [vmem:[%s876] sm:%s868] %v877
          $region490: #{tpu_custom_call.1} parent=484 // loop_footer
            %s874 = sadd.s32 1, %s870
          $region491: #{tpu_custom_call.1} parent=484 // loop_footer_branch
            %869 = sbr.rel target = $region487
          $region492: #{tpu_custom_call.1} parent=484 // loop_exit
            _
        $region485: #{tpu_custom_call.1} parent=469 // pred_fallthru
          _
      $region470: #{tpu_custom_call.1} parent=11 // pred_fallthru
        _
      // Predicated region
      $region471: #{tpu_custom_call.1} parent=11 // pred_check
        %p844 = pneg %p840
      $region472: #{tpu_custom_call.1} parent=11 // pred_check_branch
        %846 = sbr.rel (%p844) target = $region474
      $region473: #{tpu_custom_call.1} parent=11 // pred_region
        %s847 = sshllo.u32 0, 1
        loop: start=0, step=1, limit=1
        $region475: #{tpu_custom_call.1} parent=473 // loop_pre_header
          _
        $region476: #{tpu_custom_call.1} parent=473 // loop_header
          %s849 = sphi 0, %s853
          %p850 = scmp.ge.s32.totalorder %s849, 1
          %s854 = sphi %s836, %s836
          %s855 = sphi %s837, %s837
        $region477: #{tpu_custom_call.1} parent=473 // loop_header_branch
          %852 = sbr.rel (%p850) target = $region481
        $region478: #{tpu_custom_call.1} parent=473 // loop_body
          %v856 = vld [vmem:[%s854] sm:%s847]
          %857 = vst [vmem:[%s855] sm:%s847] %v856
        $region479: #{tpu_custom_call.1} parent=473 // loop_footer
          %s853 = sadd.s32 1, %s849
        $region480: #{tpu_custom_call.1} parent=473 // loop_footer_branch
          %848 = sbr.rel target = $region476
        $region481: #{tpu_custom_call.1} parent=473 // loop_exit
          _
      $region474: #{tpu_custom_call.1} parent=11 // pred_fallthru
        _
      // Predicated region
      $region493: #{tpu_custom_call.1} parent=11 // pred_check
        _
      $region494: #{tpu_custom_call.1} parent=11 // pred_check_branch
        %881 = sbr.rel (0) target = $region496
      $region495: #{tpu_custom_call.1} parent=11 // pred_region
        %882 = vsyncadd %s838, 16
      $region496: #{tpu_custom_call.1} parent=11 // pred_fallthru
        _
      %s883 = scalar_lea.vmem %s4, %s834
      %s884 = scalar_lea.vmem [#allocation3], 5
      %s885 = scalar_lea.sflag [#allocation5], 13
      %p887 = scmp.lt.u32.totalorder 1, 8
      %p888 = pneg %p887
      // Predicated region
      $region497: #{tpu_custom_call.1} parent=11 // pred_check
        _
      $region498: #{tpu_custom_call.1} parent=11 // pred_check_branch
        %890 = sbr.rel (%p887) target = $region500
      $region499: #{tpu_custom_call.1} parent=11 // pred_region
        %s905 = sand.u32 1, 7
        %p906 = scmp.eq.s32.totalorder %s905, 0
        %p907 = pneg %p906
        // Predicated region
        $region512: #{tpu_custom_call.1} parent=499 // pred_check
          _
        $region513: #{tpu_custom_call.1} parent=499 // pred_check_branch
          %909 = sbr.rel (%p906) target = $region515
        $region514: #{tpu_custom_call.1} parent=499 // pred_region
          %s910 = sand.u32 1, 7
          %s911 = ssub.s32 1, %s910
          %s912 = scalar_lea.vmem %s883, %s911
          %s913 = ssub.s32 1, %s910
          %s914 = scalar_lea.vmem %s884, %s913 [#allocation3]
          %s915 = sshllo.u32 0, %s910
          loop: start=0, step=1, limit=1
          $region516: #{tpu_custom_call.1} parent=514 // loop_pre_header
            _
          $region517: #{tpu_custom_call.1} parent=514 // loop_header
            %s917 = sphi 0, %s921
            %p918 = scmp.ge.s32.totalorder %s917, 1
            %s922 = sphi %s912, %s912
            %s923 = sphi %s914, %s914
          $region518: #{tpu_custom_call.1} parent=514 // loop_header_branch
            %920 = sbr.rel (%p918) target = $region522
          $region519: #{tpu_custom_call.1} parent=514 // loop_body
            %v924 = vld [vmem:[%s922] sm:%s915]
            %925 = vst [vmem:[%s923] sm:%s915] %v924
          $region520: #{tpu_custom_call.1} parent=514 // loop_footer
            %s921 = sadd.s32 1, %s917
          $region521: #{tpu_custom_call.1} parent=514 // loop_footer_branch
            %916 = sbr.rel target = $region517
          $region522: #{tpu_custom_call.1} parent=514 // loop_exit
            _
        $region515: #{tpu_custom_call.1} parent=499 // pred_fallthru
          _
      $region500: #{tpu_custom_call.1} parent=11 // pred_fallthru
        _
      // Predicated region
      $region501: #{tpu_custom_call.1} parent=11 // pred_check
        %p891 = pneg %p887
      $region502: #{tpu_custom_call.1} parent=11 // pred_check_branch
        %893 = sbr.rel (%p891) target = $region504
      $region503: #{tpu_custom_call.1} parent=11 // pred_region
        %s894 = sshllo.u32 0, 1
        loop: start=0, step=1, limit=1
        $region505: #{tpu_custom_call.1} parent=503 // loop_pre_header
          _
        $region506: #{tpu_custom_call.1} parent=503 // loop_header
          %s896 = sphi 0, %s900
          %p897 = scmp.ge.s32.totalorder %s896, 1
          %s901 = sphi %s883, %s883
          %s902 = sphi %s884, %s884
        $region507: #{tpu_custom_call.1} parent=503 // loop_header_branch
          %899 = sbr.rel (%p897) target = $region511
        $region508: #{tpu_custom_call.1} parent=503 // loop_body
          %v903 = vld [vmem:[%s901] sm:%s894]
          %904 = vst [vmem:[%s902] sm:%s894] %v903
        $region509: #{tpu_custom_call.1} parent=503 // loop_footer
          %s900 = sadd.s32 1, %s896
        $region510: #{tpu_custom_call.1} parent=503 // loop_footer_branch
          %895 = sbr.rel target = $region506
        $region511: #{tpu_custom_call.1} parent=503 // loop_exit
          _
      $region504: #{tpu_custom_call.1} parent=11 // pred_fallthru
        _
      // Predicated region
      $region523: #{tpu_custom_call.1} parent=11 // pred_check
        _
      $region524: #{tpu_custom_call.1} parent=11 // pred_check_branch
        %928 = sbr.rel (0) target = $region526
      $region525: #{tpu_custom_call.1} parent=11 // pred_region
        %929 = vsyncadd %s885, 16
      $region526: #{tpu_custom_call.1} parent=11 // pred_fallthru
        _
      %s930 = scalar_lea.vmem %s4, %s835
      %s931 = scalar_lea.vmem [#allocation4], 5
      %s932 = scalar_lea.sflag [#allocation5], 21
      %p934 = scmp.lt.u32.totalorder 1, 8
      %p935 = pneg %p934
      // Predicated region
      $region527: #{tpu_custom_call.1} parent=11 // pred_check
        _
      $region528: #{tpu_custom_call.1} parent=11 // pred_check_branch
        %937 = sbr.rel (%p934) target = $region530
      $region529: #{tpu_custom_call.1} parent=11 // pred_region
        %s952 = sand.u32 1, 7
        %p953 = scmp.eq.s32.totalorder %s952, 0
        %p954 = pneg %p953
        // Predicated region
        $region542: #{tpu_custom_call.1} parent=529 // pred_check
          _
        $region543: #{tpu_custom_call.1} parent=529 // pred_check_branch
          %956 = sbr.rel (%p953) target = $region545
        $region544: #{tpu_custom_call.1} parent=529 // pred_region
          %s957 = sand.u32 1, 7
          %s958 = ssub.s32 1, %s957
          %s959 = scalar_lea.vmem %s930, %s958
          %s960 = ssub.s32 1, %s957
          %s961 = scalar_lea.vmem %s931, %s960 [#allocation4]
          %s962 = sshllo.u32 0, %s957
          loop: start=0, step=1, limit=1
          $region546: #{tpu_custom_call.1} parent=544 // loop_pre_header
            _
          $region547: #{tpu_custom_call.1} parent=544 // loop_header
            %s964 = sphi 0, %s968
            %p965 = scmp.ge.s32.totalorder %s964, 1
            %s969 = sphi %s959, %s959
            %s970 = sphi %s961, %s961
          $region548: #{tpu_custom_call.1} parent=544 // loop_header_branch
            %967 = sbr.rel (%p965) target = $region552
          $region549: #{tpu_custom_call.1} parent=544 // loop_body
            %v971 = vld [vmem:[%s969] sm:%s962]
            %972 = vst [vmem:[%s970] sm:%s962] %v971
          $region550: #{tpu_custom_call.1} parent=544 // loop_footer
            %s968 = sadd.s32 1, %s964
          $region551: #{tpu_custom_call.1} parent=544 // loop_footer_branch
            %963 = sbr.rel target = $region547
          $region552: #{tpu_custom_call.1} parent=544 // loop_exit
            _
        $region545: #{tpu_custom_call.1} parent=529 // pred_fallthru
          _
      $region530: #{tpu_custom_call.1} parent=11 // pred_fallthru
        _
      // Predicated region
      $region531: #{tpu_custom_call.1} parent=11 // pred_check
        %p938 = pneg %p934
      $region532: #{tpu_custom_call.1} parent=11 // pred_check_branch
        %940 = sbr.rel (%p938) target = $region534
      $region533: #{tpu_custom_call.1} parent=11 // pred_region
        %s941 = sshllo.u32 0, 1
        loop: start=0, step=1, limit=1
        $region535: #{tpu_custom_call.1} parent=533 // loop_pre_header
          _
        $region536: #{tpu_custom_call.1} parent=533 // loop_header
          %s943 = sphi 0, %s947
          %p944 = scmp.ge.s32.totalorder %s943, 1
          %s948 = sphi %s930, %s930
          %s949 = sphi %s931, %s931
        $region537: #{tpu_custom_call.1} parent=533 // loop_header_branch
          %946 = sbr.rel (%p944) target = $region541
        $region538: #{tpu_custom_call.1} parent=533 // loop_body
          %v950 = vld [vmem:[%s948] sm:%s941]
          %951 = vst [vmem:[%s949] sm:%s941] %v950
        $region539: #{tpu_custom_call.1} parent=533 // loop_footer
          %s947 = sadd.s32 1, %s943
        $region540: #{tpu_custom_call.1} parent=533 // loop_footer_branch
          %942 = sbr.rel target = $region536
        $region541: #{tpu_custom_call.1} parent=533 // loop_exit
          _
      $region534: #{tpu_custom_call.1} parent=11 // pred_fallthru
        _
      // Predicated region
      $region553: #{tpu_custom_call.1} parent=11 // pred_check
        _
      $region554: #{tpu_custom_call.1} parent=11 // pred_check_branch
        %975 = sbr.rel (0) target = $region556
      $region555: #{tpu_custom_call.1} parent=11 // pred_region
        %976 = vsyncadd %s932, 16
      $region556: #{tpu_custom_call.1} parent=11 // pred_fallthru
        _
      %s977 = sadd.s32 %s104, 6
      %s978 = sld [smem:[#allocation7 + %s977]]
      %s979 = sld [smem:[#allocation8 + %s977]]
      %s980 = sld [smem:[#allocation9 + %s977]]
      %s981 = scalar_lea.vmem %s3, %s978
      %s982 = scalar_lea.vmem [#allocation2], 6
      %s983 = scalar_lea.sflag [#allocation5], 6
      %p985 = scmp.lt.u32.totalorder 1, 8
      %p986 = pneg %p985
      // Predicated region
      $region557: #{tpu_custom_call.1} parent=11 // pred_check
        _
      $region558: #{tpu_custom_call.1} parent=11 // pred_check_branch
        %988 = sbr.rel (%p985) target = $region560
      $region559: #{tpu_custom_call.1} parent=11 // pred_region
        %s1003 = sand.u32 1, 7
        %p1004 = scmp.eq.s32.totalorder %s1003, 0
        %p1005 = pneg %p1004
        // Predicated region
        $region572: #{tpu_custom_call.1} parent=559 // pred_check
          _
        $region573: #{tpu_custom_call.1} parent=559 // pred_check_branch
          %1007 = sbr.rel (%p1004) target = $region575
        $region574: #{tpu_custom_call.1} parent=559 // pred_region
          %s1008 = sand.u32 1, 7
          %s1009 = ssub.s32 1, %s1008
          %s1010 = scalar_lea.vmem %s981, %s1009
          %s1011 = ssub.s32 1, %s1008
          %s1012 = scalar_lea.vmem %s982, %s1011 [#allocation2]
          %s1013 = sshllo.u32 0, %s1008
          loop: start=0, step=1, limit=1
          $region576: #{tpu_custom_call.1} parent=574 // loop_pre_header
            _
          $region577: #{tpu_custom_call.1} parent=574 // loop_header
            %s1015 = sphi 0, %s1019
            %p1016 = scmp.ge.s32.totalorder %s1015, 1
            %s1020 = sphi %s1010, %s1010
            %s1021 = sphi %s1012, %s1012
          $region578: #{tpu_custom_call.1} parent=574 // loop_header_branch
            %1018 = sbr.rel (%p1016) target = $region582
          $region579: #{tpu_custom_call.1} parent=574 // loop_body
            %v1022 = vld [vmem:[%s1020] sm:%s1013]
            %1023 = vst [vmem:[%s1021] sm:%s1013] %v1022
          $region580: #{tpu_custom_call.1} parent=574 // loop_footer
            %s1019 = sadd.s32 1, %s1015
          $region581: #{tpu_custom_call.1} parent=574 // loop_footer_branch
            %1014 = sbr.rel target = $region577
          $region582: #{tpu_custom_call.1} parent=574 // loop_exit
            _
        $region575: #{tpu_custom_call.1} parent=559 // pred_fallthru
          _
      $region560: #{tpu_custom_call.1} parent=11 // pred_fallthru
        _
      // Predicated region
      $region561: #{tpu_custom_call.1} parent=11 // pred_check
        %p989 = pneg %p985
      $region562: #{tpu_custom_call.1} parent=11 // pred_check_branch
        %991 = sbr.rel (%p989) target = $region564
      $region563: #{tpu_custom_call.1} parent=11 // pred_region
        %s992 = sshllo.u32 0, 1
        loop: start=0, step=1, limit=1
        $region565: #{tpu_custom_call.1} parent=563 // loop_pre_header
          _
        $region566: #{tpu_custom_call.1} parent=563 // loop_header
          %s994 = sphi 0, %s998
          %p995 = scmp.ge.s32.totalorder %s994, 1
          %s999 = sphi %s981, %s981
          %s1000 = sphi %s982, %s982
        $region567: #{tpu_custom_call.1} parent=563 // loop_header_branch
          %997 = sbr.rel (%p995) target = $region571
        $region568: #{tpu_custom_call.1} parent=563 // loop_body
          %v1001 = vld [vmem:[%s999] sm:%s992]
          %1002 = vst [vmem:[%s1000] sm:%s992] %v1001
        $region569: #{tpu_custom_call.1} parent=563 // loop_footer
          %s998 = sadd.s32 1, %s994
        $region570: #{tpu_custom_call.1} parent=563 // loop_footer_branch
          %993 = sbr.rel target = $region566
        $region571: #{tpu_custom_call.1} parent=563 // loop_exit
          _
      $region564: #{tpu_custom_call.1} parent=11 // pred_fallthru
        _
      // Predicated region
      $region583: #{tpu_custom_call.1} parent=11 // pred_check
        _
      $region584: #{tpu_custom_call.1} parent=11 // pred_check_branch
        %1026 = sbr.rel (0) target = $region586
      $region585: #{tpu_custom_call.1} parent=11 // pred_region
        %1027 = vsyncadd %s983, 16
      $region586: #{tpu_custom_call.1} parent=11 // pred_fallthru
        _
      %s1028 = scalar_lea.vmem %s4, %s979
      %s1029 = scalar_lea.vmem [#allocation3], 6
      %s1030 = scalar_lea.sflag [#allocation5], 14
      %p1032 = scmp.lt.u32.totalorder 1, 8
      %p1033 = pneg %p1032
      // Predicated region
      $region587: #{tpu_custom_call.1} parent=11 // pred_check
        _
      $region588: #{tpu_custom_call.1} parent=11 // pred_check_branch
        %1035 = sbr.rel (%p1032) target = $region590
      $region589: #{tpu_custom_call.1} parent=11 // pred_region
        %s1050 = sand.u32 1, 7
        %p1051 = scmp.eq.s32.totalorder %s1050, 0
        %p1052 = pneg %p1051
        // Predicated region
        $region602: #{tpu_custom_call.1} parent=589 // pred_check
          _
        $region603: #{tpu_custom_call.1} parent=589 // pred_check_branch
          %1054 = sbr.rel (%p1051) target = $region605
        $region604: #{tpu_custom_call.1} parent=589 // pred_region
          %s1055 = sand.u32 1, 7
          %s1056 = ssub.s32 1, %s1055
          %s1057 = scalar_lea.vmem %s1028, %s1056
          %s1058 = ssub.s32 1, %s1055
          %s1059 = scalar_lea.vmem %s1029, %s1058 [#allocation3]
          %s1060 = sshllo.u32 0, %s1055
          loop: start=0, step=1, limit=1
          $region606: #{tpu_custom_call.1} parent=604 // loop_pre_header
            _
          $region607: #{tpu_custom_call.1} parent=604 // loop_header
            %s1062 = sphi 0, %s1066
            %p1063 = scmp.ge.s32.totalorder %s1062, 1
            %s1067 = sphi %s1057, %s1057
            %s1068 = sphi %s1059, %s1059
          $region608: #{tpu_custom_call.1} parent=604 // loop_header_branch
            %1065 = sbr.rel (%p1063) target = $region612
          $region609: #{tpu_custom_call.1} parent=604 // loop_body
            %v1069 = vld [vmem:[%s1067] sm:%s1060]
            %1070 = vst [vmem:[%s1068] sm:%s1060] %v1069
          $region610: #{tpu_custom_call.1} parent=604 // loop_footer
            %s1066 = sadd.s32 1, %s1062
          $region611: #{tpu_custom_call.1} parent=604 // loop_footer_branch
            %1061 = sbr.rel target = $region607
          $region612: #{tpu_custom_call.1} parent=604 // loop_exit
            _
        $region605: #{tpu_custom_call.1} parent=589 // pred_fallthru
          _
      $region590: #{tpu_custom_call.1} parent=11 // pred_fallthru
        _
      // Predicated region
      $region591: #{tpu_custom_call.1} parent=11 // pred_check
        %p1036 = pneg %p1032
      $region592: #{tpu_custom_call.1} parent=11 // pred_check_branch
        %1038 = sbr.rel (%p1036) target = $region594
      $region593: #{tpu_custom_call.1} parent=11 // pred_region
        %s1039 = sshllo.u32 0, 1
        loop: start=0, step=1, limit=1
        $region595: #{tpu_custom_call.1} parent=593 // loop_pre_header
          _
        $region596: #{tpu_custom_call.1} parent=593 // loop_header
          %s1041 = sphi 0, %s1045
          %p1042 = scmp.ge.s32.totalorder %s1041, 1
          %s1046 = sphi %s1028, %s1028
          %s1047 = sphi %s1029, %s1029
        $region597: #{tpu_custom_call.1} parent=593 // loop_header_branch
          %1044 = sbr.rel (%p1042) target = $region601
        $region598: #{tpu_custom_call.1} parent=593 // loop_body
          %v1048 = vld [vmem:[%s1046] sm:%s1039]
          %1049 = vst [vmem:[%s1047] sm:%s1039] %v1048
        $region599: #{tpu_custom_call.1} parent=593 // loop_footer
          %s1045 = sadd.s32 1, %s1041
        $region600: #{tpu_custom_call.1} parent=593 // loop_footer_branch
          %1040 = sbr.rel target = $region596
        $region601: #{tpu_custom_call.1} parent=593 // loop_exit
          _
      $region594: #{tpu_custom_call.1} parent=11 // pred_fallthru
        _
      // Predicated region
      $region613: #{tpu_custom_call.1} parent=11 // pred_check
        _
      $region614: #{tpu_custom_call.1} parent=11 // pred_check_branch
        %1073 = sbr.rel (0) target = $region616
      $region615: #{tpu_custom_call.1} parent=11 // pred_region
        %1074 = vsyncadd %s1030, 16
      $region616: #{tpu_custom_call.1} parent=11 // pred_fallthru
        _
      %s1075 = scalar_lea.vmem %s4, %s980
      %s1076 = scalar_lea.vmem [#allocation4], 6
      %s1077 = scalar_lea.sflag [#allocation5], 22
      %p1079 = scmp.lt.u32.totalorder 1, 8
      %p1080 = pneg %p1079
      // Predicated region
      $region617: #{tpu_custom_call.1} parent=11 // pred_check
        _
      $region618: #{tpu_custom_call.1} parent=11 // pred_check_branch
        %1082 = sbr.rel (%p1079) target = $region620
      $region619: #{tpu_custom_call.1} parent=11 // pred_region
        %s1097 = sand.u32 1, 7
        %p1098 = scmp.eq.s32.totalorder %s1097, 0
        %p1099 = pneg %p1098
        // Predicated region
        $region632: #{tpu_custom_call.1} parent=619 // pred_check
          _
        $region633: #{tpu_custom_call.1} parent=619 // pred_check_branch
          %1101 = sbr.rel (%p1098) target = $region635
        $region634: #{tpu_custom_call.1} parent=619 // pred_region
          %s1102 = sand.u32 1, 7
          %s1103 = ssub.s32 1, %s1102
          %s1104 = scalar_lea.vmem %s1075, %s1103
          %s1105 = ssub.s32 1, %s1102
          %s1106 = scalar_lea.vmem %s1076, %s1105 [#allocation4]
          %s1107 = sshllo.u32 0, %s1102
          loop: start=0, step=1, limit=1
          $region636: #{tpu_custom_call.1} parent=634 // loop_pre_header
            _
          $region637: #{tpu_custom_call.1} parent=634 // loop_header
            %s1109 = sphi 0, %s1113
            %p1110 = scmp.ge.s32.totalorder %s1109, 1
            %s1114 = sphi %s1104, %s1104
            %s1115 = sphi %s1106, %s1106
          $region638: #{tpu_custom_call.1} parent=634 // loop_header_branch
            %1112 = sbr.rel (%p1110) target = $region642
          $region639: #{tpu_custom_call.1} parent=634 // loop_body
            %v1116 = vld [vmem:[%s1114] sm:%s1107]
            %1117 = vst [vmem:[%s1115] sm:%s1107] %v1116
          $region640: #{tpu_custom_call.1} parent=634 // loop_footer
            %s1113 = sadd.s32 1, %s1109
          $region641: #{tpu_custom_call.1} parent=634 // loop_footer_branch
            %1108 = sbr.rel target = $region637
          $region642: #{tpu_custom_call.1} parent=634 // loop_exit
            _
        $region635: #{tpu_custom_call.1} parent=619 // pred_fallthru
          _
      $region620: #{tpu_custom_call.1} parent=11 // pred_fallthru
        _
      // Predicated region
      $region621: #{tpu_custom_call.1} parent=11 // pred_check
        %p1083 = pneg %p1079
      $region622: #{tpu_custom_call.1} parent=11 // pred_check_branch
        %1085 = sbr.rel (%p1083) target = $region624
      $region623: #{tpu_custom_call.1} parent=11 // pred_region
        %s1086 = sshllo.u32 0, 1
        loop: start=0, step=1, limit=1
        $region625: #{tpu_custom_call.1} parent=623 // loop_pre_header
          _
        $region626: #{tpu_custom_call.1} parent=623 // loop_header
          %s1088 = sphi 0, %s1092
          %p1089 = scmp.ge.s32.totalorder %s1088, 1
          %s1093 = sphi %s1075, %s1075
          %s1094 = sphi %s1076, %s1076
        $region627: #{tpu_custom_call.1} parent=623 // loop_header_branch
          %1091 = sbr.rel (%p1089) target = $region631
        $region628: #{tpu_custom_call.1} parent=623 // loop_body
          %v1095 = vld [vmem:[%s1093] sm:%s1086]
          %1096 = vst [vmem:[%s1094] sm:%s1086] %v1095
        $region629: #{tpu_custom_call.1} parent=623 // loop_footer
          %s1092 = sadd.s32 1, %s1088
        $region630: #{tpu_custom_call.1} parent=623 // loop_footer_branch
          %1087 = sbr.rel target = $region626
        $region631: #{tpu_custom_call.1} parent=623 // loop_exit
          _
      $region624: #{tpu_custom_call.1} parent=11 // pred_fallthru
        _
      // Predicated region
      $region643: #{tpu_custom_call.1} parent=11 // pred_check
        _
      $region644: #{tpu_custom_call.1} parent=11 // pred_check_branch
        %1120 = sbr.rel (0) target = $region646
      $region645: #{tpu_custom_call.1} parent=11 // pred_region
        %1121 = vsyncadd %s1077, 16
      $region646: #{tpu_custom_call.1} parent=11 // pred_fallthru
        _
      %s1122 = sadd.s32 %s104, 7
      %s1123 = sld [smem:[#allocation7 + %s1122]]
      %s1124 = sld [smem:[#allocation8 + %s1122]]
      %s1125 = sld [smem:[#allocation9 + %s1122]]
      %s1126 = scalar_lea.vmem %s3, %s1123
      %s1127 = scalar_lea.vmem [#allocation2], 7
      %s1128 = scalar_lea.sflag [#allocation5], 7
      %p1130 = scmp.lt.u32.totalorder 1, 8
      %p1131 = pneg %p1130
      // Predicated region
      $region647: #{tpu_custom_call.1} parent=11 // pred_check
        _
      $region648: #{tpu_custom_call.1} parent=11 // pred_check_branch
        %1133 = sbr.rel (%p1130) target = $region650
      $region649: #{tpu_custom_call.1} parent=11 // pred_region
        %s1148 = sand.u32 1, 7
        %p1149 = scmp.eq.s32.totalorder %s1148, 0
        %p1150 = pneg %p1149
        // Predicated region
        $region662: #{tpu_custom_call.1} parent=649 // pred_check
          _
        $region663: #{tpu_custom_call.1} parent=649 // pred_check_branch
          %1152 = sbr.rel (%p1149) target = $region665
        $region664: #{tpu_custom_call.1} parent=649 // pred_region
          %s1153 = sand.u32 1, 7
          %s1154 = ssub.s32 1, %s1153
          %s1155 = scalar_lea.vmem %s1126, %s1154
          %s1156 = ssub.s32 1, %s1153
          %s1157 = scalar_lea.vmem %s1127, %s1156 [#allocation2]
          %s1158 = sshllo.u32 0, %s1153
          loop: start=0, step=1, limit=1
          $region666: #{tpu_custom_call.1} parent=664 // loop_pre_header
            _
          $region667: #{tpu_custom_call.1} parent=664 // loop_header
            %s1160 = sphi 0, %s1164
            %p1161 = scmp.ge.s32.totalorder %s1160, 1
            %s1165 = sphi %s1155, %s1155
            %s1166 = sphi %s1157, %s1157
          $region668: #{tpu_custom_call.1} parent=664 // loop_header_branch
            %1163 = sbr.rel (%p1161) target = $region672
          $region669: #{tpu_custom_call.1} parent=664 // loop_body
            %v1167 = vld [vmem:[%s1165] sm:%s1158]
            %1168 = vst [vmem:[%s1166] sm:%s1158] %v1167
          $region670: #{tpu_custom_call.1} parent=664 // loop_footer
            %s1164 = sadd.s32 1, %s1160
          $region671: #{tpu_custom_call.1} parent=664 // loop_footer_branch
            %1159 = sbr.rel target = $region667
          $region672: #{tpu_custom_call.1} parent=664 // loop_exit
            _
        $region665: #{tpu_custom_call.1} parent=649 // pred_fallthru
          _
      $region650: #{tpu_custom_call.1} parent=11 // pred_fallthru
        _
      // Predicated region
      $region651: #{tpu_custom_call.1} parent=11 // pred_check
        %p1134 = pneg %p1130
      $region652: #{tpu_custom_call.1} parent=11 // pred_check_branch
        %1136 = sbr.rel (%p1134) target = $region654
      $region653: #{tpu_custom_call.1} parent=11 // pred_region
        %s1137 = sshllo.u32 0, 1
        loop: start=0, step=1, limit=1
        $region655: #{tpu_custom_call.1} parent=653 // loop_pre_header
          _
        $region656: #{tpu_custom_call.1} parent=653 // loop_header
          %s1139 = sphi 0, %s1143
          %p1140 = scmp.ge.s32.totalorder %s1139, 1
          %s1144 = sphi %s1126, %s1126
          %s1145 = sphi %s1127, %s1127
        $region657: #{tpu_custom_call.1} parent=653 // loop_header_branch
          %1142 = sbr.rel (%p1140) target = $region661
        $region658: #{tpu_custom_call.1} parent=653 // loop_body
          %v1146 = vld [vmem:[%s1144] sm:%s1137]
          %1147 = vst [vmem:[%s1145] sm:%s1137] %v1146
        $region659: #{tpu_custom_call.1} parent=653 // loop_footer
          %s1143 = sadd.s32 1, %s1139
        $region660: #{tpu_custom_call.1} parent=653 // loop_footer_branch
          %1138 = sbr.rel target = $region656
        $region661: #{tpu_custom_call.1} parent=653 // loop_exit
          _
      $region654: #{tpu_custom_call.1} parent=11 // pred_fallthru
        _
      // Predicated region
      $region673: #{tpu_custom_call.1} parent=11 // pred_check
        _
      $region674: #{tpu_custom_call.1} parent=11 // pred_check_branch
        %1171 = sbr.rel (0) target = $region676
      $region675: #{tpu_custom_call.1} parent=11 // pred_region
        %1172 = vsyncadd %s1128, 16
      $region676: #{tpu_custom_call.1} parent=11 // pred_fallthru
        _
      %s1173 = scalar_lea.vmem %s4, %s1124
      %s1174 = scalar_lea.vmem [#allocation3], 7
      %s1175 = scalar_lea.sflag [#allocation5], 15
      %p1177 = scmp.lt.u32.totalorder 1, 8
      %p1178 = pneg %p1177
      // Predicated region
      $region677: #{tpu_custom_call.1} parent=11 // pred_check
        _
      $region678: #{tpu_custom_call.1} parent=11 // pred_check_branch
        %1180 = sbr.rel (%p1177) target = $region680
      $region679: #{tpu_custom_call.1} parent=11 // pred_region
        %s1195 = sand.u32 1, 7
        %p1196 = scmp.eq.s32.totalorder %s1195, 0
        %p1197 = pneg %p1196
        // Predicated region
        $region692: #{tpu_custom_call.1} parent=679 // pred_check
          _
        $region693: #{tpu_custom_call.1} parent=679 // pred_check_branch
          %1199 = sbr.rel (%p1196) target = $region695
        $region694: #{tpu_custom_call.1} parent=679 // pred_region
          %s1200 = sand.u32 1, 7
          %s1201 = ssub.s32 1, %s1200
          %s1202 = scalar_lea.vmem %s1173, %s1201
          %s1203 = ssub.s32 1, %s1200
          %s1204 = scalar_lea.vmem %s1174, %s1203 [#allocation3]
          %s1205 = sshllo.u32 0, %s1200
          loop: start=0, step=1, limit=1
          $region696: #{tpu_custom_call.1} parent=694 // loop_pre_header
            _
          $region697: #{tpu_custom_call.1} parent=694 // loop_header
            %s1207 = sphi 0, %s1211
            %p1208 = scmp.ge.s32.totalorder %s1207, 1
            %s1212 = sphi %s1202, %s1202
            %s1213 = sphi %s1204, %s1204
          $region698: #{tpu_custom_call.1} parent=694 // loop_header_branch
            %1210 = sbr.rel (%p1208) target = $region702
          $region699: #{tpu_custom_call.1} parent=694 // loop_body
            %v1214 = vld [vmem:[%s1212] sm:%s1205]
            %1215 = vst [vmem:[%s1213] sm:%s1205] %v1214
          $region700: #{tpu_custom_call.1} parent=694 // loop_footer
            %s1211 = sadd.s32 1, %s1207
          $region701: #{tpu_custom_call.1} parent=694 // loop_footer_branch
            %1206 = sbr.rel target = $region697
          $region702: #{tpu_custom_call.1} parent=694 // loop_exit
            _
        $region695: #{tpu_custom_call.1} parent=679 // pred_fallthru
          _
      $region680: #{tpu_custom_call.1} parent=11 // pred_fallthru
        _
      // Predicated region
      $region681: #{tpu_custom_call.1} parent=11 // pred_check
        %p1181 = pneg %p1177
      $region682: #{tpu_custom_call.1} parent=11 // pred_check_branch
        %1183 = sbr.rel (%p1181) target = $region684
      $region683: #{tpu_custom_call.1} parent=11 // pred_region
        %s1184 = sshllo.u32 0, 1
        loop: start=0, step=1, limit=1
        $region685: #{tpu_custom_call.1} parent=683 // loop_pre_header
          _
        $region686: #{tpu_custom_call.1} parent=683 // loop_header
          %s1186 = sphi 0, %s1190
          %p1187 = scmp.ge.s32.totalorder %s1186, 1
          %s1191 = sphi %s1173, %s1173
          %s1192 = sphi %s1174, %s1174
        $region687: #{tpu_custom_call.1} parent=683 // loop_header_branch
          %1189 = sbr.rel (%p1187) target = $region691
        $region688: #{tpu_custom_call.1} parent=683 // loop_body
          %v1193 = vld [vmem:[%s1191] sm:%s1184]
          %1194 = vst [vmem:[%s1192] sm:%s1184] %v1193
        $region689: #{tpu_custom_call.1} parent=683 // loop_footer
          %s1190 = sadd.s32 1, %s1186
        $region690: #{tpu_custom_call.1} parent=683 // loop_footer_branch
          %1185 = sbr.rel target = $region686
        $region691: #{tpu_custom_call.1} parent=683 // loop_exit
          _
      $region684: #{tpu_custom_call.1} parent=11 // pred_fallthru
        _
      // Predicated region
      $region703: #{tpu_custom_call.1} parent=11 // pred_check
        _
      $region704: #{tpu_custom_call.1} parent=11 // pred_check_branch
        %1218 = sbr.rel (0) target = $region706
      $region705: #{tpu_custom_call.1} parent=11 // pred_region
        %1219 = vsyncadd %s1175, 16
      $region706: #{tpu_custom_call.1} parent=11 // pred_fallthru
        _
      %s1220 = scalar_lea.vmem %s4, %s1125
      %s1221 = scalar_lea.vmem [#allocation4], 7
      %s1222 = scalar_lea.sflag [#allocation5], 23
      %p1224 = scmp.lt.u32.totalorder 1, 8
      %p1225 = pneg %p1224
      // Predicated region
      $region707: #{tpu_custom_call.1} parent=11 // pred_check
        _
      $region708: #{tpu_custom_call.1} parent=11 // pred_check_branch
        %1227 = sbr.rel (%p1224) target = $region710
      $region709: #{tpu_custom_call.1} parent=11 // pred_region
        %s1242 = sand.u32 1, 7
        %p1243 = scmp.eq.s32.totalorder %s1242, 0
        %p1244 = pneg %p1243
        // Predicated region
        $region722: #{tpu_custom_call.1} parent=709 // pred_check
          _
        $region723: #{tpu_custom_call.1} parent=709 // pred_check_branch
          %1246 = sbr.rel (%p1243) target = $region725
        $region724: #{tpu_custom_call.1} parent=709 // pred_region
          %s1247 = sand.u32 1, 7
          %s1248 = ssub.s32 1, %s1247
          %s1249 = scalar_lea.vmem %s1220, %s1248
          %s1250 = ssub.s32 1, %s1247
          %s1251 = scalar_lea.vmem %s1221, %s1250 [#allocation4]
          %s1252 = sshllo.u32 0, %s1247
          loop: start=0, step=1, limit=1
          $region726: #{tpu_custom_call.1} parent=724 // loop_pre_header
            _
          $region727: #{tpu_custom_call.1} parent=724 // loop_header
            %s1254 = sphi 0, %s1258
            %p1255 = scmp.ge.s32.totalorder %s1254, 1
            %s1259 = sphi %s1249, %s1249
            %s1260 = sphi %s1251, %s1251
          $region728: #{tpu_custom_call.1} parent=724 // loop_header_branch
            %1257 = sbr.rel (%p1255) target = $region732
          $region729: #{tpu_custom_call.1} parent=724 // loop_body
            %v1261 = vld [vmem:[%s1259] sm:%s1252]
            %1262 = vst [vmem:[%s1260] sm:%s1252] %v1261
          $region730: #{tpu_custom_call.1} parent=724 // loop_footer
            %s1258 = sadd.s32 1, %s1254
          $region731: #{tpu_custom_call.1} parent=724 // loop_footer_branch
            %1253 = sbr.rel target = $region727
          $region732: #{tpu_custom_call.1} parent=724 // loop_exit
            _
        $region725: #{tpu_custom_call.1} parent=709 // pred_fallthru
          _
      $region710: #{tpu_custom_call.1} parent=11 // pred_fallthru
        _
      // Predicated region
      $region711: #{tpu_custom_call.1} parent=11 // pred_check
        %p1228 = pneg %p1224
      $region712: #{tpu_custom_call.1} parent=11 // pred_check_branch
        %1230 = sbr.rel (%p1228) target = $region714
      $region713: #{tpu_custom_call.1} parent=11 // pred_region
        %s1231 = sshllo.u32 0, 1
        loop: start=0, step=1, limit=1
        $region715: #{tpu_custom_call.1} parent=713 // loop_pre_header
          _
        $region716: #{tpu_custom_call.1} parent=713 // loop_header
          %s1233 = sphi 0, %s1237
          %p1234 = scmp.ge.s32.totalorder %s1233, 1
          %s1238 = sphi %s1220, %s1220
          %s1239 = sphi %s1221, %s1221
        $region717: #{tpu_custom_call.1} parent=713 // loop_header_branch
          %1236 = sbr.rel (%p1234) target = $region721
        $region718: #{tpu_custom_call.1} parent=713 // loop_body
          %v1240 = vld [vmem:[%s1238] sm:%s1231]
          %1241 = vst [vmem:[%s1239] sm:%s1231] %v1240
        $region719: #{tpu_custom_call.1} parent=713 // loop_footer
          %s1237 = sadd.s32 1, %s1233
        $region720: #{tpu_custom_call.1} parent=713 // loop_footer_branch
          %1232 = sbr.rel target = $region716
        $region721: #{tpu_custom_call.1} parent=713 // loop_exit
          _
      $region714: #{tpu_custom_call.1} parent=11 // pred_fallthru
        _
      // Predicated region
      $region733: #{tpu_custom_call.1} parent=11 // pred_check
        _
      $region734: #{tpu_custom_call.1} parent=11 // pred_check_branch
        %1265 = sbr.rel (0) target = $region736
      $region735: #{tpu_custom_call.1} parent=11 // pred_region
        %1266 = vsyncadd %s1222, 16
      $region736: #{tpu_custom_call.1} parent=11 // pred_fallthru
        _
      %s1267 = smul.u32 1, 1
      %s1268 = sshll.u32 %s1267, 4
      %1269 = dma.done [#allocation5], %s1268
      %s1270 = sshll.u32 %s1267, 4
      %1271 = dma.done %s161, %s1270
      %s1272 = sshll.u32 %s1267, 4
      %1273 = dma.done %s207, %s1272
      %s1274 = sshll.u32 %s1267, 4
      %1275 = dma.done %s258, %s1274
      %s1276 = sshll.u32 %s1267, 4
      %1277 = dma.done %s305, %s1276
      %s1278 = sshll.u32 %s1267, 4
      %1279 = dma.done %s352, %s1278
      %s1280 = sshll.u32 %s1267, 4
      %1281 = dma.done %s403, %s1280
      %s1282 = sshll.u32 %s1267, 4
      %1283 = dma.done %s450, %s1282
      %s1284 = sshll.u32 %s1267, 4
      %1285 = dma.done %s497, %s1284
      %s1286 = sshll.u32 %s1267, 4
      %1287 = dma.done %s548, %s1286
      %s1288 = sshll.u32 %s1267, 4
      %1289 = dma.done %s595, %s1288
      %s1290 = sshll.u32 %s1267, 4
      %1291 = dma.done %s642, %s1290
      %s1292 = sshll.u32 %s1267, 4
      %1293 = dma.done %s693, %s1292
      %s1294 = sshll.u32 %s1267, 4
      %1295 = dma.done %s740, %s1294
      %s1296 = sshll.u32 %s1267, 4
      %1297 = dma.done %s787, %s1296
      %s1298 = sshll.u32 %s1267, 4
      %1299 = dma.done %s838, %s1298
      %s1300 = sshll.u32 %s1267, 4
      %1301 = dma.done %s885, %s1300
      %s1302 = sshll.u32 %s1267, 4
      %1303 = dma.done %s932, %s1302
      %s1304 = sshll.u32 %s1267, 4
      %1305 = dma.done %s983, %s1304
      %s1306 = sshll.u32 %s1267, 4
      %1307 = dma.done %s1030, %s1306
      %s1308 = sshll.u32 %s1267, 4
      %1309 = dma.done %s1077, %s1308
      %s1310 = sshll.u32 %s1267, 4
      %1311 = dma.done %s1128, %s1310
      %s1312 = sshll.u32 %s1267, 4
      %1313 = dma.done %s1175, %s1312
      %s1314 = sshll.u32 %s1267, 4
      %1315 = dma.done %s1222, %s1314
      %v1316 = vld [vmem:[#allocation2] sm:$0xff]
      %v1317 = vld [vmem:[#allocation3] sm:$0xff]
      %v1318 = vmul.f32 %v1316, %v1317
      %vm1319 = vcmask 261120
      %v1320 = vsel %vm1319, %v1318, 0.0
      %1321 = vadd.xlane.f32.xlu0 %v1320
      %v1322 = vpop.xlane.xlu0 %1321
      %v1323 = vld [vmem:[#allocation4] sm:$0xff]
      %v1324 = vmul.f32 %v1316, %v1323
      %v1325 = vsel %vm1319, %v1324, 0.0
      %1326 = vadd.xlane.f32.xlu0 %v1325
      %v1327 = vpop.xlane.xlu0 %1326
      %v1328 = vsub.f32 0.0, %v1322
      %v1329 = vmul.f32 %v1328, 1.442695
      %v1330 = vpow.pop %v1329
      %v1331 = vadd.f32 %v1330, 1.0
      %v1332 = vrcp.pop %v1331
      %v1333 = vmul.f32 1.0, %v1332
      %v1334 = vsub.f32 0.0, %v1327
      %v1335 = vmul.f32 %v1334, 1.442695
      %v1336 = vpow.pop %v1335
      %v1337 = vadd.f32 %v1336, 1.0
      %v1338 = vrcp.pop %v1337
      %v1339 = vmul.f32 1.0, %v1338
      %v1340 = vlaneseq
      %v1341 = vshrl.u32 %v1340, 7
      %v1342 = vstv %s104
      %v1343 = vadd.s32 %v1342, %v1341
      %vm1344 = vcmp.lt.s32.totalorder %v1343, 32
      %v1345 = vsel %vm1344, %v1333, 0.0
      %v1346 = vsel %vm1344, %v1339, 0.0
      %v1347 = vld [vmem:[%s98] sm:$0x1]
      %v1348 = vrot.slane %v1345, 4
      %v1349 = vadd.f32 %v1345, %v1348
      %v1350 = vrot.slane %v1349, 2
      %v1351 = vadd.f32 %v1349, %v1350
      %v1352 = vrot.slane %v1351, 1
      %v1353 = vadd.f32 %v1351, %v1352
      %v1354 = vadd.f32 %v1347, %v1353
      %vm1355 = vcmask 0
      %1356 = vst.msk [vmem:[%s98] sm:$0x1] %vm1355, %v1354
      %v1357 = vld [vmem:[%s101] sm:$0x1]
      %v1358 = vrot.slane %v1346, 4
      %v1359 = vadd.f32 %v1346, %v1358
      %v1360 = vrot.slane %v1359, 2
      %v1361 = vadd.f32 %v1359, %v1360
      %v1362 = vrot.slane %v1361, 1
      %v1363 = vadd.f32 %v1361, %v1362
      %v1364 = vadd.f32 %v1357, %v1363
      %1365 = vst.msk [vmem:[%s101] sm:$0x1] %vm1355, %v1364
      %p1366 = scmp.lt.s32.totalorder %s33, 1
      %s1367 = scalar_select %p1366, %s33, 1
      %s1368 = scalar_lea.vmem %s5, %s1367
      %p1369 = scmp.lt.s32.totalorder %s33, 1
      %s1370 = scalar_select %p1369, %s33, 1
      %s1371 = scalar_lea.vmem %s6, %s1370
      // Predicated region
      $region737: #{tpu_custom_call.1} parent=11 // pred_check
        %p1372 = pneg %p52
      $region738: #{tpu_custom_call.1} parent=11 // pred_check_branch
        %1374 = sbr.rel (%p1372) target = $region740
      $region739: #{tpu_custom_call.1} parent=11 // pred_region
        _
      $region740: #{tpu_custom_call.1} parent=11 // pred_fallthru
        _
      // Predicated region
      $region741: #{tpu_custom_call.1} parent=11 // pred_check
        %p1375 = pneg %p71
      $region742: #{tpu_custom_call.1} parent=11 // pred_check_branch
        %1377 = sbr.rel (%p1375) target = $region744
      $region743: #{tpu_custom_call.1} parent=11 // pred_region
        _
      $region744: #{tpu_custom_call.1} parent=11 // pred_fallthru
        _
    $region12: #{tpu_custom_call.1} parent=5 // pred_fallthru
      _
    %p1378 = scmp.le.s32.totalorder 1, %s27
    // Predicated region
    $region745: #{tpu_custom_call.1} parent=5 // pred_check
      %p1379 = pneg %p1378
    $region746: #{tpu_custom_call.1} parent=5 // pred_check_branch
      %1381 = sbr.rel (%p1379) target = $region748
    $region747: #{tpu_custom_call.1} parent=5 // pred_region
      %s1382 = ssub.s32 %s27, 1
      // Predicated region
      $region749: #{tpu_custom_call.1} parent=747 // pred_check
        %p1383 = pneg %p58
      $region750: #{tpu_custom_call.1} parent=747 // pred_check_branch
        %1385 = sbr.rel (%p1383) target = $region752
      $region751: #{tpu_custom_call.1} parent=747 // pred_region
        %p1386 = scmp.lt.s32.totalorder %s35, 1
        %s1387 = scalar_select %p1386, %s35, 1
        %s1388 = scalar_lea.vmem %s5, %s1387
      $region752: #{tpu_custom_call.1} parent=747 // pred_fallthru
        _
      // Predicated region
      $region753: #{tpu_custom_call.1} parent=747 // pred_check
        %p1389 = pneg %p77
      $region754: #{tpu_custom_call.1} parent=747 // pred_check_branch
        %1391 = sbr.rel (%p1389) target = $region756
      $region755: #{tpu_custom_call.1} parent=747 // pred_region
        %p1392 = scmp.lt.s32.totalorder %s35, 1
        %s1393 = scalar_select %p1392, %s35, 1
        %s1394 = scalar_lea.vmem %s6, %s1393
      $region756: #{tpu_custom_call.1} parent=747 // pred_fallthru
        _
    $region748: #{tpu_custom_call.1} parent=5 // pred_fallthru
      _
  $region6: #{tpu_custom_call.1} parent=0 // loop_footer
    %s31 = sadd.s32 1, %s27
  $region7: #{tpu_custom_call.1} parent=0 // loop_footer_branch
    %26 = sbr.rel target = $region3
  $region8: #{tpu_custom_call.1} parent=0 // loop_exit
    _
  %1395 = vsyncmov [#allocation5]
  %s1396 = vpop.sfrf %1395
  %p1397 = scmp.eq.s32.totalorder %s1396, 0
  %p1398 = pneg %p1397
  %1400 = shalt.err (%p1398)
  %s1401 = scalar_lea.sflag [#allocation5], 1
  %1402 = vsyncmov %s1401
  %s1403 = vpop.sfrf %1402
  %p1404 = scmp.eq.s32.totalorder %s1403, 0
  %p1405 = pneg %p1404
  %1407 = shalt.err (%p1405)
  %s1408 = scalar_lea.sflag [#allocation5], 2
  %1409 = vsyncmov %s1408
  %s1410 = vpop.sfrf %1409
  %p1411 = scmp.eq.s32.totalorder %s1410, 0
  %p1412 = pneg %p1411
  %1414 = shalt.err (%p1412)
  %s1415 = scalar_lea.sflag [#allocation5], 3
  %1416 = vsyncmov %s1415
  %s1417 = vpop.sfrf %1416
  %p1418 = scmp.eq.s32.totalorder %s1417, 0
  %p1419 = pneg %p1418
  %1421 = shalt.err (%p1419)
  %s1422 = scalar_lea.sflag [#allocation5], 4
  %1423 = vsyncmov %s1422
  %s1424 = vpop.sfrf %1423
  %p1425 = scmp.eq.s32.totalorder %s1424, 0
  %p1426 = pneg %p1425
  %1428 = shalt.err (%p1426)
  %s1429 = scalar_lea.sflag [#allocation5], 5
  %1430 = vsyncmov %s1429
  %s1431 = vpop.sfrf %1430
  %p1432 = scmp.eq.s32.totalorder %s1431, 0
  %p1433 = pneg %p1432
  %1435 = shalt.err (%p1433)
  %s1436 = scalar_lea.sflag [#allocation5], 6
  %1437 = vsyncmov %s1436
  %s1438 = vpop.sfrf %1437
  %p1439 = scmp.eq.s32.totalorder %s1438, 0
  %p1440 = pneg %p1439
  %1442 = shalt.err (%p1440)
  %s1443 = scalar_lea.sflag [#allocation5], 7
  %1444 = vsyncmov %s1443
  %s1445 = vpop.sfrf %1444
  %p1446 = scmp.eq.s32.totalorder %s1445, 0
  %p1447 = pneg %p1446
  %1449 = shalt.err (%p1447)
  %s1450 = scalar_lea.sflag [#allocation5], 8
  %1451 = vsyncmov %s1450
  %s1452 = vpop.sfrf %1451
  %p1453 = scmp.eq.s32.totalorder %s1452, 0
  %p1454 = pneg %p1453
  %1456 = shalt.err (%p1454)
  %s1457 = scalar_lea.sflag [#allocation5], 9
  %1458 = vsyncmov %s1457
  %s1459 = vpop.sfrf %1458
  %p1460 = scmp.eq.s32.totalorder %s1459, 0
  %p1461 = pneg %p1460
  %1463 = shalt.err (%p1461)
  %s1464 = scalar_lea.sflag [#allocation5], 10
  %1465 = vsyncmov %s1464
  %s1466 = vpop.sfrf %1465
  %p1467 = scmp.eq.s32.totalorder %s1466, 0
  %p1468 = pneg %p1467
  %1470 = shalt.err (%p1468)
  %s1471 = scalar_lea.sflag [#allocation5], 11
  %1472 = vsyncmov %s1471
  %s1473 = vpop.sfrf %1472
  %p1474 = scmp.eq.s32.totalorder %s1473, 0
  %p1475 = pneg %p1474
  %1477 = shalt.err (%p1475)
  %s1478 = scalar_lea.sflag [#allocation5], 12
  %1479 = vsyncmov %s1478
  %s1480 = vpop.sfrf %1479
  %p1481 = scmp.eq.s32.totalorder %s1480, 0
  %p1482 = pneg %p1481
  %1484 = shalt.err (%p1482)
  %s1485 = scalar_lea.sflag [#allocation5], 13
  %1486 = vsyncmov %s1485
  %s1487 = vpop.sfrf %1486
  %p1488 = scmp.eq.s32.totalorder %s1487, 0
  %p1489 = pneg %p1488
  %1491 = shalt.err (%p1489)
  %s1492 = scalar_lea.sflag [#allocation5], 14
  %1493 = vsyncmov %s1492
  %s1494 = vpop.sfrf %1493
  %p1495 = scmp.eq.s32.totalorder %s1494, 0
  %p1496 = pneg %p1495
  %1498 = shalt.err (%p1496)
  %s1499 = scalar_lea.sflag [#allocation5], 15
  %1500 = vsyncmov %s1499
  %s1501 = vpop.sfrf %1500
  %p1502 = scmp.eq.s32.totalorder %s1501, 0
  %p1503 = pneg %p1502
  %1505 = shalt.err (%p1503)
  %s1506 = scalar_lea.sflag [#allocation5], 16
  %1507 = vsyncmov %s1506
  %s1508 = vpop.sfrf %1507
  %p1509 = scmp.eq.s32.totalorder %s1508, 0
  %p1510 = pneg %p1509
  %1512 = shalt.err (%p1510)
  %s1513 = scalar_lea.sflag [#allocation5], 17
  %1514 = vsyncmov %s1513
  %s1515 = vpop.sfrf %1514
  %p1516 = scmp.eq.s32.totalorder %s1515, 0
  %p1517 = pneg %p1516
  %1519 = shalt.err (%p1517)
  %s1520 = scalar_lea.sflag [#allocation5], 18
  %1521 = vsyncmov %s1520
  %s1522 = vpop.sfrf %1521
  %p1523 = scmp.eq.s32.totalorder %s1522, 0
  %p1524 = pneg %p1523
  %1526 = shalt.err (%p1524)
  %s1527 = scalar_lea.sflag [#allocation5], 19
  %1528 = vsyncmov %s1527
  %s1529 = vpop.sfrf %1528
  %p1530 = scmp.eq.s32.totalorder %s1529, 0
  %p1531 = pneg %p1530
  %1533 = shalt.err (%p1531)
  %s1534 = scalar_lea.sflag [#allocation5], 20
  %1535 = vsyncmov %s1534
  %s1536 = vpop.sfrf %1535
  %p1537 = scmp.eq.s32.totalorder %s1536, 0
  %p1538 = pneg %p1537
  %1540 = shalt.err (%p1538)
  %s1541 = scalar_lea.sflag [#allocation5], 21
  %1542 = vsyncmov %s1541
  %s1543 = vpop.sfrf %1542
  %p1544 = scmp.eq.s32.totalorder %s1543, 0
  %p1545 = pneg %p1544
  %1547 = shalt.err (%p1545)
  %s1548 = scalar_lea.sflag [#allocation5], 22
  %1549 = vsyncmov %s1548
  %s1550 = vpop.sfrf %1549
  %p1551 = scmp.eq.s32.totalorder %s1550, 0
  %p1552 = pneg %p1551
  %1554 = shalt.err (%p1552)
  %s1555 = scalar_lea.sflag [#allocation5], 23
  %1556 = vsyncmov %s1555
  %s1557 = vpop.sfrf %1556
  %p1558 = scmp.eq.s32.totalorder %s1557, 0
  %p1559 = pneg %p1558
  %1561 = shalt.err (%p1559)

</llo_original>
